<compile_context>
chip_gen: v7x
topology: tpu7x:2x2x1
jax: 0.10.0
libtpu: 0.0.40
codegen_flags: <defaults>
</compile_context>

<pallas_src>
import jax
import jax.numpy as jnp
from jax.experimental import pallas as pl
from jax.experimental.pallas import tpu as pltpu


def _conv2d_mod_kernel(x_ref, w_ref, scale_ref, o_ref, xs_ref):
    # x_ref    : (1, H, W, C)      one batch sample, channels-last
    # w_ref    : (KH, KW, C, TO)   shared base weight, tap-major (O on lanes)
    # scale_ref: (1, 1, TO)        per-(n, o) post-conv scale (f32)
    # o_ref    : (1, H, W, TO)
    # xs_ref   : (KW, H+2, W, C)   width-shift-resolved, vertically
    #                              replicate-padded copies of the sample
    _, H, W, C = x_ref.shape
    KH, KW, _, TO = w_ref.shape

    # Build the shifted/padded scratch once per sample: the innermost grid
    # axis tiles output channels, the scratch only depends on x[n] and
    # persists across grid steps (o-tile axis is "arbitrary" => sequential).
    @pl.when(pl.program_id(1) == 0)
    def _build():
        x_img = x_ref[0].astype(xs_ref.dtype)                  # (H, W, C)
        # dj = 1 (center): vertical replicate pad on the leading axis.
        xs_ref[1, 1:H + 1, :, :] = x_img
        xs_ref[1, 0:1, :, :] = x_img[0:1]
        xs_ref[1, H + 1:H + 2, :, :] = x_img[H - 1:H]
        # dj = 0: padded column w   (= x column w-1, edge-clamped).
        xs_ref[0, :, 1:W, :] = xs_ref[1, :, 0:W - 1, :]
        xs_ref[0, :, 0:1, :] = xs_ref[1, :, 0:1, :]
        # dj = 2: padded column w+2 (= x column w+1, edge-clamped).
        xs_ref[2, :, 0:W - 1, :] = xs_ref[1, :, 1:W, :]
        xs_ref[2, :, W - 1:W, :] = xs_ref[1, :, W - 1:W, :]

    # 3x3 conv as 9 (H*W, C) @ (C, TO) MXU matmuls; every patch read is an
    # aligned leading-dim slice of the scratch (no per-tap relayout copies),
    # and the reshape is tile-aligned when W % 8 == 0.
    # TODO(synk): for C < 128 the contraction dim is underfilled; folding KW
    # into K ((H*W, 3C) @ (3C, TO)) needs sub-tile lane packing of the
    # scratch and is left out to keep all loads/stores tile-aligned.
    acc = jnp.zeros((H * W, TO), dtype=jnp.float32)
    for di in range(KH):
        for dj in range(KW):
            patch = xs_ref[dj, di:di + H, :, :].reshape(H * W, C)
            acc = acc + jnp.dot(patch, w_ref[di, dj],
                                preferred_element_type=jnp.float32)

    # Factorized modulation/demodulation: per-(n, o) scale on the f32
    # accumulator, then cast + lane-dense store.
    scale = scale_ref[0]                                       # (1, TO) f32
    o_ref[0] = (acc * scale).reshape(H, W, TO).astype(o_ref.dtype)


def _pick_o_tile(O):
    """Output-channel tile: keep small O untiled, tile large O to 256/128."""
    if O <= 256:
        return O
    for t in (256, 128):
        if O % t == 0:
            return t
    return O


def _vmem_limit_bytes(H, W, C, TO, KH, KW, itemsize):
    """Rough per-step VMEM need: double-buffered blocks + scratch + temps."""
    x_blk = H * W * C * itemsize
    o_blk = H * W * TO * itemsize
    w_blk = KH * KW * C * TO * itemsize
    scratch = KW * (H + 2) * W * C * itemsize
    acc = H * W * TO * 4
    patch = H * W * C * itemsize
    est = 2 * (x_blk + o_blk + w_blk) + scratch + acc + 2 * patch
    return int(min(max(2 * est, 16 * 1024 * 1024), 96 * 1024 * 1024))


def conv2d_mod(x, y, weight, *, eps=1e-6, demodulation=True):
    """x: (N, C, H, W), y: (N, O), weight: (O, C, 3, 3) -> (N, O, H, W)."""
    # TODO(synk): groups != 1 not implemented (module default is groups=1).
    N, C, H, W = x.shape
    O, Cw, KH, KW = weight.shape
    assert Cw == C
    assert KH == 3 and KW == 3  # TODO(synk): generalize to other kernel sizes
    cdtype = x.dtype

    # ---- factorized modulation + demodulation: per-(n, o) post-conv scale --
    # conv(x, weight*(y+1)*rsqrt(...)) == conv(x, weight) * scale[n, o].
    w32 = weight.astype(jnp.float32)
    s_o = jnp.sum(w32 * w32, axis=(1, 2, 3))                   # (O,)
    ymod = y.astype(jnp.float32) + 1.0                         # (N, O)
    if demodulation:
        scale = ymod * jax.lax.rsqrt(ymod * ymod * s_o[None, :] + eps)
    else:
        scale = ymod
    scale = scale[:, None, :]                                  # (N, 1, O) f32

    # Layout glue (in an NHWC end-to-end model these transposes disappear):
    # channels-last x so O lands on lanes; tap-major weight in the MXU dtype.
    xt = jnp.transpose(x, (0, 2, 3, 1))                        # (N, H, W, C)
    wt = jnp.transpose(weight, (2, 3, 1, 0)).astype(cdtype)    # (KH, KW, C, O)

    TO = _pick_o_tile(O)
    n_ot = O // TO
    itemsize = jnp.dtype(cdtype).itemsize

    out = pl.pallas_call(
        _conv2d_mod_kernel,
        out_shape=jax.ShapeDtypeStruct((N, H, W, O), cdtype),
        grid_spec=pltpu.PrefetchScalarGridSpec(
            num_scalar_prefetch=0,
            grid=(N, n_ot),          # O axis innermost: x block not re-DMA'd
            in_specs=[
                pl.BlockSpec((1, H, W, C), lambda n, ot: (n, 0, 0, 0)),
                pl.BlockSpec((KH, KW, C, TO), lambda n, ot: (0, 0, 0, ot)),
                pl.BlockSpec((1, 1, TO), lambda n, ot: (n, 0, ot)),
            ],
            out_specs=pl.BlockSpec((1, H, W, TO), lambda n, ot: (n, 0, 0, ot)),
            scratch_shapes=[pltpu.VMEM((KW, H + 2, W, C), cdtype)],
        ),
        compiler_params=pltpu.CompilerParams(
            # N is "parallel" (megacore sharding); the o-tile axis must stay
            # sequential per sample so the scratch built at ot == 0 is reused.
            dimension_semantics=("parallel", "arbitrary"),
            vmem_limit_bytes=_vmem_limit_bytes(H, W, C, TO, KH, KW, itemsize),
        ),
    )(xt, wt, scale)

    return jnp.transpose(out, (0, 3, 1, 2))                    # back to NCHW


def _conv2d_mod_reference(x, y, weight, eps=1e-6, demodulation=True):
    """Pure-JAX reference mirroring the PyTorch forward exactly."""
    N, C, H, W = x.shape
    O = weight.shape[0]
    k = weight.shape[-1]
    w1 = jnp.swapaxes(y[:, None, :, None, None], 1, 2)         # (N, O, 1, 1, 1)
    wmod = weight[None] * (w1 + 1.0)                           # (N, O, C, k, k)
    if demodulation:
        d = jax.lax.rsqrt(jnp.sum(wmod * wmod, axis=(2, 3, 4),
                                  keepdims=True) + eps)
        wmod = wmod * d
    pad = k // 2
    xp = jnp.pad(x, ((0, 0), (0, 0), (pad, pad), (pad, pad)), mode="edge")
    out = jnp.zeros((N, O, H, W), dtype=jnp.float32)
    for di in range(k):
        for dj in range(k):
            patch = xp[:, :, di:di + H, dj:dj + W]             # (N, C, H, W)
            tap = wmod[:, :, :, di, dj]                        # (N, O, C)
            out = out + jnp.sum(patch[:, None] * tap[:, :, :, None, None],
                                axis=2)
    return out


if __name__ == "__main__":
    key = jax.random.PRNGKey(0)
    k1, k2, k3 = jax.random.split(key, 3)

    N, C_in, C_out, H, W = 2, 4, 8, 16, 16
    x = jax.random.normal(k1, (N, C_in, H, W), dtype=jnp.float32)
    y = jax.random.normal(k2, (N, C_out), dtype=jnp.float32)
    fan_in = C_in * 3 * 3  # kaiming-normal-ish init scale (leaky_relu, a=0)
    weight = jax.random.normal(k3, (C_out, C_in, 3, 3), dtype=jnp.float32)
    weight = weight * jnp.sqrt(2.0 / fan_in)

    out = conv2d_mod(x, y, weight)
    jax.block_until_ready(out)

    ref = _conv2d_mod_reference(x, y, weight)
    assert out.shape == (N, C_out, H, W)
    max_err = float(jnp.max(jnp.abs(out - ref)))
    assert jnp.allclose(out, ref, atol=1e-2, rtol=1e-2), max_err

    print("KERNEL_OK")
</pallas_src>

<mosaic_0001>
module attributes {stable_mosaic.version = 11 : i64} {
  func.func @_conv2d_mod_kernel(%arg0: i32, %arg1: i32, %arg2: memref<1x16x16x4xf32, #tpu.memory_space<vmem>>, %arg3: memref<3x3x4x8xf32, #tpu.memory_space<vmem>>, %arg4: memref<1x1x8xf32, #tpu.memory_space<vmem>>, %arg5: memref<1x16x16x8xf32, #tpu.memory_space<vmem>>, %arg6: memref<3x18x16x4xf32, #tpu.memory_space<vmem>>) attributes {dimension_semantics = [#tpu.dimension_semantics<parallel>, #tpu.dimension_semantics<arbitrary>], iteration_bounds = array<i64: 2, 1>, scalar_prefetch = 0 : i64, scratch_operands = 1 : i64, tpu.core_type = #tpu.core_type<tc>, window_params = [{transform_indices = @transform_0, window_bounds = array<i64: 1, 16, 16, 4>}, {transform_indices = @transform_1, window_bounds = array<i64: 3, 3, 4, 8>}, {transform_indices = @transform_2, window_bounds = array<i64: 1, 1, 8>}, {transform_indices = @transform_3, window_bounds = array<i64: 1, 16, 16, 8>}]} {
    %c0_i32 = arith.constant 0 : i32
    %0 = arith.cmpi eq, %arg1, %c0_i32 : i32
    %1 = arith.extui %0 : i1 to i32
    %c0_i32_0 = arith.constant 0 : i32
    %2 = arith.cmpi ne, %1, %c0_i32_0 : i32
    scf.if %2 {
      %c0_86 = arith.constant 0 : index
      %c0_87 = arith.constant 0 : index
      %c0_88 = arith.constant 0 : index
      %c0_89 = arith.constant 0 : index
      %75 = vector.load %arg2[%c0_86, %c0_87, %c0_88, %c0_89] : memref<1x16x16x4xf32, #tpu.memory_space<vmem>>, vector<1x16x16x4xf32>
      %76 = vector.shape_cast %75 : vector<1x16x16x4xf32> to vector<16x16x4xf32>
      %c1_90 = arith.constant 1 : index
      %c1_91 = arith.constant 1 : index
      %c0_92 = arith.constant 0 : index
      %c0_93 = arith.constant 0 : index
      %77 = vector.load %arg6[%c1_90, %c1_91, %c0_92, %c0_93] : memref<3x18x16x4xf32, #tpu.memory_space<vmem>>, vector<1x16x16x4xf32>
      %78 = vector.shape_cast %77 : vector<1x16x16x4xf32> to vector<16x16x4xf32>
      %79 = vector.shape_cast %76 : vector<16x16x4xf32> to vector<1x16x16x4xf32>
      tpu.vector_store %arg6[%c1_90, %c1_91, %c0_92, %c0_93], %79 {strides = array<i32>} : memref<3x18x16x4xf32, #tpu.memory_space<vmem>>, vector<1x16x16x4xf32>,
      %80 = vector.extract_strided_slice %76 {offsets = [0, 0, 0], sizes = [1, 16, 4], strides = [1, 1, 1]} : vector<16x16x4xf32> to vector<1x16x4xf32>
      %c1_94 = arith.constant 1 : index
      %c0_95 = arith.constant 0 : index
      %c0_96 = arith.constant 0 : index
      %c0_97 = arith.constant 0 : index
      %81 = vector.load %arg6[%c1_94, %c0_95, %c0_96, %c0_97] : memref<3x18x16x4xf32, #tpu.memory_space<vmem>>, vector<1x1x16x4xf32>
      %82 = vector.shape_cast %81 : vector<1x1x16x4xf32> to vector<1x16x4xf32>
      %83 = vector.shape_cast %80 : vector<1x16x4xf32> to vector<1x1x16x4xf32>
      tpu.vector_store %arg6[%c1_94, %c0_95, %c0_96, %c0_97], %83 {strides = array<i32>} : memref<3x18x16x4xf32, #tpu.memory_space<vmem>>, vector<1x1x16x4xf32>,
      %84 = vector.extract_strided_slice %76 {offsets = [15, 0, 0], sizes = [1, 16, 4], strides = [1, 1, 1]} : vector<16x16x4xf32> to vector<1x16x4xf32>
      %c1_98 = arith.constant 1 : index
      %c17 = arith.constant 17 : index
      %c0_99 = arith.constant 0 : index
      %c0_100 = arith.constant 0 : index
      %85 = vector.load %arg6[%c1_98, %c17, %c0_99, %c0_100] : memref<3x18x16x4xf32, #tpu.memory_space<vmem>>, vector<1x1x16x4xf32>
      %86 = vector.shape_cast %85 : vector<1x1x16x4xf32> to vector<1x16x4xf32>
      %87 = vector.shape_cast %84 : vector<1x16x4xf32> to vector<1x1x16x4xf32>
      tpu.vector_store %arg6[%c1_98, %c17, %c0_99, %c0_100], %87 {strides = array<i32>} : memref<3x18x16x4xf32, #tpu.memory_space<vmem>>, vector<1x1x16x4xf32>,
      %c1_101 = arith.constant 1 : index
      %c0_102 = arith.constant 0 : index
      %c0_103 = arith.constant 0 : index
      %c0_104 = arith.constant 0 : index
      %88 = vector.load %arg6[%c1_101, %c0_102, %c0_103, %c0_104] : memref<3x18x16x4xf32, #tpu.memory_space<vmem>>, vector<1x18x15x4xf32>
      %89 = vector.shape_cast %88 : vector<1x18x15x4xf32> to vector<18x15x4xf32>
      %c0_105 = arith.constant 0 : index
      %c0_106 = arith.constant 0 : index
      %c1_107 = arith.constant 1 : index
      %c0_108 = arith.constant 0 : index
      %90 = vector.load %arg6[%c0_105, %c0_106, %c1_107, %c0_108] : memref<3x18x16x4xf32, #tpu.memory_space<vmem>>, vector<1x18x15x4xf32>
      %91 = vector.shape_cast %90 : vector<1x18x15x4xf32> to vector<18x15x4xf32>
      %92 = vector.shape_cast %89 : vector<18x15x4xf32> to vector<1x18x15x4xf32>
      tpu.vector_store %arg6[%c0_105, %c0_106, %c1_107, %c0_108], %92 {strides = array<i32>} : memref<3x18x16x4xf32, #tpu.memory_space<vmem>>, vector<1x18x15x4xf32>,
      %c1_109 = arith.constant 1 : index
      %c0_110 = arith.constant 0 : index
      %c0_111 = arith.constant 0 : index
      %c0_112 = arith.constant 0 : index
      %93 = vector.load %arg6[%c1_109, %c0_110, %c0_111, %c0_112] : memref<3x18x16x4xf32, #tpu.memory_space<vmem>>, vector<1x18x1x4xf32>
      %94 = vector.shape_cast %93 : vector<1x18x1x4xf32> to vector<18x1x4xf32>
      %c0_113 = arith.constant 0 : index
      %c0_114 = arith.constant 0 : index
      %c0_115 = arith.constant 0 : index
      %c0_116 = arith.constant 0 : index
      %95 = vector.load %arg6[%c0_113, %c0_114, %c0_115, %c0_116] : memref<3x18x16x4xf32, #tpu.memory_space<vmem>>, vector<1x18x1x4xf32>
      %96 = vector.shape_cast %95 : vector<1x18x1x4xf32> to vector<18x1x4xf32>
      %97 = vector.shape_cast %94 : vector<18x1x4xf32> to vector<1x18x1x4xf32>
      tpu.vector_store %arg6[%c0_113, %c0_114, %c0_115, %c0_116], %97 {strides = array<i32>} : memref<3x18x16x4xf32, #tpu.memory_space<vmem>>, vector<1x18x1x4xf32>,
      %c1_117 = arith.constant 1 : index
      %c0_118 = arith.constant 0 : index
      %c1_119 = arith.constant 1 : index
      %c0_120 = arith.constant 0 : index
      %98 = vector.load %arg6[%c1_117, %c0_118, %c1_119, %c0_120] : memref<3x18x16x4xf32, #tpu.memory_space<vmem>>, vector<1x18x15x4xf32>
      %99 = vector.shape_cast %98 : vector<1x18x15x4xf32> to vector<18x15x4xf32>
      %c2_121 = arith.constant 2 : index
      %c0_122 = arith.constant 0 : index
      %c0_123 = arith.constant 0 : index
      %c0_124 = arith.constant 0 : index
      %100 = vector.load %arg6[%c2_121, %c0_122, %c0_123, %c0_124] : memref<3x18x16x4xf32, #tpu.memory_space<vmem>>, vector<1x18x15x4xf32>
      %101 = vector.shape_cast %100 : vector<1x18x15x4xf32> to vector<18x15x4xf32>
      %102 = vector.shape_cast %99 : vector<18x15x4xf32> to vector<1x18x15x4xf32>
      tpu.vector_store %arg6[%c2_121, %c0_122, %c0_123, %c0_124], %102 {strides = array<i32>} : memref<3x18x16x4xf32, #tpu.memory_space<vmem>>, vector<1x18x15x4xf32>,
      %c1_125 = arith.constant 1 : index
      %c0_126 = arith.constant 0 : index
      %c15 = arith.constant 15 : index
      %c0_127 = arith.constant 0 : index
      %103 = vector.load %arg6[%c1_125, %c0_126, %c15, %c0_127] : memref<3x18x16x4xf32, #tpu.memory_space<vmem>>, vector<1x18x1x4xf32>
      %104 = vector.shape_cast %103 : vector<1x18x1x4xf32> to vector<18x1x4xf32>
      %c2_128 = arith.constant 2 : index
      %c0_129 = arith.constant 0 : index
      %c15_130 = arith.constant 15 : index
      %c0_131 = arith.constant 0 : index
      %105 = vector.load %arg6[%c2_128, %c0_129, %c15_130, %c0_131] : memref<3x18x16x4xf32, #tpu.memory_space<vmem>>, vector<1x18x1x4xf32>
      %106 = vector.shape_cast %105 : vector<1x18x1x4xf32> to vector<18x1x4xf32>
      %107 = vector.shape_cast %104 : vector<18x1x4xf32> to vector<1x18x1x4xf32>
      tpu.vector_store %arg6[%c2_128, %c0_129, %c15_130, %c0_131], %107 {strides = array<i32>} : memref<3x18x16x4xf32, #tpu.memory_space<vmem>>, vector<1x18x1x4xf32>,
    } else {
    }
    %cst = arith.constant 0.000000e+00 : f32
    %3 = vector.broadcast %cst : f32 to vector<256x8xf32>
    %c0 = arith.constant 0 : index
    %c0_1 = arith.constant 0 : index
    %c0_2 = arith.constant 0 : index
    %c0_3 = arith.constant 0 : index
    %4 = vector.load %arg6[%c0, %c0_1, %c0_2, %c0_3] : memref<3x18x16x4xf32, #tpu.memory_space<vmem>>, vector<1x16x16x4xf32>
    %5 = vector.shape_cast %4 : vector<1x16x16x4xf32> to vector<16x16x4xf32>
    %6 = vector.shape_cast %5 : vector<16x16x4xf32> to vector<256x4xf32>
    %c0_4 = arith.constant 0 : index
    %c0_5 = arith.constant 0 : index
    %c0_6 = arith.constant 0 : index
    %c0_7 = arith.constant 0 : index
    %7 = vector.load %arg3[%c0_4, %c0_5, %c0_6, %c0_7] : memref<3x3x4x8xf32, #tpu.memory_space<vmem>>, vector<1x1x4x8xf32>
    %8 = vector.shape_cast %7 : vector<1x1x4x8xf32> to vector<4x8xf32>
    %cst_8 = arith.constant dense<0.000000e+00> : vector<256x8xf32>
    %9 = tpu.matmul %6, %8, %cst_8 {dimension_numbers = #tpu.dot_dimension_numbers<[1], [0], [0], [1], [0, 0, 1, 1], [], []>} : vector<256x4xf32>, vector<4x8xf32>, vector<256x8xf32> -> vector<256x8xf32>
    %10 = arith.addf %3, %9 : vector<256x8xf32>
    %c1 = arith.constant 1 : index
    %c0_9 = arith.constant 0 : index
    %c0_10 = arith.constant 0 : index
    %c0_11 = arith.constant 0 : index
    %11 = vector.load %arg6[%c1, %c0_9, %c0_10, %c0_11] : memref<3x18x16x4xf32, #tpu.memory_space<vmem>>, vector<1x16x16x4xf32>
    %12 = vector.shape_cast %11 : vector<1x16x16x4xf32> to vector<16x16x4xf32>
    %13 = vector.shape_cast %12 : vector<16x16x4xf32> to vector<256x4xf32>
    %c0_12 = arith.constant 0 : index
    %c1_13 = arith.constant 1 : index
    %c0_14 = arith.constant 0 : index
    %c0_15 = arith.constant 0 : index
    %14 = vector.load %arg3[%c0_12, %c1_13, %c0_14, %c0_15] : memref<3x3x4x8xf32, #tpu.memory_space<vmem>>, vector<1x1x4x8xf32>
    %15 = vector.shape_cast %14 : vector<1x1x4x8xf32> to vector<4x8xf32>
    %cst_16 = arith.constant dense<0.000000e+00> : vector<256x8xf32>
    %16 = tpu.matmul %13, %15, %cst_16 {dimension_numbers = #tpu.dot_dimension_numbers<[1], [0], [0], [1], [0, 0, 1, 1], [], []>} : vector<256x4xf32>, vector<4x8xf32>, vector<256x8xf32> -> vector<256x8xf32>
    %17 = arith.addf %10, %16 : vector<256x8xf32>
    %c2 = arith.constant 2 : index
    %c0_17 = arith.constant 0 : index
    %c0_18 = arith.constant 0 : index
    %c0_19 = arith.constant 0 : index
    %18 = vector.load %arg6[%c2, %c0_17, %c0_18, %c0_19] : memref<3x18x16x4xf32, #tpu.memory_space<vmem>>, vector<1x16x16x4xf32>
    %19 = vector.shape_cast %18 : vector<1x16x16x4xf32> to vector<16x16x4xf32>
    %20 = vector.shape_cast %19 : vector<16x16x4xf32> to vector<256x4xf32>
    %c0_20 = arith.constant 0 : index
    %c2_21 = arith.constant 2 : index
    %c0_22 = arith.constant 0 : index
    %c0_23 = arith.constant 0 : index
    %21 = vector.load %arg3[%c0_20, %c2_21, %c0_22, %c0_23] : memref<3x3x4x8xf32, #tpu.memory_space<vmem>>, vector<1x1x4x8xf32>
    %22 = vector.shape_cast %21 : vector<1x1x4x8xf32> to vector<4x8xf32>
    %cst_24 = arith.constant dense<0.000000e+00> : vector<256x8xf32>
    %23 = tpu.matmul %20, %22, %cst_24 {dimension_numbers = #tpu.dot_dimension_numbers<[1], [0], [0], [1], [0, 0, 1, 1], [], []>} : vector<256x4xf32>, vector<4x8xf32>, vector<256x8xf32> -> vector<256x8xf32>
    %24 = arith.addf %17, %23 : vector<256x8xf32>
    %c0_25 = arith.constant 0 : index
    %c1_26 = arith.constant 1 : index
    %c0_27 = arith.constant 0 : index
    %c0_28 = arith.constant 0 : index
    %25 = vector.load %arg6[%c0_25, %c1_26, %c0_27, %c0_28] : memref<3x18x16x4xf32, #tpu.memory_space<vmem>>, vector<1x16x16x4xf32>
    %26 = vector.shape_cast %25 : vector<1x16x16x4xf32> to vector<16x16x4xf32>
    %27 = vector.shape_cast %26 : vector<16x16x4xf32> to vector<256x4xf32>
    %c1_29 = arith.constant 1 : index
    %c0_30 = arith.constant 0 : index
    %c0_31 = arith.constant 0 : index
    %c0_32 = arith.constant 0 : index
    %28 = vector.load %arg3[%c1_29, %c0_30, %c0_31, %c0_32] : memref<3x3x4x8xf32, #tpu.memory_space<vmem>>, vector<1x1x4x8xf32>
    %29 = vector.shape_cast %28 : vector<1x1x4x8xf32> to vector<4x8xf32>
    %cst_33 = arith.constant dense<0.000000e+00> : vector<256x8xf32>
    %30 = tpu.matmul %27, %29, %cst_33 {dimension_numbers = #tpu.dot_dimension_numbers<[1], [0], [0], [1], [0, 0, 1, 1], [], []>} : vector<256x4xf32>, vector<4x8xf32>, vector<256x8xf32> -> vector<256x8xf32>
    %31 = arith.addf %24, %30 : vector<256x8xf32>
    %c1_34 = arith.constant 1 : index
    %c1_35 = arith.constant 1 : index
    %c0_36 = arith.constant 0 : index
    %c0_37 = arith.constant 0 : index
    %32 = vector.load %arg6[%c1_34, %c1_35, %c0_36, %c0_37] : memref<3x18x16x4xf32, #tpu.memory_space<vmem>>, vector<1x16x16x4xf32>
    %33 = vector.shape_cast %32 : vector<1x16x16x4xf32> to vector<16x16x4xf32>
    %34 = vector.shape_cast %33 : vector<16x16x4xf32> to vector<256x4xf32>
    %c1_38 = arith.constant 1 : index
    %c1_39 = arith.constant 1 : index
    %c0_40 = arith.constant 0 : index
    %c0_41 = arith.constant 0 : index
    %35 = vector.load %arg3[%c1_38, %c1_39, %c0_40, %c0_41] : memref<3x3x4x8xf32, #tpu.memory_space<vmem>>, vector<1x1x4x8xf32>
    %36 = vector.shape_cast %35 : vector<1x1x4x8xf32> to vector<4x8xf32>
    %cst_42 = arith.constant dense<0.000000e+00> : vector<256x8xf32>
    %37 = tpu.matmul %34, %36, %cst_42 {dimension_numbers = #tpu.dot_dimension_numbers<[1], [0], [0], [1], [0, 0, 1, 1], [], []>} : vector<256x4xf32>, vector<4x8xf32>, vector<256x8xf32> -> vector<256x8xf32>
    %38 = arith.addf %31, %37 : vector<256x8xf32>
    %c2_43 = arith.constant 2 : index
    %c1_44 = arith.constant 1 : index
    %c0_45 = arith.constant 0 : index
    %c0_46 = arith.constant 0 : index
    %39 = vector.load %arg6[%c2_43, %c1_44, %c0_45, %c0_46] : memref<3x18x16x4xf32, #tpu.memory_space<vmem>>, vector<1x16x16x4xf32>
    %40 = vector.shape_cast %39 : vector<1x16x16x4xf32> to vector<16x16x4xf32>
    %41 = vector.shape_cast %40 : vector<16x16x4xf32> to vector<256x4xf32>
    %c1_47 = arith.constant 1 : index
    %c2_48 = arith.constant 2 : index
    %c0_49 = arith.constant 0 : index
    %c0_50 = arith.constant 0 : index
    %42 = vector.load %arg3[%c1_47, %c2_48, %c0_49, %c0_50] : memref<3x3x4x8xf32, #tpu.memory_space<vmem>>, vector<1x1x4x8xf32>
    %43 = vector.shape_cast %42 : vector<1x1x4x8xf32> to vector<4x8xf32>
    %cst_51 = arith.constant dense<0.000000e+00> : vector<256x8xf32>
    %44 = tpu.matmul %41, %43, %cst_51 {dimension_numbers = #tpu.dot_dimension_numbers<[1], [0], [0], [1], [0, 0, 1, 1], [], []>} : vector<256x4xf32>, vector<4x8xf32>, vector<256x8xf32> -> vector<256x8xf32>
    %45 = arith.addf %38, %44 : vector<256x8xf32>
    %c0_52 = arith.constant 0 : index
    %c2_53 = arith.constant 2 : index
    %c0_54 = arith.constant 0 : index
    %c0_55 = arith.constant 0 : index
    %46 = vector.load %arg6[%c0_52, %c2_53, %c0_54, %c0_55] : memref<3x18x16x4xf32, #tpu.memory_space<vmem>>, vector<1x16x16x4xf32>
    %47 = vector.shape_cast %46 : vector<1x16x16x4xf32> to vector<16x16x4xf32>
    %48 = vector.shape_cast %47 : vector<16x16x4xf32> to vector<256x4xf32>
    %c2_56 = arith.constant 2 : index
    %c0_57 = arith.constant 0 : index
    %c0_58 = arith.constant 0 : index
    %c0_59 = arith.constant 0 : index
    %49 = vector.load %arg3[%c2_56, %c0_57, %c0_58, %c0_59] : memref<3x3x4x8xf32, #tpu.memory_space<vmem>>, vector<1x1x4x8xf32>
    %50 = vector.shape_cast %49 : vector<1x1x4x8xf32> to vector<4x8xf32>
    %cst_60 = arith.constant dense<0.000000e+00> : vector<256x8xf32>
    %51 = tpu.matmul %48, %50, %cst_60 {dimension_numbers = #tpu.dot_dimension_numbers<[1], [0], [0], [1], [0, 0, 1, 1], [], []>} : vector<256x4xf32>, vector<4x8xf32>, vector<256x8xf32> -> vector<256x8xf32>
    %52 = arith.addf %45, %51 : vector<256x8xf32>
    %c1_61 = arith.constant 1 : index
    %c2_62 = arith.constant 2 : index
    %c0_63 = arith.constant 0 : index
    %c0_64 = arith.constant 0 : index
    %53 = vector.load %arg6[%c1_61, %c2_62, %c0_63, %c0_64] : memref<3x18x16x4xf32, #tpu.memory_space<vmem>>, vector<1x16x16x4xf32>
    %54 = vector.shape_cast %53 : vector<1x16x16x4xf32> to vector<16x16x4xf32>
    %55 = vector.shape_cast %54 : vector<16x16x4xf32> to vector<256x4xf32>
    %c2_65 = arith.constant 2 : index
    %c1_66 = arith.constant 1 : index
    %c0_67 = arith.constant 0 : index
    %c0_68 = arith.constant 0 : index
    %56 = vector.load %arg3[%c2_65, %c1_66, %c0_67, %c0_68] : memref<3x3x4x8xf32, #tpu.memory_space<vmem>>, vector<1x1x4x8xf32>
    %57 = vector.shape_cast %56 : vector<1x1x4x8xf32> to vector<4x8xf32>
    %cst_69 = arith.constant dense<0.000000e+00> : vector<256x8xf32>
    %58 = tpu.matmul %55, %57, %cst_69 {dimension_numbers = #tpu.dot_dimension_numbers<[1], [0], [0], [1], [0, 0, 1, 1], [], []>} : vector<256x4xf32>, vector<4x8xf32>, vector<256x8xf32> -> vector<256x8xf32>
    %59 = arith.addf %52, %58 : vector<256x8xf32>
    %c2_70 = arith.constant 2 : index
    %c2_71 = arith.constant 2 : index
    %c0_72 = arith.constant 0 : index
    %c0_73 = arith.constant 0 : index
    %60 = vector.load %arg6[%c2_70, %c2_71, %c0_72, %c0_73] : memref<3x18x16x4xf32, #tpu.memory_space<vmem>>, vector<1x16x16x4xf32>
    %61 = vector.shape_cast %60 : vector<1x16x16x4xf32> to vector<16x16x4xf32>
    %62 = vector.shape_cast %61 : vector<16x16x4xf32> to vector<256x4xf32>
    %c2_74 = arith.constant 2 : index
    %c2_75 = arith.constant 2 : index
    %c0_76 = arith.constant 0 : index
    %c0_77 = arith.constant 0 : index
    %63 = vector.load %arg3[%c2_74, %c2_75, %c0_76, %c0_77] : memref<3x3x4x8xf32, #tpu.memory_space<vmem>>, vector<1x1x4x8xf32>
    %64 = vector.shape_cast %63 : vector<1x1x4x8xf32> to vector<4x8xf32>
    %cst_78 = arith.constant dense<0.000000e+00> : vector<256x8xf32>
    %65 = tpu.matmul %62, %64, %cst_78 {dimension_numbers = #tpu.dot_dimension_numbers<[1], [0], [0], [1], [0, 0, 1, 1], [], []>} : vector<256x4xf32>, vector<4x8xf32>, vector<256x8xf32> -> vector<256x8xf32>
    %66 = arith.addf %59, %65 : vector<256x8xf32>
    %c0_79 = arith.constant 0 : index
    %c0_80 = arith.constant 0 : index
    %c0_81 = arith.constant 0 : index
    %67 = vector.load %arg4[%c0_79, %c0_80, %c0_81] : memref<1x1x8xf32, #tpu.memory_space<vmem>>, vector<1x1x8xf32>
    %68 = vector.shape_cast %67 : vector<1x1x8xf32> to vector<1x8xf32>
    %69 = vector.broadcast %68 : vector<1x8xf32> to vector<256x8xf32>
    %70 = arith.mulf %66, %69 : vector<256x8xf32>
    %71 = vector.shape_cast %70 : vector<256x8xf32> to vector<16x16x8xf32>
    %c0_82 = arith.constant 0 : index
    %c0_83 = arith.constant 0 : index
    %c0_84 = arith.constant 0 : index
    %c0_85 = arith.constant 0 : index
    %72 = vector.load %arg5[%c0_82, %c0_83, %c0_84, %c0_85] : memref<1x16x16x8xf32, #tpu.memory_space<vmem>>, vector<1x16x16x8xf32>
    %73 = vector.shape_cast %72 : vector<1x16x16x8xf32> to vector<16x16x8xf32>
    %74 = vector.shape_cast %71 : vector<16x16x8xf32> to vector<1x16x16x8xf32>
    tpu.vector_store %arg5[%c0_82, %c0_83, %c0_84, %c0_85], %74 {strides = array<i32>} : memref<1x16x16x8xf32, #tpu.memory_space<vmem>>, vector<1x16x16x8xf32>,
    return
  }
  func.func @transform_0(%arg0: i32, %arg1: i32) -> (i32, i32, i32, i32) {
    %c0_i32 = arith.constant 0 : i32
    %c0_i32_0 = arith.constant 0 : i32
    %c0_i32_1 = arith.constant 0 : i32
    %c0_i32_2 = arith.constant 0 : i32
    return %arg0, %c0_i32, %c0_i32_0, %c0_i32_1 : i32, i32, i32, i32
  }
  func.func @transform_1(%arg0: i32, %arg1: i32) -> (i32, i32, i32, i32) {
    %c0_i32 = arith.constant 0 : i32
    %c0_i32_0 = arith.constant 0 : i32
    %c0_i32_1 = arith.constant 0 : i32
    %c0_i32_2 = arith.constant 0 : i32
    return %c0_i32, %c0_i32_0, %c0_i32_1, %arg1 : i32, i32, i32, i32
  }
  func.func @transform_2(%arg0: i32, %arg1: i32) -> (i32, i32, i32) {
    %c0_i32 = arith.constant 0 : i32
    %c0_i32_0 = arith.constant 0 : i32
    return %arg0, %c0_i32, %arg1 : i32, i32, i32
  }
  func.func @transform_3(%arg0: i32, %arg1: i32) -> (i32, i32, i32, i32) {
    %c0_i32 = arith.constant 0 : i32
    %c0_i32_0 = arith.constant 0 : i32
    %c0_i32_1 = arith.constant 0 : i32
    return %arg0, %c0_i32, %c0_i32_0, %arg1 : i32, i32, i32, i32
  }
}

</mosaic_0001>

<llo_original>
// kernel: tpu_custom_call.1
$region0: #{tpu_custom_call.1}
  #allocation0 [shape = 'u32[]', space=smem, size = 0x4, offset = 0x4, fixed_abs, tag = 'smem constant byte address 0x4 - core index']
  #allocation1 [shape = 'u32[144,128]{1,0:T(1,128)}', space=vmem, size = 0x12000, scoped, tag = 'internal scratch']
  #allocation2 [shape = 'f32[3,18,16,4]{3,2,1,0:T(8,128)}', space=vmem, size = 0x6c000, scoped, tag = 'scratch operand']
  %s0 = inlined_call_operand.vmem [shape: f32[2,16,16,4], index: 0, kind: input, shape index: {}]
  %s1 = inlined_call_operand.vmem [shape: f32[3,3,4,8], index: 1, kind: input, shape index: {}]
  %s2 = inlined_call_operand.vmem [shape: f32[2,1,8], index: 2, kind: input, shape index: {}]
  %s3 = inlined_call_operand.vmem [shape: f32[2,16,16,8], index: 3, kind: output, shape index: {}]
  %s4 = sld [smem:[#allocation0]]
  $region49: #{tpu_custom_call.1} parent=0
    _
  %s6 = ssub.s32 1, %s4
  %s7 = scalar_select 0, %s6, %s4
  loop: start=0, step=1, limit=4
  $region2: #{tpu_custom_call.1} parent=0 // loop_pre_header
    _
  $region3: #{tpu_custom_call.1} parent=0 // loop_header
    %s9 = sphi 0, %s13
    %p10 = scmp.ge.s32.totalorder %s9, 4
    %s16 = sphi 0, %s28
    %s17 = sphi 0, %s24
    %s18 = sphi 0, %s16
    %s19 = sphi 0, %s17
    %s20 = sphi 0, %s18
    %s21 = sphi 0, %s19
    %s31 = sphi 0, %s33
    %s34 = sphi 0, %s31
    %s35 = sphi 0, %s34
    %s51 = sphi 0, %s35
    %s57 = sphi 0, %s59
    %s60 = sphi 0, %s57
    %s61 = sphi 0, %s60
    %s77 = sphi 0, %s61
    %s85 = sphi 0, %s87
    %s88 = sphi 0, %s85
    %s89 = sphi 0, %s88
    %s105 = sphi 0, %s89
    %s113 = sphi 0, %s115
    %s116 = sphi 0, %s113
    %s117 = sphi 0, %s116
    %s133 = sphi 0, %s117
  $region4: #{tpu_custom_call.1} parent=0 // loop_header_branch
    %12 = sbr.rel (%p10) target = $region8
  $region5: #{tpu_custom_call.1} parent=0 // loop_body
    %s14 = ssub.s32 %s9, 1
    %s15 = ssub.s32 %s9, 2
    %s22 = sadd.s32 1, %s17
    %p23 = scmp.ge.s32.totalorder %s22, 1
    %s24 = scalar_select %p23, 0, %s22
    %s25 = sadd.s32 1, %s16
    %s26 = scalar_select %p23, %s25, %s16
    %p27 = scmp.ge.s32.totalorder %s26, 2
    %s28 = scalar_select %p27, 0, %s26
    %s29 = ssub.s32 %s16, %s28
    %p30 = scmp.eq.s32.totalorder %s29, 0
    %s32 = sadd.s32 %s31, 1
    %s33 = scalar_select %p30, %s31, %s32
    %p36 = pneg %p30
    %p37 = scmp.eq.s32.totalorder %s9, 1
    %p38 = por %p36, %p37
    %p39 = scmp.ne.s32.totalorder %s31, %s34
    %p40 = scmp.eq.s32.totalorder %s9, 0
    %p41 = por %p39, %p40
    %p42 = scmp.ne.s32.totalorder %s31, %s34
    %p43 = scmp.eq.s32.totalorder %s14, 1
    %p44 = por %p42, %p43
    %p45 = scmp.ne.s32.totalorder %s34, %s35
    %p46 = scmp.eq.s32.totalorder %s14, 0
    %p47 = por %p45, %p46
    %p48 = scmp.ne.s32.totalorder %s34, %s35
    %p49 = scmp.eq.s32.totalorder %s15, 1
    %p50 = por %p48, %p49
    %p52 = scmp.ne.s32.totalorder %s35, %s51
    %p53 = scmp.eq.s32.totalorder %s15, 0
    %p54 = por %p52, %p53
    %s55 = ssub.s32 %s17, %s24
    %p56 = scmp.eq.s32.totalorder %s55, 0
    %s58 = sadd.s32 %s57, 1
    %s59 = scalar_select %p56, %s57, %s58
    %p62 = pneg %p56
    %p63 = scmp.eq.s32.totalorder %s9, 1
    %p64 = por %p62, %p63
    %p65 = scmp.ne.s32.totalorder %s57, %s60
    %p66 = scmp.eq.s32.totalorder %s9, 0
    %p67 = por %p65, %p66
    %p68 = scmp.ne.s32.totalorder %s57, %s60
    %p69 = scmp.eq.s32.totalorder %s14, 1
    %p70 = por %p68, %p69
    %p71 = scmp.ne.s32.totalorder %s60, %s61
    %p72 = scmp.eq.s32.totalorder %s14, 0
    %p73 = por %p71, %p72
    %p74 = scmp.ne.s32.totalorder %s60, %s61
    %p75 = scmp.eq.s32.totalorder %s15, 1
    %p76 = por %p74, %p75
    %p78 = scmp.ne.s32.totalorder %s61, %s77
    %p79 = scmp.eq.s32.totalorder %s15, 0
    %p80 = por %p78, %p79
    %s81 = ssub.s32 %s16, %s28
    %s82 = ssub.s32 %s17, %s24
    %s83 = sor.u32 %s81, %s82
    %p84 = scmp.eq.s32.totalorder %s83, 0
    %s86 = sadd.s32 %s85, 1
    %s87 = scalar_select %p84, %s85, %s86
    %p90 = pneg %p84
    %p91 = scmp.eq.s32.totalorder %s9, 1
    %p92 = por %p90, %p91
    %p93 = scmp.ne.s32.totalorder %s85, %s88
    %p94 = scmp.eq.s32.totalorder %s9, 0
    %p95 = por %p93, %p94
    %p96 = scmp.ne.s32.totalorder %s85, %s88
    %p97 = scmp.eq.s32.totalorder %s14, 1
    %p98 = por %p96, %p97
    %p99 = scmp.ne.s32.totalorder %s88, %s89
    %p100 = scmp.eq.s32.totalorder %s14, 0
    %p101 = por %p99, %p100
    %p102 = scmp.ne.s32.totalorder %s88, %s89
    %p103 = scmp.eq.s32.totalorder %s15, 1
    %p104 = por %p102, %p103
    %p106 = scmp.ne.s32.totalorder %s89, %s105
    %p107 = scmp.eq.s32.totalorder %s15, 0
    %p108 = por %p106, %p107
    %s109 = ssub.s32 %s16, %s28
    %s110 = ssub.s32 %s17, %s24
    %s111 = sor.u32 %s109, %s110
    %p112 = scmp.eq.s32.totalorder %s111, 0
    %s114 = sadd.s32 %s113, 1
    %s115 = scalar_select %p112, %s113, %s114
    %p118 = pneg %p112
    %p119 = scmp.eq.s32.totalorder %s9, 1
    %p120 = por %p118, %p119
    %p121 = scmp.ne.s32.totalorder %s113, %s116
    %p122 = scmp.eq.s32.totalorder %s9, 0
    %p123 = por %p121, %p122
    %p124 = scmp.ne.s32.totalorder %s113, %s116
    %p125 = scmp.eq.s32.totalorder %s14, 1
    %p126 = por %p124, %p125
    %p127 = scmp.ne.s32.totalorder %s116, %s117
    %p128 = scmp.eq.s32.totalorder %s14, 0
    %p129 = por %p127, %p128
    %p130 = scmp.ne.s32.totalorder %s116, %s117
    %p131 = scmp.eq.s32.totalorder %s15, 1
    %p132 = por %p130, %p131
    %p134 = scmp.ne.s32.totalorder %s117, %s133
    %p135 = scmp.eq.s32.totalorder %s15, 0
    %p136 = por %p134, %p135
    %p137 = scmp.le.s32.totalorder 1, %s9
    %p138 = scmp.lt.s32.totalorder %s9, 3
    %p139 = pnand %p137, %p138
    %p140 = pneg %p139
    // Predicated region
    $region9: #{tpu_custom_call.1} parent=5 // pred_check
      _
    $region10: #{tpu_custom_call.1} parent=5 // pred_check_branch
      %142 = sbr.rel (%p139) target = $region12
    $region11: #{tpu_custom_call.1} parent=5 // pred_region
      %s143 = ssub.s32 %s9, 1
      // Predicated region
      $region13: #{tpu_custom_call.1} parent=11 // pred_check
        %p144 = pneg %p73
      $region14: #{tpu_custom_call.1} parent=11 // pred_check_branch
        %146 = sbr.rel (%p144) target = $region16
      $region15: #{tpu_custom_call.1} parent=11 // pred_region
        %p147 = scmp.lt.s32.totalorder %s19, 0
        %s148 = scalar_select %p147, %s19, 0
        %s149 = smul.addr %s148, 4
        %s150 = scalar_lea.vmem %s1, %s149
      $region16: #{tpu_custom_call.1} parent=11 // pred_fallthru
        _
    $region12: #{tpu_custom_call.1} parent=5 // pred_fallthru
      _
    %p151 = scmp.lt.s32.totalorder %s9, 2
    // Predicated region
    $region17: #{tpu_custom_call.1} parent=5 // pred_check
      %p152 = pneg %p151
    $region18: #{tpu_custom_call.1} parent=5 // pred_check_branch
      %154 = sbr.rel (%p152) target = $region20
    $region19: #{tpu_custom_call.1} parent=5 // pred_region
      // Predicated region
      $region21: #{tpu_custom_call.1} parent=19 // pred_check
        %p155 = pneg %p41
      $region22: #{tpu_custom_call.1} parent=19 // pred_check_branch
        %157 = sbr.rel (%p155) target = $region24
      $region23: #{tpu_custom_call.1} parent=19 // pred_region
        %p158 = scmp.lt.s32.totalorder %s16, 1
        %s159 = scalar_select %p158, %s16, 1
        %s160 = smul.addr %s159, 32
        %s161 = smul.addr %s160, 8
        %s162 = scalar_lea.vmem %s0, %s161
      $region24: #{tpu_custom_call.1} parent=19 // pred_fallthru
        _
      // Predicated region
      $region25: #{tpu_custom_call.1} parent=19 // pred_check
        %p163 = pneg %p95
      $region26: #{tpu_custom_call.1} parent=19 // pred_check_branch
        %165 = sbr.rel (%p163) target = $region28
      $region27: #{tpu_custom_call.1} parent=19 // pred_region
        %p166 = scmp.lt.s32.totalorder %s16, 1
        %s167 = scalar_select %p166, %s16, 1
        %p168 = scmp.lt.s32.totalorder %s17, 0
        %s169 = scalar_select %p168, %s17, 0
        %s170 = sadd.s32 %s169, %s167
        %s171 = scalar_lea.vmem %s2, %s170
      $region28: #{tpu_custom_call.1} parent=19 // pred_fallthru
        _
    $region20: #{tpu_custom_call.1} parent=5 // pred_fallthru
      _
    %p172 = scmp.le.s32.totalorder 1, %s9
    %p173 = scmp.lt.s32.totalorder %s9, 3
    %p174 = pnand %p172, %p173
    %p175 = pneg %p174
    // Predicated region
    $region29: #{tpu_custom_call.1} parent=5 // pred_check
      _
    $region30: #{tpu_custom_call.1} parent=5 // pred_check_branch
      %177 = sbr.rel (%p174) target = $region32
    $region31: #{tpu_custom_call.1} parent=5 // pred_region
      %s178 = ssub.s32 %s9, 1
      %p179 = scmp.lt.s32.totalorder %s18, 1
      %s180 = scalar_select %p179, %s18, 1
      %s181 = smul.addr %s180, 32
      %s182 = smul.addr %s181, 8
      %s183 = scalar_lea.vmem %s0, %s182
      %p184 = pneg %p47
      %p185 = pneg %p44
      %p186 = scmp.lt.s32.totalorder %s19, 0
      %s187 = scalar_select %p186, %s19, 0
      %s188 = smul.addr %s187, 4
      %s189 = scalar_lea.vmem %s1, %s188
      %p190 = pneg %p73
      %p191 = pneg %p70
      %p192 = scmp.lt.s32.totalorder %s18, 1
      %s193 = scalar_select %p192, %s18, 1
      %p194 = scmp.lt.s32.totalorder %s19, 0
      %s195 = scalar_select %p194, %s19, 0
      %s196 = sadd.s32 %s195, %s193
      %s197 = scalar_lea.vmem %s2, %s196
      %p198 = pneg %p101
      %p199 = pneg %p98
      %p200 = pneg %p129
      %p201 = pneg %p126
      %p202 = scmp.lt.s32.totalorder %s18, 1
      %s203 = scalar_select %p202, %s18, 1
      %p204 = scmp.lt.s32.totalorder %s19, 0
      %s205 = scalar_select %p204, %s19, 0
      %s206 = smul.addr %s203, 32
      %s207 = sadd.s32 %s205, %s206
      %s208 = smul.addr %s207, 8
      %s209 = scalar_lea.vmem %s3, %s208
      %p210 = scmp.lt.s32.totalorder %s18, 1
      %s211 = scalar_select %p210, %s18, 1
      %s212 = smul.addr %s211, 32
      %s213 = smul.addr %s212, 8
      %s214 = scalar_lea.vmem %s0, %s213
      %p215 = scmp.lt.s32.totalorder %s19, 0
      %s216 = scalar_select %p215, %s19, 0
      %s217 = smul.addr %s216, 4
      %s218 = scalar_lea.vmem %s1, %s217
      %p219 = scmp.lt.s32.totalorder %s18, 1
      %s220 = scalar_select %p219, %s18, 1
      %p221 = scmp.lt.s32.totalorder %s19, 0
      %s222 = scalar_select %p221, %s19, 0
      %s223 = sadd.s32 %s222, %s220
      %s224 = scalar_lea.vmem %s2, %s223
      %p225 = scmp.lt.s32.totalorder %s18, 1
      %s226 = scalar_select %p225, %s18, 1
      %p227 = scmp.lt.s32.totalorder %s19, 0
      %s228 = scalar_select %p227, %s19, 0
      %s229 = smul.addr %s226, 32
      %s230 = sadd.s32 %s228, %s229
      %s231 = smul.addr %s230, 8
      %s232 = scalar_lea.vmem %s3, %s231
      %p233 = scmp.eq.s32.totalorder %s19, 0
      // Predicated region
      $region33: #{tpu_custom_call.1} parent=31 // pred_check
        %p234 = pneg %p233
      $region34: #{tpu_custom_call.1} parent=31 // pred_check_branch
        %236 = sbr.rel (%p234) target = $region36
      $region35: #{tpu_custom_call.1} parent=31 // pred_region
        %v237 = vld [vmem:[%s214] sm:$0xff]
        %v238 = vld [vmem:[%s214 + $0x8] sm:$0xff]
        %v239 = vld [vmem:[%s214 + $0x10] sm:$0xff]
        %v240 = vld [vmem:[%s214 + $0x18] sm:$0xff]
        %v241 = vld [vmem:[%s214 + $0x20] sm:$0xff]
        %v242 = vld [vmem:[%s214 + $0x28] sm:$0xff]
        %v243 = vld [vmem:[%s214 + $0x30] sm:$0xff]
        %v244 = vld [vmem:[%s214 + $0x38] sm:$0xff]
        %v245 = vld [vmem:[%s214 + $0x40] sm:$0xff]
        %v246 = vld [vmem:[%s214 + $0x48] sm:$0xff]
        %v247 = vld [vmem:[%s214 + $0x50] sm:$0xff]
        %v248 = vld [vmem:[%s214 + $0x58] sm:$0xff]
        %v249 = vld [vmem:[%s214 + $0x60] sm:$0xff]
        %v250 = vld [vmem:[%s214 + $0x68] sm:$0xff]
        %v251 = vld [vmem:[%s214 + $0x70] sm:$0xff]
        %v252 = vld [vmem:[%s214 + $0x78] sm:$0xff]
        %v253 = vld [vmem:[%s214 + $0x80] sm:$0xff]
        %v254 = vld [vmem:[%s214 + $0x88] sm:$0xff]
        %v255 = vld [vmem:[%s214 + $0x90] sm:$0xff]
        %v256 = vld [vmem:[%s214 + $0x98] sm:$0xff]
        %v257 = vld [vmem:[%s214 + $0xa0] sm:$0xff]
        %v258 = vld [vmem:[%s214 + $0xa8] sm:$0xff]
        %v259 = vld [vmem:[%s214 + $0xb0] sm:$0xff]
        %v260 = vld [vmem:[%s214 + $0xb8] sm:$0xff]
        %v261 = vld [vmem:[%s214 + $0xc0] sm:$0xff]
        %v262 = vld [vmem:[%s214 + $0xc8] sm:$0xff]
        %v263 = vld [vmem:[%s214 + $0xd0] sm:$0xff]
        %v264 = vld [vmem:[%s214 + $0xd8] sm:$0xff]
        %v265 = vld [vmem:[%s214 + $0xe0] sm:$0xff]
        %v266 = vld [vmem:[%s214 + $0xe8] sm:$0xff]
        %v267 = vld [vmem:[%s214 + $0xf0] sm:$0xff]
        %v268 = vld [vmem:[%s214 + $0xf8] sm:$0xff]
        %s269 = scalar_lea.vmem [#allocation2], 304
        %vm270 = vcmask 31744
        %271 = vst.msk [vmem:[%s269] sm:$0xff] %vm270, %v237
        %272 = vst.msk [vmem:[%s269 + $0x8] sm:$0xff] %vm270, %v238
        %273 = vst.msk [vmem:[%s269 + $0x10] sm:$0xff] %vm270, %v239
        %274 = vst.msk [vmem:[%s269 + $0x18] sm:$0xff] %vm270, %v240
        %275 = vst.msk [vmem:[%s269 + $0x20] sm:$0xff] %vm270, %v241
        %276 = vst.msk [vmem:[%s269 + $0x28] sm:$0xff] %vm270, %v242
        %277 = vst.msk [vmem:[%s269 + $0x30] sm:$0xff] %vm270, %v243
        %278 = vst.msk [vmem:[%s269 + $0x38] sm:$0xff] %vm270, %v244
        %279 = vst.msk [vmem:[%s269 + $0x40] sm:$0xff] %vm270, %v245
        %280 = vst.msk [vmem:[%s269 + $0x48] sm:$0xff] %vm270, %v246
        %281 = vst.msk [vmem:[%s269 + $0x50] sm:$0xff] %vm270, %v247
        %282 = vst.msk [vmem:[%s269 + $0x58] sm:$0xff] %vm270, %v248
        %283 = vst.msk [vmem:[%s269 + $0x60] sm:$0xff] %vm270, %v249
        %284 = vst.msk [vmem:[%s269 + $0x68] sm:$0xff] %vm270, %v250
        %285 = vst.msk [vmem:[%s269 + $0x70] sm:$0xff] %vm270, %v251
        %286 = vst.msk [vmem:[%s269 + $0x78] sm:$0xff] %vm270, %v252
        %287 = vst.msk [vmem:[%s269 + $0x80] sm:$0xff] %vm270, %v253
        %288 = vst.msk [vmem:[%s269 + $0x88] sm:$0xff] %vm270, %v254
        %289 = vst.msk [vmem:[%s269 + $0x90] sm:$0xff] %vm270, %v255
        %290 = vst.msk [vmem:[%s269 + $0x98] sm:$0xff] %vm270, %v256
        %291 = vst.msk [vmem:[%s269 + $0xa0] sm:$0xff] %vm270, %v257
        %292 = vst.msk [vmem:[%s269 + $0xa8] sm:$0xff] %vm270, %v258
        %293 = vst.msk [vmem:[%s269 + $0xb0] sm:$0xff] %vm270, %v259
        %294 = vst.msk [vmem:[%s269 + $0xb8] sm:$0xff] %vm270, %v260
        %295 = vst.msk [vmem:[%s269 + $0xc0] sm:$0xff] %vm270, %v261
        %296 = vst.msk [vmem:[%s269 + $0xc8] sm:$0xff] %vm270, %v262
        %297 = vst.msk [vmem:[%s269 + $0xd0] sm:$0xff] %vm270, %v263
        %298 = vst.msk [vmem:[%s269 + $0xd8] sm:$0xff] %vm270, %v264
        %299 = vst.msk [vmem:[%s269 + $0xe0] sm:$0xff] %vm270, %v265
        %300 = vst.msk [vmem:[%s269 + $0xe8] sm:$0xff] %vm270, %v266
        %301 = vst.msk [vmem:[%s269 + $0xf0] sm:$0xff] %vm270, %v267
        %302 = vst.msk [vmem:[%s269 + $0xf8] sm:$0xff] %vm270, %v268
        %s303 = scalar_lea.vmem [#allocation2], 288
        %304 = vst.msk [vmem:[%s303] sm:$0xff] %vm270, %v237
        %305 = vst.msk [vmem:[%s303 + $0x8] sm:$0xff] %vm270, %v238
        %s306 = scalar_lea.vmem [#allocation2], 560
        %307 = vst.msk [vmem:[%s306] sm:$0xff] %vm270, %v267
        %308 = vst.msk [vmem:[%s306 + $0x8] sm:$0xff] %vm270, %v268
        %v309 = vld [vmem:[%s303] sm:$0xff]
        %v310 = vld [vmem:[%s303 + $0x8] sm:$0x7f]
        %v311 = vld [vmem:[%s303 + $0x10] sm:$0xff]
        %v312 = vld [vmem:[%s303 + $0x18] sm:$0x7f]
        %v313 = vld [vmem:[%s303 + $0x20] sm:$0xff]
        %v314 = vld [vmem:[%s303 + $0x28] sm:$0x7f]
        %v315 = vld [vmem:[%s303 + $0x30] sm:$0xff]
        %v316 = vld [vmem:[%s303 + $0x38] sm:$0x7f]
        %v317 = vld [vmem:[%s303 + $0x40] sm:$0xff]
        %v318 = vld [vmem:[%s303 + $0x48] sm:$0x7f]
        %v319 = vld [vmem:[%s303 + $0x50] sm:$0xff]
        %v320 = vld [vmem:[%s303 + $0x58] sm:$0x7f]
        %v321 = vld [vmem:[%s303 + $0x60] sm:$0xff]
        %v322 = vld [vmem:[%s303 + $0x68] sm:$0x7f]
        %v323 = vld [vmem:[%s303 + $0x70] sm:$0xff]
        %v324 = vld [vmem:[%s303 + $0x78] sm:$0x7f]
        %v325 = vld [vmem:[%s303 + $0x80] sm:$0xff]
        %v326 = vld [vmem:[%s303 + $0x88] sm:$0x7f]
        %v327 = vld [vmem:[%s303 + $0x90] sm:$0xff]
        %v328 = vld [vmem:[%s303 + $0x98] sm:$0x7f]
        %v329 = vld [vmem:[%s303 + $0xa0] sm:$0xff]
        %v330 = vld [vmem:[%s303 + $0xa8] sm:$0x7f]
        %v331 = vld [vmem:[%s303 + $0xb0] sm:$0xff]
        %v332 = vld [vmem:[%s303 + $0xb8] sm:$0x7f]
        %v333 = vld [vmem:[%s303 + $0xc0] sm:$0xff]
        %v334 = vld [vmem:[%s303 + $0xc8] sm:$0x7f]
        %v335 = vld [vmem:[%s303 + $0xd0] sm:$0xff]
        %v336 = vld [vmem:[%s303 + $0xd8] sm:$0x7f]
        %v337 = vld [vmem:[%s303 + $0xe0] sm:$0xff]
        %v338 = vld [vmem:[%s303 + $0xe8] sm:$0x7f]
        %v339 = vld [vmem:[%s303 + $0xf0] sm:$0xff]
        %v340 = vld [vmem:[%s303 + $0xf8] sm:$0x7f]
        %v341 = vld [vmem:[%s303 + $0x100] sm:$0xff]
        %v342 = vld [vmem:[%s303 + $0x108] sm:$0x7f]
        %v343 = vld [vmem:[%s303 + $0x110] sm:$0xff]
        %v344 = vld [vmem:[%s303 + $0x118] sm:$0x7f]
        %345 = vst.msk [vmem:[#allocation2 + $0x1] sm:$0xff] %vm270, %v309
        %vm346 = vcmask 30720
        %347 = vst.msk [vmem:[#allocation2 + $0x9] sm:$0x7f] %vm346, %v310
        %348 = vst.msk [vmem:[#allocation2 + $0x11] sm:$0xff] %vm270, %v311
        %349 = vst.msk [vmem:[#allocation2 + $0x19] sm:$0x7f] %vm346, %v312
        %350 = vst.msk [vmem:[#allocation2 + $0x21] sm:$0xff] %vm270, %v313
        %351 = vst.msk [vmem:[#allocation2 + $0x29] sm:$0x7f] %vm346, %v314
        %352 = vst.msk [vmem:[#allocation2 + $0x31] sm:$0xff] %vm270, %v315
        %353 = vst.msk [vmem:[#allocation2 + $0x39] sm:$0x7f] %vm346, %v316
        %354 = vst.msk [vmem:[#allocation2 + $0x41] sm:$0xff] %vm270, %v317
        %355 = vst.msk [vmem:[#allocation2 + $0x49] sm:$0x7f] %vm346, %v318
        %356 = vst.msk [vmem:[#allocation2 + $0x51] sm:$0xff] %vm270, %v319
        %357 = vst.msk [vmem:[#allocation2 + $0x59] sm:$0x7f] %vm346, %v320
        %358 = vst.msk [vmem:[#allocation2 + $0x61] sm:$0xff] %vm270, %v321
        %359 = vst.msk [vmem:[#allocation2 + $0x69] sm:$0x7f] %vm346, %v322
        %360 = vst.msk [vmem:[#allocation2 + $0x71] sm:$0xff] %vm270, %v323
        %361 = vst.msk [vmem:[#allocation2 + $0x79] sm:$0x7f] %vm346, %v324
        %362 = vst.msk [vmem:[#allocation2 + $0x81] sm:$0xff] %vm270, %v325
        %363 = vst.msk [vmem:[#allocation2 + $0x89] sm:$0x7f] %vm346, %v326
        %364 = vst.msk [vmem:[#allocation2 + $0x91] sm:$0xff] %vm270, %v327
        %365 = vst.msk [vmem:[#allocation2 + $0x99] sm:$0x7f] %vm346, %v328
        %366 = vst.msk [vmem:[#allocation2 + $0xa1] sm:$0xff] %vm270, %v329
        %367 = vst.msk [vmem:[#allocation2 + $0xa9] sm:$0x7f] %vm346, %v330
        %368 = vst.msk [vmem:[#allocation2 + $0xb1] sm:$0xff] %vm270, %v331
        %369 = vst.msk [vmem:[#allocation2 + $0xb9] sm:$0x7f] %vm346, %v332
        %370 = vst.msk [vmem:[#allocation2 + $0xc1] sm:$0xff] %vm270, %v333
        %371 = vst.msk [vmem:[#allocation2 + $0xc9] sm:$0x7f] %vm346, %v334
        %372 = vst.msk [vmem:[#allocation2 + $0xd1] sm:$0xff] %vm270, %v335
        %373 = vst.msk [vmem:[#allocation2 + $0xd9] sm:$0x7f] %vm346, %v336
        %374 = vst.msk [vmem:[#allocation2 + $0xe1] sm:$0xff] %vm270, %v337
        %375 = vst.msk [vmem:[#allocation2 + $0xe9] sm:$0x7f] %vm346, %v338
        %376 = vst.msk [vmem:[#allocation2 + $0xf1] sm:$0xff] %vm270, %v339
        %377 = vst.msk [vmem:[#allocation2 + $0xf9] sm:$0x7f] %vm346, %v340
        %378 = vst.msk [vmem:[#allocation2 + $0x101] sm:$0xff] %vm270, %v341
        %379 = vst.msk [vmem:[#allocation2 + $0x109] sm:$0x7f] %vm346, %v342
        %380 = vst.msk [vmem:[#allocation2 + $0x111] sm:$0xff] %vm270, %v343
        %381 = vst.msk [vmem:[#allocation2 + $0x119] sm:$0x7f] %vm346, %v344
        %v382 = vld [vmem:[%s303] sm:$0x1]
        %v383 = vld [vmem:[%s303 + $0x10] sm:$0x1]
        %v384 = vld [vmem:[%s303 + $0x20] sm:$0x1]
        %v385 = vld [vmem:[%s303 + $0x30] sm:$0x1]
        %v386 = vld [vmem:[%s303 + $0x40] sm:$0x1]
        %v387 = vld [vmem:[%s303 + $0x50] sm:$0x1]
        %v388 = vld [vmem:[%s303 + $0x60] sm:$0x1]
        %v389 = vld [vmem:[%s303 + $0x70] sm:$0x1]
        %v390 = vld [vmem:[%s303 + $0x80] sm:$0x1]
        %v391 = vld [vmem:[%s303 + $0x90] sm:$0x1]
        %v392 = vld [vmem:[%s303 + $0xa0] sm:$0x1]
        %v393 = vld [vmem:[%s303 + $0xb0] sm:$0x1]
        %v394 = vld [vmem:[%s303 + $0xc0] sm:$0x1]
        %v395 = vld [vmem:[%s303 + $0xd0] sm:$0x1]
        %v396 = vld [vmem:[%s303 + $0xe0] sm:$0x1]
        %v397 = vld [vmem:[%s303 + $0xf0] sm:$0x1]
        %v398 = vld [vmem:[%s303 + $0x100] sm:$0x1]
        %v399 = vld [vmem:[%s303 + $0x110] sm:$0x1]
        %vm400 = vcmask 24576
        %401 = vst.msk [vmem:[#allocation2] sm:$0x1] %vm400, %v382
        %402 = vst.msk [vmem:[#allocation2 + $0x10] sm:$0x1] %vm400, %v383
        %403 = vst.msk [vmem:[#allocation2 + $0x20] sm:$0x1] %vm400, %v384
        %404 = vst.msk [vmem:[#allocation2 + $0x30] sm:$0x1] %vm400, %v385
        %405 = vst.msk [vmem:[#allocation2 + $0x40] sm:$0x1] %vm400, %v386
        %406 = vst.msk [vmem:[#allocation2 + $0x50] sm:$0x1] %vm400, %v387
        %407 = vst.msk [vmem:[#allocation2 + $0x60] sm:$0x1] %vm400, %v388
        %408 = vst.msk [vmem:[#allocation2 + $0x70] sm:$0x1] %vm400, %v389
        %409 = vst.msk [vmem:[#allocation2 + $0x80] sm:$0x1] %vm400, %v390
        %410 = vst.msk [vmem:[#allocation2 + $0x90] sm:$0x1] %vm400, %v391
        %411 = vst.msk [vmem:[#allocation2 + $0xa0] sm:$0x1] %vm400, %v392
        %412 = vst.msk [vmem:[#allocation2 + $0xb0] sm:$0x1] %vm400, %v393
        %413 = vst.msk [vmem:[#allocation2 + $0xc0] sm:$0x1] %vm400, %v394
        %414 = vst.msk [vmem:[#allocation2 + $0xd0] sm:$0x1] %vm400, %v395
        %415 = vst.msk [vmem:[#allocation2 + $0xe0] sm:$0x1] %vm400, %v396
        %416 = vst.msk [vmem:[#allocation2 + $0xf0] sm:$0x1] %vm400, %v397
        %417 = vst.msk [vmem:[#allocation2 + $0x100] sm:$0x1] %vm400, %v398
        %418 = vst.msk [vmem:[#allocation2 + $0x110] sm:$0x1] %vm400, %v399
        %v419 = vld [vmem:[%s303 + $0x1] sm:$0xff]
        %v420 = vld [vmem:[%s303 + $0x9] sm:$0x7f]
        %v421 = vld [vmem:[%s303 + $0x11] sm:$0xff]
        %v422 = vld [vmem:[%s303 + $0x19] sm:$0x7f]
        %v423 = vld [vmem:[%s303 + $0x21] sm:$0xff]
        %v424 = vld [vmem:[%s303 + $0x29] sm:$0x7f]
        %v425 = vld [vmem:[%s303 + $0x31] sm:$0xff]
        %v426 = vld [vmem:[%s303 + $0x39] sm:$0x7f]
        %v427 = vld [vmem:[%s303 + $0x41] sm:$0xff]
        %v428 = vld [vmem:[%s303 + $0x49] sm:$0x7f]
        %v429 = vld [vmem:[%s303 + $0x51] sm:$0xff]
        %v430 = vld [vmem:[%s303 + $0x59] sm:$0x7f]
        %v431 = vld [vmem:[%s303 + $0x61] sm:$0xff]
        %v432 = vld [vmem:[%s303 + $0x69] sm:$0x7f]
        %v433 = vld [vmem:[%s303 + $0x71] sm:$0xff]
        %v434 = vld [vmem:[%s303 + $0x79] sm:$0x7f]
        %v435 = vld [vmem:[%s303 + $0x81] sm:$0xff]
        %v436 = vld [vmem:[%s303 + $0x89] sm:$0x7f]
        %v437 = vld [vmem:[%s303 + $0x91] sm:$0xff]
        %v438 = vld [vmem:[%s303 + $0x99] sm:$0x7f]
        %v439 = vld [vmem:[%s303 + $0xa1] sm:$0xff]
        %v440 = vld [vmem:[%s303 + $0xa9] sm:$0x7f]
        %v441 = vld [vmem:[%s303 + $0xb1] sm:$0xff]
        %v442 = vld [vmem:[%s303 + $0xb9] sm:$0x7f]
        %v443 = vld [vmem:[%s303 + $0xc1] sm:$0xff]
        %v444 = vld [vmem:[%s303 + $0xc9] sm:$0x7f]
        %v445 = vld [vmem:[%s303 + $0xd1] sm:$0xff]
        %v446 = vld [vmem:[%s303 + $0xd9] sm:$0x7f]
        %v447 = vld [vmem:[%s303 + $0xe1] sm:$0xff]
        %v448 = vld [vmem:[%s303 + $0xe9] sm:$0x7f]
        %v449 = vld [vmem:[%s303 + $0xf1] sm:$0xff]
        %v450 = vld [vmem:[%s303 + $0xf9] sm:$0x7f]
        %v451 = vld [vmem:[%s303 + $0x101] sm:$0xff]
        %v452 = vld [vmem:[%s303 + $0x109] sm:$0x7f]
        %v453 = vld [vmem:[%s303 + $0x111] sm:$0xff]
        %v454 = vld [vmem:[%s303 + $0x119] sm:$0x7f]
        %s455 = scalar_lea.vmem [#allocation2], 576
        %456 = vst.msk [vmem:[%s455] sm:$0xff] %vm270, %v419
        %457 = vst.msk [vmem:[%s455 + $0x8] sm:$0x7f] %vm346, %v420
        %458 = vst.msk [vmem:[%s455 + $0x10] sm:$0xff] %vm270, %v421
        %459 = vst.msk [vmem:[%s455 + $0x18] sm:$0x7f] %vm346, %v422
        %460 = vst.msk [vmem:[%s455 + $0x20] sm:$0xff] %vm270, %v423
        %461 = vst.msk [vmem:[%s455 + $0x28] sm:$0x7f] %vm346, %v424
        %462 = vst.msk [vmem:[%s455 + $0x30] sm:$0xff] %vm270, %v425
        %463 = vst.msk [vmem:[%s455 + $0x38] sm:$0x7f] %vm346, %v426
        %464 = vst.msk [vmem:[%s455 + $0x40] sm:$0xff] %vm270, %v427
        %465 = vst.msk [vmem:[%s455 + $0x48] sm:$0x7f] %vm346, %v428
        %466 = vst.msk [vmem:[%s455 + $0x50] sm:$0xff] %vm270, %v429
        %467 = vst.msk [vmem:[%s455 + $0x58] sm:$0x7f] %vm346, %v430
        %468 = vst.msk [vmem:[%s455 + $0x60] sm:$0xff] %vm270, %v431
        %469 = vst.msk [vmem:[%s455 + $0x68] sm:$0x7f] %vm346, %v432
        %470 = vst.msk [vmem:[%s455 + $0x70] sm:$0xff] %vm270, %v433
        %471 = vst.msk [vmem:[%s455 + $0x78] sm:$0x7f] %vm346, %v434
        %472 = vst.msk [vmem:[%s455 + $0x80] sm:$0xff] %vm270, %v435
        %473 = vst.msk [vmem:[%s455 + $0x88] sm:$0x7f] %vm346, %v436
        %474 = vst.msk [vmem:[%s455 + $0x90] sm:$0xff] %vm270, %v437
        %475 = vst.msk [vmem:[%s455 + $0x98] sm:$0x7f] %vm346, %v438
        %476 = vst.msk [vmem:[%s455 + $0xa0] sm:$0xff] %vm270, %v439
        %477 = vst.msk [vmem:[%s455 + $0xa8] sm:$0x7f] %vm346, %v440
        %478 = vst.msk [vmem:[%s455 + $0xb0] sm:$0xff] %vm270, %v441
        %479 = vst.msk [vmem:[%s455 + $0xb8] sm:$0x7f] %vm346, %v442
        %480 = vst.msk [vmem:[%s455 + $0xc0] sm:$0xff] %vm270, %v443
        %481 = vst.msk [vmem:[%s455 + $0xc8] sm:$0x7f] %vm346, %v444
        %482 = vst.msk [vmem:[%s455 + $0xd0] sm:$0xff] %vm270, %v445
        %483 = vst.msk [vmem:[%s455 + $0xd8] sm:$0x7f] %vm346, %v446
        %484 = vst.msk [vmem:[%s455 + $0xe0] sm:$0xff] %vm270, %v447
        %485 = vst.msk [vmem:[%s455 + $0xe8] sm:$0x7f] %vm346, %v448
        %486 = vst.msk [vmem:[%s455 + $0xf0] sm:$0xff] %vm270, %v449
        %487 = vst.msk [vmem:[%s455 + $0xf8] sm:$0x7f] %vm346, %v450
        %488 = vst.msk [vmem:[%s455 + $0x100] sm:$0xff] %vm270, %v451
        %489 = vst.msk [vmem:[%s455 + $0x108] sm:$0x7f] %vm346, %v452
        %490 = vst.msk [vmem:[%s455 + $0x110] sm:$0xff] %vm270, %v453
        %491 = vst.msk [vmem:[%s455 + $0x118] sm:$0x7f] %vm346, %v454
        %v492 = vld [vmem:[%s303 + $0xf] sm:$0x1]
        %v493 = vld [vmem:[%s303 + $0x1f] sm:$0x1]
        %v494 = vld [vmem:[%s303 + $0x2f] sm:$0x1]
        %v495 = vld [vmem:[%s303 + $0x3f] sm:$0x1]
        %v496 = vld [vmem:[%s303 + $0x4f] sm:$0x1]
        %v497 = vld [vmem:[%s303 + $0x5f] sm:$0x1]
        %v498 = vld [vmem:[%s303 + $0x6f] sm:$0x1]
        %v499 = vld [vmem:[%s303 + $0x7f] sm:$0x1]
        %v500 = vld [vmem:[%s303 + $0x8f] sm:$0x1]
        %v501 = vld [vmem:[%s303 + $0x9f] sm:$0x1]
        %v502 = vld [vmem:[%s303 + $0xaf] sm:$0x1]
        %v503 = vld [vmem:[%s303 + $0xbf] sm:$0x1]
        %v504 = vld [vmem:[%s303 + $0xcf] sm:$0x1]
        %v505 = vld [vmem:[%s303 + $0xdf] sm:$0x1]
        %v506 = vld [vmem:[%s303 + $0xef] sm:$0x1]
        %v507 = vld [vmem:[%s303 + $0xff] sm:$0x1]
        %v508 = vld [vmem:[%s303 + $0x10f] sm:$0x1]
        %v509 = vld [vmem:[%s303 + $0x11f] sm:$0x1]
        %510 = vst.msk [vmem:[%s455 + $0xf] sm:$0x1] %vm400, %v492
        %511 = vst.msk [vmem:[%s455 + $0x1f] sm:$0x1] %vm400, %v493
        %512 = vst.msk [vmem:[%s455 + $0x2f] sm:$0x1] %vm400, %v494
        %513 = vst.msk [vmem:[%s455 + $0x3f] sm:$0x1] %vm400, %v495
        %514 = vst.msk [vmem:[%s455 + $0x4f] sm:$0x1] %vm400, %v496
        %515 = vst.msk [vmem:[%s455 + $0x5f] sm:$0x1] %vm400, %v497
        %516 = vst.msk [vmem:[%s455 + $0x6f] sm:$0x1] %vm400, %v498
        %517 = vst.msk [vmem:[%s455 + $0x7f] sm:$0x1] %vm400, %v499
        %518 = vst.msk [vmem:[%s455 + $0x8f] sm:$0x1] %vm400, %v500
        %519 = vst.msk [vmem:[%s455 + $0x9f] sm:$0x1] %vm400, %v501
        %520 = vst.msk [vmem:[%s455 + $0xaf] sm:$0x1] %vm400, %v502
        %521 = vst.msk [vmem:[%s455 + $0xbf] sm:$0x1] %vm400, %v503
        %522 = vst.msk [vmem:[%s455 + $0xcf] sm:$0x1] %vm400, %v504
        %523 = vst.msk [vmem:[%s455 + $0xdf] sm:$0x1] %vm400, %v505
        %524 = vst.msk [vmem:[%s455 + $0xef] sm:$0x1] %vm400, %v506
        %525 = vst.msk [vmem:[%s455 + $0xff] sm:$0x1] %vm400, %v507
        %526 = vst.msk [vmem:[%s455 + $0x10f] sm:$0x1] %vm400, %v508
        %527 = vst.msk [vmem:[%s455 + $0x11f] sm:$0x1] %vm400, %v509
      $region36: #{tpu_custom_call.1} parent=31 // pred_fallthru
        _
      %v528 = vld [vmem:[#allocation2] sm:$0xff]
      %v529 = vld [vmem:[#allocation2 + $0x8] sm:$0xff]
      %v530 = vld [vmem:[#allocation2 + $0x10] sm:$0xff]
      %v531 = vld [vmem:[#allocation2 + $0x18] sm:$0xff]
      %v532 = vld [vmem:[#allocation2 + $0x20] sm:$0xff]
      %v533 = vld [vmem:[#allocation2 + $0x28] sm:$0xff]
      %v534 = vld [vmem:[#allocation2 + $0x30] sm:$0xff]
      %v535 = vld [vmem:[#allocation2 + $0x38] sm:$0xff]
      %v536 = vld [vmem:[#allocation2 + $0x40] sm:$0xff]
      %v537 = vld [vmem:[#allocation2 + $0x48] sm:$0xff]
      %v538 = vld [vmem:[#allocation2 + $0x50] sm:$0xff]
      %v539 = vld [vmem:[#allocation2 + $0x58] sm:$0xff]
      %v540 = vld [vmem:[#allocation2 + $0x60] sm:$0xff]
      %v541 = vld [vmem:[#allocation2 + $0x68] sm:$0xff]
      %v542 = vld [vmem:[#allocation2 + $0x70] sm:$0xff]
      %v543 = vld [vmem:[#allocation2 + $0x78] sm:$0xff]
      %v544 = vld [vmem:[#allocation2 + $0x80] sm:$0xff]
      %v545 = vld [vmem:[#allocation2 + $0x88] sm:$0xff]
      %v546 = vld [vmem:[#allocation2 + $0x90] sm:$0xff]
      %v547 = vld [vmem:[#allocation2 + $0x98] sm:$0xff]
      %v548 = vld [vmem:[#allocation2 + $0xa0] sm:$0xff]
      %v549 = vld [vmem:[#allocation2 + $0xa8] sm:$0xff]
      %v550 = vld [vmem:[#allocation2 + $0xb0] sm:$0xff]
      %v551 = vld [vmem:[#allocation2 + $0xb8] sm:$0xff]
      %v552 = vld [vmem:[#allocation2 + $0xc0] sm:$0xff]
      %v553 = vld [vmem:[#allocation2 + $0xc8] sm:$0xff]
      %v554 = vld [vmem:[#allocation2 + $0xd0] sm:$0xff]
      %v555 = vld [vmem:[#allocation2 + $0xd8] sm:$0xff]
      %v556 = vld [vmem:[#allocation2 + $0xe0] sm:$0xff]
      %v557 = vld [vmem:[#allocation2 + $0xe8] sm:$0xff]
      %v558 = vld [vmem:[#allocation2 + $0xf0] sm:$0xff]
      %v559 = vld [vmem:[#allocation2 + $0xf8] sm:$0xff]
      %v560 = vld [vmem:[%s218] sm:$0xf]
      %s561 = scalar_lea.vmem [#allocation2], 288
      %v562 = vld [vmem:[%s561] sm:$0xff]
      %v563 = vld [vmem:[%s561 + $0x8] sm:$0xff]
      %v564 = vld [vmem:[%s561 + $0x10] sm:$0xff]
      %v565 = vld [vmem:[%s561 + $0x18] sm:$0xff]
      %v566 = vld [vmem:[%s561 + $0x20] sm:$0xff]
      %v567 = vld [vmem:[%s561 + $0x28] sm:$0xff]
      %v568 = vld [vmem:[%s561 + $0x30] sm:$0xff]
      %v569 = vld [vmem:[%s561 + $0x38] sm:$0xff]
      %v570 = vld [vmem:[%s561 + $0x40] sm:$0xff]
      %v571 = vld [vmem:[%s561 + $0x48] sm:$0xff]
      %v572 = vld [vmem:[%s561 + $0x50] sm:$0xff]
      %v573 = vld [vmem:[%s561 + $0x58] sm:$0xff]
      %v574 = vld [vmem:[%s561 + $0x60] sm:$0xff]
      %v575 = vld [vmem:[%s561 + $0x68] sm:$0xff]
      %v576 = vld [vmem:[%s561 + $0x70] sm:$0xff]
      %v577 = vld [vmem:[%s561 + $0x78] sm:$0xff]
      %v578 = vld [vmem:[%s561 + $0x80] sm:$0xff]
      %v579 = vld [vmem:[%s561 + $0x88] sm:$0xff]
      %v580 = vld [vmem:[%s561 + $0x90] sm:$0xff]
      %v581 = vld [vmem:[%s561 + $0x98] sm:$0xff]
      %v582 = vld [vmem:[%s561 + $0xa0] sm:$0xff]
      %v583 = vld [vmem:[%s561 + $0xa8] sm:$0xff]
      %v584 = vld [vmem:[%s561 + $0xb0] sm:$0xff]
      %v585 = vld [vmem:[%s561 + $0xb8] sm:$0xff]
      %v586 = vld [vmem:[%s561 + $0xc0] sm:$0xff]
      %v587 = vld [vmem:[%s561 + $0xc8] sm:$0xff]
      %v588 = vld [vmem:[%s561 + $0xd0] sm:$0xff]
      %v589 = vld [vmem:[%s561 + $0xd8] sm:$0xff]
      %v590 = vld [vmem:[%s561 + $0xe0] sm:$0xff]
      %v591 = vld [vmem:[%s561 + $0xe8] sm:$0xff]
      %v592 = vld [vmem:[%s561 + $0xf0] sm:$0xff]
      %v593 = vld [vmem:[%s561 + $0xf8] sm:$0xff]
      %s594 = scalar_lea.vmem %s218, 4
      %v595 = vld [vmem:[%s594] sm:$0xf]
      %vm596 = vcmask 31744
      %v598 = vsel %vm596, %v562, 0
      %v601 = vsel %vm596, %v563, 0
      %v604 = vsel %vm596, %v564, 0
      %v607 = vsel %vm596, %v565, 0
      %v610 = vsel %vm596, %v566, 0
      %v613 = vsel %vm596, %v567, 0
      %v616 = vsel %vm596, %v568, 0
      %v619 = vsel %vm596, %v569, 0
      %v622 = vsel %vm596, %v570, 0
      %v625 = vsel %vm596, %v571, 0
      %v628 = vsel %vm596, %v572, 0
      %v631 = vsel %vm596, %v573, 0
      %v634 = vsel %vm596, %v574, 0
      %v637 = vsel %vm596, %v575, 0
      %v640 = vsel %vm596, %v576, 0
      %v643 = vsel %vm596, %v577, 0
      %v646 = vsel %vm596, %v578, 0
      %v649 = vsel %vm596, %v579, 0
      %v652 = vsel %vm596, %v580, 0
      %v655 = vsel %vm596, %v581, 0
      %v658 = vsel %vm596, %v582, 0
      %v661 = vsel %vm596, %v583, 0
      %v664 = vsel %vm596, %v584, 0
      %v667 = vsel %vm596, %v585, 0
      %v670 = vsel %vm596, %v586, 0
      %v673 = vsel %vm596, %v587, 0
      %v676 = vsel %vm596, %v588, 0
      %v679 = vsel %vm596, %v589, 0
      %v682 = vsel %vm596, %v590, 0
      %v685 = vsel %vm596, %v591, 0
      %v688 = vsel %vm596, %v592, 0
      %v691 = vsel %vm596, %v593, 0
      %vm693 = vcmask 1043456
      %v695 = vsel %vm693, %v595, 0
      %697 = vmatprep.subr.mxu0 0.0
      %698 = vmatpush1.msra.mxu0 %v695
      %699 = vmatprep.subr.mxu0 0.0
      %700 = vmatpush1.msra.mxu0 0.0
      %701 = vmatprep.subr.mxu0 0.0
      %702 = vmatpush1.msra.mxu0 0.0
      %703 = vmatprep.subr.mxu0 0.0
      %704 = vmatpush1.msra.mxu0 0.0
      %705 = vmatprep.subr.mxu0 0.0
      %706 = vmatpush1.msra.mxu0 0.0
      %707 = vmatprep.subr.mxu0 0.0
      %708 = vmatpush1.msra.mxu0 0.0
      %709 = vmatprep.subr.mxu0 0.0
      %710 = vmatpush1.msra.mxu0 0.0
      %711 = vmatprep.subr.mxu0 0.0
      %712 = vmatpush1.msra.mxu0 0.0
      %713 = vmatprep.subr.mxu0 0.0
      %714 = vmatpush1.msra.mxu0 0.0
      %715 = vmatprep.subr.mxu0 0.0
      %716 = vmatpush1.msra.mxu0 0.0
      %717 = vmatprep.subr.mxu0 0.0
      %718 = vmatpush1.msra.mxu0 0.0
      %719 = vmatprep.subr.mxu0 0.0
      %720 = vmatpush1.msra.mxu0 0.0
      %721 = vmatprep.subr.mxu0 0.0
      %722 = vmatpush1.msra.mxu0 0.0
      %723 = vmatprep.subr.mxu0 0.0
      %724 = vmatpush1.msra.mxu0 0.0
      %725 = vmatprep.subr.mxu0 0.0
      %726 = vmatpush1.msra.mxu0 0.0
      %727 = vmatprep.subr.mxu0 0.0
      %728 = vmatpush1.msra.mxu0 0.0
      %729 = vmatprep.subr.mxu0 0.0
      %730 = vmatpush1.msra.mxu0 0.0
      %731 = vmatprep.subr.mxu0 0.0
      %732 = vmatpush1.msra.mxu0 0.0
      %733 = vmatprep.subr.mxu0 0.0
      %734 = vmatpush1.msra.mxu0 0.0
      %735 = vmatprep.subr.mxu0 0.0
      %736 = vmatpush1.msra.mxu0 0.0
      %737 = vmatprep.subr.mxu0 0.0
      %738 = vmatpush1.msra.mxu0 0.0
      %739 = vmatprep.subr.mxu0 0.0
      %740 = vmatpush1.msra.mxu0 0.0
      %741 = vmatprep.subr.mxu0 0.0
      %742 = vmatpush1.msra.mxu0 0.0
      %743 = vmatprep.subr.mxu0 0.0
      %744 = vmatpush1.msra.mxu0 0.0
      %745 = vmatprep.subr.mxu0 0.0
      %746 = vmatpush1.msra.mxu0 0.0
      %747 = vmatprep.subr.mxu0 0.0
      %748 = vmatpush1.msra.mxu0 0.0
      %749 = vmatprep.subr.mxu0 0.0
      %750 = vmatpush1.msra.mxu0 0.0
      %751 = vmatprep.subr.mxu0 0.0
      %752 = vmatpush1.msra.mxu0 0.0
      %753 = vmatprep.subr.mxu0 0.0
      %754 = vmatpush1.msra.mxu0 0.0
      %755 = vmatprep.subr.mxu0 0.0
      %756 = vmatpush1.msra.mxu0 0.0
      %757 = vmatprep.subr.mxu0 0.0
      %758 = vmatpush1.msra.mxu0 0.0
      %759 = vmatprep.subr.mxu0 0.0
      %760 = vmatpush1.msra.mxu0 0.0
      %761 = vmatprep.mubr.f32.mxu0 0.0
      %762 = vmatmul.mubr.f32.gmra.mrb[0].mxu0 %v598
      %v763 = vpop.f32.mrb[0].mxu0
      %v764 = vadd.f32 0.0, %v763
      %v765 = vpop.f32.mrb[0].mxu0
      %766 = vmatprep.mubr.f32.mxu0 0.0
      %767 = vmatmul.mubr.f32.gmra.mrb[0].mxu0 %v601
      %v768 = vpop.f32.mrb[0].mxu0
      %v769 = vadd.f32 0.0, %v768
      %v770 = vpop.f32.mrb[0].mxu0
      %771 = vmatprep.mubr.f32.mxu0 0.0
      %772 = vmatmul.mubr.f32.gmra.mrb[0].mxu0 %v604
      %v773 = vpop.f32.mrb[0].mxu0
      %v774 = vadd.f32 0.0, %v773
      %v775 = vpop.f32.mrb[0].mxu0
      %776 = vmatprep.mubr.f32.mxu0 0.0
      %777 = vmatmul.mubr.f32.gmra.mrb[0].mxu0 %v607
      %v778 = vpop.f32.mrb[0].mxu0
      %v779 = vadd.f32 0.0, %v778
      %v780 = vpop.f32.mrb[0].mxu0
      %781 = vmatprep.mubr.f32.mxu0 0.0
      %782 = vmatmul.mubr.f32.gmra.mrb[0].mxu0 %v610
      %v783 = vpop.f32.mrb[0].mxu0
      %v784 = vadd.f32 0.0, %v783
      %v785 = vpop.f32.mrb[0].mxu0
      %786 = vmatprep.mubr.f32.mxu0 0.0
      %787 = vmatmul.mubr.f32.gmra.mrb[0].mxu0 %v613
      %v788 = vpop.f32.mrb[0].mxu0
      %v789 = vadd.f32 0.0, %v788
      %v790 = vpop.f32.mrb[0].mxu0
      %791 = vmatprep.mubr.f32.mxu0 0.0
      %792 = vmatmul.mubr.f32.gmra.mrb[0].mxu0 %v616
      %v793 = vpop.f32.mrb[0].mxu0
      %v794 = vadd.f32 0.0, %v793
      %v795 = vpop.f32.mrb[0].mxu0
      %796 = vmatprep.mubr.f32.mxu0 0.0
      %797 = vmatmul.mubr.f32.gmra.mrb[0].mxu0 %v619
      %v798 = vpop.f32.mrb[0].mxu0
      %v799 = vadd.f32 0.0, %v798
      %v800 = vpop.f32.mrb[0].mxu0
      %801 = vmatprep.mubr.f32.mxu0 0.0
      %802 = vmatmul.mubr.f32.gmra.mrb[0].mxu0 %v622
      %v803 = vpop.f32.mrb[0].mxu0
      %v804 = vadd.f32 0.0, %v803
      %v805 = vpop.f32.mrb[0].mxu0
      %806 = vmatprep.mubr.f32.mxu0 0.0
      %807 = vmatmul.mubr.f32.gmra.mrb[0].mxu0 %v625
      %v808 = vpop.f32.mrb[0].mxu0
      %v809 = vadd.f32 0.0, %v808
      %v810 = vpop.f32.mrb[0].mxu0
      %811 = vmatprep.mubr.f32.mxu0 0.0
      %812 = vmatmul.mubr.f32.gmra.mrb[0].mxu0 %v628
      %v813 = vpop.f32.mrb[0].mxu0
      %v814 = vadd.f32 0.0, %v813
      %v815 = vpop.f32.mrb[0].mxu0
      %816 = vmatprep.mubr.f32.mxu0 0.0
      %817 = vmatmul.mubr.f32.gmra.mrb[0].mxu0 %v631
      %v818 = vpop.f32.mrb[0].mxu0
      %v819 = vadd.f32 0.0, %v818
      %v820 = vpop.f32.mrb[0].mxu0
      %821 = vmatprep.mubr.f32.mxu0 0.0
      %822 = vmatmul.mubr.f32.gmra.mrb[0].mxu0 %v634
      %v823 = vpop.f32.mrb[0].mxu0
      %v824 = vadd.f32 0.0, %v823
      %v825 = vpop.f32.mrb[0].mxu0
      %826 = vmatprep.mubr.f32.mxu0 0.0
      %827 = vmatmul.mubr.f32.gmra.mrb[0].mxu0 %v637
      %v828 = vpop.f32.mrb[0].mxu0
      %v829 = vadd.f32 0.0, %v828
      %v830 = vpop.f32.mrb[0].mxu0
      %831 = vmatprep.mubr.f32.mxu0 0.0
      %832 = vmatmul.mubr.f32.gmra.mrb[0].mxu0 %v640
      %v833 = vpop.f32.mrb[0].mxu0
      %v834 = vadd.f32 0.0, %v833
      %v835 = vpop.f32.mrb[0].mxu0
      %836 = vmatprep.mubr.f32.mxu0 0.0
      %837 = vmatmul.mubr.f32.gmra.mrb[0].mxu0 %v643
      %v838 = vpop.f32.mrb[0].mxu0
      %v839 = vadd.f32 0.0, %v838
      %v840 = vpop.f32.mrb[0].mxu0
      %841 = vmatprep.mubr.f32.mxu0 0.0
      %842 = vmatmul.mubr.f32.gmra.mrb[0].mxu0 %v646
      %v843 = vpop.f32.mrb[0].mxu0
      %v844 = vadd.f32 0.0, %v843
      %v845 = vpop.f32.mrb[0].mxu0
      %846 = vmatprep.mubr.f32.mxu0 0.0
      %847 = vmatmul.mubr.f32.gmra.mrb[0].mxu0 %v649
      %v848 = vpop.f32.mrb[0].mxu0
      %v849 = vadd.f32 0.0, %v848
      %v850 = vpop.f32.mrb[0].mxu0
      %851 = vmatprep.mubr.f32.mxu0 0.0
      %852 = vmatmul.mubr.f32.gmra.mrb[0].mxu0 %v652
      %v853 = vpop.f32.mrb[0].mxu0
      %v854 = vadd.f32 0.0, %v853
      %v855 = vpop.f32.mrb[0].mxu0
      %856 = vmatprep.mubr.f32.mxu0 0.0
      %857 = vmatmul.mubr.f32.gmra.mrb[0].mxu0 %v655
      %v858 = vpop.f32.mrb[0].mxu0
      %v859 = vadd.f32 0.0, %v858
      %v860 = vpop.f32.mrb[0].mxu0
      %861 = vmatprep.mubr.f32.mxu0 0.0
      %862 = vmatmul.mubr.f32.gmra.mrb[0].mxu0 %v658
      %v863 = vpop.f32.mrb[0].mxu0
      %v864 = vadd.f32 0.0, %v863
      %v865 = vpop.f32.mrb[0].mxu0
      %866 = vmatprep.mubr.f32.mxu0 0.0
      %867 = vmatmul.mubr.f32.gmra.mrb[0].mxu0 %v661
      %v868 = vpop.f32.mrb[0].mxu0
      %v869 = vadd.f32 0.0, %v868
      %v870 = vpop.f32.mrb[0].mxu0
      %871 = vmatprep.mubr.f32.mxu0 0.0
      %872 = vmatmul.mubr.f32.gmra.mrb[0].mxu0 %v664
      %v873 = vpop.f32.mrb[0].mxu0
      %v874 = vadd.f32 0.0, %v873
      %v875 = vpop.f32.mrb[0].mxu0
      %876 = vmatprep.mubr.f32.mxu0 0.0
      %877 = vmatmul.mubr.f32.gmra.mrb[0].mxu0 %v667
      %v878 = vpop.f32.mrb[0].mxu0
      %v879 = vadd.f32 0.0, %v878
      %v880 = vpop.f32.mrb[0].mxu0
      %881 = vmatprep.mubr.f32.mxu0 0.0
      %882 = vmatmul.mubr.f32.gmra.mrb[0].mxu0 %v670
      %v883 = vpop.f32.mrb[0].mxu0
      %v884 = vadd.f32 0.0, %v883
      %v885 = vpop.f32.mrb[0].mxu0
      %886 = vmatprep.mubr.f32.mxu0 0.0
      %887 = vmatmul.mubr.f32.gmra.mrb[0].mxu0 %v673
      %v888 = vpop.f32.mrb[0].mxu0
      %v889 = vadd.f32 0.0, %v888
      %v890 = vpop.f32.mrb[0].mxu0
      %891 = vmatprep.mubr.f32.mxu0 0.0
      %892 = vmatmul.mubr.f32.gmra.mrb[0].mxu0 %v676
      %v893 = vpop.f32.mrb[0].mxu0
      %v894 = vadd.f32 0.0, %v893
      %v895 = vpop.f32.mrb[0].mxu0
      %896 = vmatprep.mubr.f32.mxu0 0.0
      %897 = vmatmul.mubr.f32.gmra.mrb[0].mxu0 %v679
      %v898 = vpop.f32.mrb[0].mxu0
      %v899 = vadd.f32 0.0, %v898
      %v900 = vpop.f32.mrb[0].mxu0
      %901 = vmatprep.mubr.f32.mxu0 0.0
      %902 = vmatmul.mubr.f32.gmra.mrb[0].mxu0 %v682
      %v903 = vpop.f32.mrb[0].mxu0
      %v904 = vadd.f32 0.0, %v903
      %v905 = vpop.f32.mrb[0].mxu0
      %906 = vmatprep.mubr.f32.mxu0 0.0
      %907 = vmatmul.mubr.f32.gmra.mrb[0].mxu0 %v685
      %v908 = vpop.f32.mrb[0].mxu0
      %v909 = vadd.f32 0.0, %v908
      %v910 = vpop.f32.mrb[0].mxu0
      %911 = vmatprep.mubr.f32.mxu0 0.0
      %912 = vmatmul.mubr.f32.gmra.mrb[0].mxu0 %v688
      %v913 = vpop.f32.mrb[0].mxu0
      %v914 = vadd.f32 0.0, %v913
      %v915 = vpop.f32.mrb[0].mxu0
      %916 = vmatprep.mubr.f32.mxu0 0.0
      %917 = vmatmul.mubr.f32.gmra.mrb[0].mxu0 %v691
      %v918 = vpop.f32.mrb[0].mxu0
      %v919 = vadd.f32 0.0, %v918
      %v920 = vpop.f32.mrb[0].mxu0
      %921 = vdwg.mxu0
      %v923 = vsel %vm596, %v528, 0
      %v926 = vsel %vm596, %v529, 0
      %v929 = vsel %vm596, %v530, 0
      %v932 = vsel %vm596, %v531, 0
      %v935 = vsel %vm596, %v532, 0
      %v938 = vsel %vm596, %v533, 0
      %v941 = vsel %vm596, %v534, 0
      %v944 = vsel %vm596, %v535, 0
      %v947 = vsel %vm596, %v536, 0
      %v950 = vsel %vm596, %v537, 0
      %v953 = vsel %vm596, %v538, 0
      %v956 = vsel %vm596, %v539, 0
      %v959 = vsel %vm596, %v540, 0
      %v962 = vsel %vm596, %v541, 0
      %v965 = vsel %vm596, %v542, 0
      %v968 = vsel %vm596, %v543, 0
      %v971 = vsel %vm596, %v544, 0
      %v974 = vsel %vm596, %v545, 0
      %v977 = vsel %vm596, %v546, 0
      %v980 = vsel %vm596, %v547, 0
      %v983 = vsel %vm596, %v548, 0
      %v986 = vsel %vm596, %v549, 0
      %v989 = vsel %vm596, %v550, 0
      %v992 = vsel %vm596, %v551, 0
      %v995 = vsel %vm596, %v552, 0
      %v998 = vsel %vm596, %v553, 0
      %v1001 = vsel %vm596, %v554, 0
      %v1004 = vsel %vm596, %v555, 0
      %v1007 = vsel %vm596, %v556, 0
      %v1010 = vsel %vm596, %v557, 0
      %v1013 = vsel %vm596, %v558, 0
      %v1016 = vsel %vm596, %v559, 0
      %v1019 = vsel %vm693, %v560, 0
      %1021 = vmatprep.subr.mxu0 0.0
      %1022 = vmatpush1.msra.mxu0 %v1019
      %1023 = vmatprep.subr.mxu0 0.0
      %1024 = vmatpush1.msra.mxu0 0.0
      %1025 = vmatprep.subr.mxu0 0.0
      %1026 = vmatpush1.msra.mxu0 0.0
      %1027 = vmatprep.subr.mxu0 0.0
      %1028 = vmatpush1.msra.mxu0 0.0
      %1029 = vmatprep.subr.mxu0 0.0
      %1030 = vmatpush1.msra.mxu0 0.0
      %1031 = vmatprep.subr.mxu0 0.0
      %1032 = vmatpush1.msra.mxu0 0.0
      %1033 = vmatprep.subr.mxu0 0.0
      %1034 = vmatpush1.msra.mxu0 0.0
      %1035 = vmatprep.subr.mxu0 0.0
      %1036 = vmatpush1.msra.mxu0 0.0
      %1037 = vmatprep.subr.mxu0 0.0
      %1038 = vmatpush1.msra.mxu0 0.0
      %1039 = vmatprep.subr.mxu0 0.0
      %1040 = vmatpush1.msra.mxu0 0.0
      %1041 = vmatprep.subr.mxu0 0.0
      %1042 = vmatpush1.msra.mxu0 0.0
      %1043 = vmatprep.subr.mxu0 0.0
      %1044 = vmatpush1.msra.mxu0 0.0
      %1045 = vmatprep.subr.mxu0 0.0
      %1046 = vmatpush1.msra.mxu0 0.0
      %1047 = vmatprep.subr.mxu0 0.0
      %1048 = vmatpush1.msra.mxu0 0.0
      %1049 = vmatprep.subr.mxu0 0.0
      %1050 = vmatpush1.msra.mxu0 0.0
      %1051 = vmatprep.subr.mxu0 0.0
      %1052 = vmatpush1.msra.mxu0 0.0
      %1053 = vmatprep.subr.mxu0 0.0
      %1054 = vmatpush1.msra.mxu0 0.0
      %1055 = vmatprep.subr.mxu0 0.0
      %1056 = vmatpush1.msra.mxu0 0.0
      %1057 = vmatprep.subr.mxu0 0.0
      %1058 = vmatpush1.msra.mxu0 0.0
      %1059 = vmatprep.subr.mxu0 0.0
      %1060 = vmatpush1.msra.mxu0 0.0
      %1061 = vmatprep.subr.mxu0 0.0
      %1062 = vmatpush1.msra.mxu0 0.0
      %1063 = vmatprep.subr.mxu0 0.0
      %1064 = vmatpush1.msra.mxu0 0.0
      %1065 = vmatprep.subr.mxu0 0.0
      %1066 = vmatpush1.msra.mxu0 0.0
      %1067 = vmatprep.subr.mxu0 0.0
      %1068 = vmatpush1.msra.mxu0 0.0
      %1069 = vmatprep.subr.mxu0 0.0
      %1070 = vmatpush1.msra.mxu0 0.0
      %1071 = vmatprep.subr.mxu0 0.0
      %1072 = vmatpush1.msra.mxu0 0.0
      %1073 = vmatprep.subr.mxu0 0.0
      %1074 = vmatpush1.msra.mxu0 0.0
      %1075 = vmatprep.subr.mxu0 0.0
      %1076 = vmatpush1.msra.mxu0 0.0
      %1077 = vmatprep.subr.mxu0 0.0
      %1078 = vmatpush1.msra.mxu0 0.0
      %1079 = vmatprep.subr.mxu0 0.0
      %1080 = vmatpush1.msra.mxu0 0.0
      %1081 = vmatprep.subr.mxu0 0.0
      %1082 = vmatpush1.msra.mxu0 0.0
      %1083 = vmatprep.subr.mxu0 0.0
      %1084 = vmatpush1.msra.mxu0 0.0
      %1085 = vmatprep.mubr.f32.mxu0 0.0
      %1086 = vmatmul.mubr.f32.gmra.mrb[0].mxu0 %v923
      %v1087 = vpop.f32.mrb[0].mxu0
      %v1088 = vadd.f32 %v764, %v1087
      %v1089 = vpop.f32.mrb[0].mxu0
      %1090 = vmatprep.mubr.f32.mxu0 0.0
      %1091 = vmatmul.mubr.f32.gmra.mrb[0].mxu0 %v926
      %v1092 = vpop.f32.mrb[0].mxu0
      %v1093 = vadd.f32 %v769, %v1092
      %v1094 = vpop.f32.mrb[0].mxu0
      %1095 = vmatprep.mubr.f32.mxu0 0.0
      %1096 = vmatmul.mubr.f32.gmra.mrb[0].mxu0 %v929
      %v1097 = vpop.f32.mrb[0].mxu0
      %v1098 = vadd.f32 %v774, %v1097
      %v1099 = vpop.f32.mrb[0].mxu0
      %1100 = vmatprep.mubr.f32.mxu0 0.0
      %1101 = vmatmul.mubr.f32.gmra.mrb[0].mxu0 %v932
      %v1102 = vpop.f32.mrb[0].mxu0
      %v1103 = vadd.f32 %v779, %v1102
      %v1104 = vpop.f32.mrb[0].mxu0
      %1105 = vmatprep.mubr.f32.mxu0 0.0
      %1106 = vmatmul.mubr.f32.gmra.mrb[0].mxu0 %v935
      %v1107 = vpop.f32.mrb[0].mxu0
      %v1108 = vadd.f32 %v784, %v1107
      %v1109 = vpop.f32.mrb[0].mxu0
      %1110 = vmatprep.mubr.f32.mxu0 0.0
      %1111 = vmatmul.mubr.f32.gmra.mrb[0].mxu0 %v938
      %v1112 = vpop.f32.mrb[0].mxu0
      %v1113 = vadd.f32 %v789, %v1112
      %v1114 = vpop.f32.mrb[0].mxu0
      %1115 = vmatprep.mubr.f32.mxu0 0.0
      %1116 = vmatmul.mubr.f32.gmra.mrb[0].mxu0 %v941
      %v1117 = vpop.f32.mrb[0].mxu0
      %v1118 = vadd.f32 %v794, %v1117
      %v1119 = vpop.f32.mrb[0].mxu0
      %1120 = vmatprep.mubr.f32.mxu0 0.0
      %1121 = vmatmul.mubr.f32.gmra.mrb[0].mxu0 %v944
      %v1122 = vpop.f32.mrb[0].mxu0
      %v1123 = vadd.f32 %v799, %v1122
      %v1124 = vpop.f32.mrb[0].mxu0
      %1125 = vmatprep.mubr.f32.mxu0 0.0
      %1126 = vmatmul.mubr.f32.gmra.mrb[0].mxu0 %v947
      %v1127 = vpop.f32.mrb[0].mxu0
      %v1128 = vadd.f32 %v804, %v1127
      %v1129 = vpop.f32.mrb[0].mxu0
      %1130 = vmatprep.mubr.f32.mxu0 0.0
      %1131 = vmatmul.mubr.f32.gmra.mrb[0].mxu0 %v950
      %v1132 = vpop.f32.mrb[0].mxu0
      %v1133 = vadd.f32 %v809, %v1132
      %v1134 = vpop.f32.mrb[0].mxu0
      %1135 = vmatprep.mubr.f32.mxu0 0.0
      %1136 = vmatmul.mubr.f32.gmra.mrb[0].mxu0 %v953
      %v1137 = vpop.f32.mrb[0].mxu0
      %v1138 = vadd.f32 %v814, %v1137
      %v1139 = vpop.f32.mrb[0].mxu0
      %1140 = vmatprep.mubr.f32.mxu0 0.0
      %1141 = vmatmul.mubr.f32.gmra.mrb[0].mxu0 %v956
      %v1142 = vpop.f32.mrb[0].mxu0
      %v1143 = vadd.f32 %v819, %v1142
      %v1144 = vpop.f32.mrb[0].mxu0
      %1145 = vmatprep.mubr.f32.mxu0 0.0
      %1146 = vmatmul.mubr.f32.gmra.mrb[0].mxu0 %v959
      %v1147 = vpop.f32.mrb[0].mxu0
      %v1148 = vadd.f32 %v824, %v1147
      %v1149 = vpop.f32.mrb[0].mxu0
      %1150 = vmatprep.mubr.f32.mxu0 0.0
      %1151 = vmatmul.mubr.f32.gmra.mrb[0].mxu0 %v962
      %v1152 = vpop.f32.mrb[0].mxu0
      %v1153 = vadd.f32 %v829, %v1152
      %v1154 = vpop.f32.mrb[0].mxu0
      %1155 = vmatprep.mubr.f32.mxu0 0.0
      %1156 = vmatmul.mubr.f32.gmra.mrb[0].mxu0 %v965
      %v1157 = vpop.f32.mrb[0].mxu0
      %v1158 = vadd.f32 %v834, %v1157
      %v1159 = vpop.f32.mrb[0].mxu0
      %1160 = vmatprep.mubr.f32.mxu0 0.0
      %1161 = vmatmul.mubr.f32.gmra.mrb[0].mxu0 %v968
      %v1162 = vpop.f32.mrb[0].mxu0
      %v1163 = vadd.f32 %v839, %v1162
      %v1164 = vpop.f32.mrb[0].mxu0
      %1165 = vmatprep.mubr.f32.mxu0 0.0
      %1166 = vmatmul.mubr.f32.gmra.mrb[0].mxu0 %v971
      %v1167 = vpop.f32.mrb[0].mxu0
      %v1168 = vadd.f32 %v844, %v1167
      %v1169 = vpop.f32.mrb[0].mxu0
      %1170 = vmatprep.mubr.f32.mxu0 0.0
      %1171 = vmatmul.mubr.f32.gmra.mrb[0].mxu0 %v974
      %v1172 = vpop.f32.mrb[0].mxu0
      %v1173 = vadd.f32 %v849, %v1172
      %v1174 = vpop.f32.mrb[0].mxu0
      %1175 = vmatprep.mubr.f32.mxu0 0.0
      %1176 = vmatmul.mubr.f32.gmra.mrb[0].mxu0 %v977
      %v1177 = vpop.f32.mrb[0].mxu0
      %v1178 = vadd.f32 %v854, %v1177
      %v1179 = vpop.f32.mrb[0].mxu0
      %1180 = vmatprep.mubr.f32.mxu0 0.0
      %1181 = vmatmul.mubr.f32.gmra.mrb[0].mxu0 %v980
      %v1182 = vpop.f32.mrb[0].mxu0
      %v1183 = vadd.f32 %v859, %v1182
      %v1184 = vpop.f32.mrb[0].mxu0
      %1185 = vmatprep.mubr.f32.mxu0 0.0
      %1186 = vmatmul.mubr.f32.gmra.mrb[0].mxu0 %v983
      %v1187 = vpop.f32.mrb[0].mxu0
      %v1188 = vadd.f32 %v864, %v1187
      %v1189 = vpop.f32.mrb[0].mxu0
      %1190 = vmatprep.mubr.f32.mxu0 0.0
      %1191 = vmatmul.mubr.f32.gmra.mrb[0].mxu0 %v986
      %v1192 = vpop.f32.mrb[0].mxu0
      %v1193 = vadd.f32 %v869, %v1192
      %v1194 = vpop.f32.mrb[0].mxu0
      %1195 = vmatprep.mubr.f32.mxu0 0.0
      %1196 = vmatmul.mubr.f32.gmra.mrb[0].mxu0 %v989
      %v1197 = vpop.f32.mrb[0].mxu0
      %v1198 = vadd.f32 %v874, %v1197
      %v1199 = vpop.f32.mrb[0].mxu0
      %1200 = vmatprep.mubr.f32.mxu0 0.0
      %1201 = vmatmul.mubr.f32.gmra.mrb[0].mxu0 %v992
      %v1202 = vpop.f32.mrb[0].mxu0
      %v1203 = vadd.f32 %v879, %v1202
      %v1204 = vpop.f32.mrb[0].mxu0
      %1205 = vmatprep.mubr.f32.mxu0 0.0
      %1206 = vmatmul.mubr.f32.gmra.mrb[0].mxu0 %v995
      %v1207 = vpop.f32.mrb[0].mxu0
      %v1208 = vadd.f32 %v884, %v1207
      %v1209 = vpop.f32.mrb[0].mxu0
      %1210 = vmatprep.mubr.f32.mxu0 0.0
      %1211 = vmatmul.mubr.f32.gmra.mrb[0].mxu0 %v998
      %v1212 = vpop.f32.mrb[0].mxu0
      %v1213 = vadd.f32 %v889, %v1212
      %v1214 = vpop.f32.mrb[0].mxu0
      %1215 = vmatprep.mubr.f32.mxu0 0.0
      %1216 = vmatmul.mubr.f32.gmra.mrb[0].mxu0 %v1001
      %v1217 = vpop.f32.mrb[0].mxu0
      %v1218 = vadd.f32 %v894, %v1217
      %v1219 = vpop.f32.mrb[0].mxu0
      %1220 = vmatprep.mubr.f32.mxu0 0.0
      %1221 = vmatmul.mubr.f32.gmra.mrb[0].mxu0 %v1004
      %v1222 = vpop.f32.mrb[0].mxu0
      %v1223 = vadd.f32 %v899, %v1222
      %v1224 = vpop.f32.mrb[0].mxu0
      %1225 = vmatprep.mubr.f32.mxu0 0.0
      %1226 = vmatmul.mubr.f32.gmra.mrb[0].mxu0 %v1007
      %v1227 = vpop.f32.mrb[0].mxu0
      %v1228 = vadd.f32 %v904, %v1227
      %v1229 = vpop.f32.mrb[0].mxu0
      %1230 = vmatprep.mubr.f32.mxu0 0.0
      %1231 = vmatmul.mubr.f32.gmra.mrb[0].mxu0 %v1010
      %v1232 = vpop.f32.mrb[0].mxu0
      %v1233 = vadd.f32 %v909, %v1232
      %v1234 = vpop.f32.mrb[0].mxu0
      %1235 = vmatprep.mubr.f32.mxu0 0.0
      %1236 = vmatmul.mubr.f32.gmra.mrb[0].mxu0 %v1013
      %v1237 = vpop.f32.mrb[0].mxu0
      %v1238 = vadd.f32 %v914, %v1237
      %v1239 = vpop.f32.mrb[0].mxu0
      %1240 = vmatprep.mubr.f32.mxu0 0.0
      %1241 = vmatmul.mubr.f32.gmra.mrb[0].mxu0 %v1016
      %v1242 = vpop.f32.mrb[0].mxu0
      %v1243 = vadd.f32 %v919, %v1242
      %v1244 = vpop.f32.mrb[0].mxu0
      %1245 = vdwg.mxu0
      %s1246 = scalar_lea.vmem [#allocation2], 576
      %v1247 = vld [vmem:[%s1246] sm:$0xff]
      %v1248 = vld [vmem:[%s1246 + $0x8] sm:$0xff]
      %v1249 = vld [vmem:[%s1246 + $0x10] sm:$0xff]
      %v1250 = vld [vmem:[%s1246 + $0x18] sm:$0xff]
      %v1251 = vld [vmem:[%s1246 + $0x20] sm:$0xff]
      %v1252 = vld [vmem:[%s1246 + $0x28] sm:$0xff]
      %v1253 = vld [vmem:[%s1246 + $0x30] sm:$0xff]
      %v1254 = vld [vmem:[%s1246 + $0x38] sm:$0xff]
      %v1255 = vld [vmem:[%s1246 + $0x40] sm:$0xff]
      %v1256 = vld [vmem:[%s1246 + $0x48] sm:$0xff]
      %v1257 = vld [vmem:[%s1246 + $0x50] sm:$0xff]
      %v1258 = vld [vmem:[%s1246 + $0x58] sm:$0xff]
      %v1259 = vld [vmem:[%s1246 + $0x60] sm:$0xff]
      %v1260 = vld [vmem:[%s1246 + $0x68] sm:$0xff]
      %v1261 = vld [vmem:[%s1246 + $0x70] sm:$0xff]
      %v1262 = vld [vmem:[%s1246 + $0x78] sm:$0xff]
      %v1263 = vld [vmem:[%s1246 + $0x80] sm:$0xff]
      %v1264 = vld [vmem:[%s1246 + $0x88] sm:$0xff]
      %v1265 = vld [vmem:[%s1246 + $0x90] sm:$0xff]
      %v1266 = vld [vmem:[%s1246 + $0x98] sm:$0xff]
      %v1267 = vld [vmem:[%s1246 + $0xa0] sm:$0xff]
      %v1268 = vld [vmem:[%s1246 + $0xa8] sm:$0xff]
      %v1269 = vld [vmem:[%s1246 + $0xb0] sm:$0xff]
      %v1270 = vld [vmem:[%s1246 + $0xb8] sm:$0xff]
      %v1271 = vld [vmem:[%s1246 + $0xc0] sm:$0xff]
      %v1272 = vld [vmem:[%s1246 + $0xc8] sm:$0xff]
      %v1273 = vld [vmem:[%s1246 + $0xd0] sm:$0xff]
      %v1274 = vld [vmem:[%s1246 + $0xd8] sm:$0xff]
      %v1275 = vld [vmem:[%s1246 + $0xe0] sm:$0xff]
      %v1276 = vld [vmem:[%s1246 + $0xe8] sm:$0xff]
      %v1277 = vld [vmem:[%s1246 + $0xf0] sm:$0xff]
      %v1278 = vld [vmem:[%s1246 + $0xf8] sm:$0xff]
      %s1279 = scalar_lea.vmem %s218, 8
      %v1280 = vld [vmem:[%s1279] sm:$0xf]
      %v1282 = vsel %vm596, %v1247, 0
      %v1285 = vsel %vm596, %v1248, 0
      %v1288 = vsel %vm596, %v1249, 0
      %v1291 = vsel %vm596, %v1250, 0
      %v1294 = vsel %vm596, %v1251, 0
      %v1297 = vsel %vm596, %v1252, 0
      %v1300 = vsel %vm596, %v1253, 0
      %v1303 = vsel %vm596, %v1254, 0
      %v1306 = vsel %vm596, %v1255, 0
      %v1309 = vsel %vm596, %v1256, 0
      %v1312 = vsel %vm596, %v1257, 0
      %v1315 = vsel %vm596, %v1258, 0
      %v1318 = vsel %vm596, %v1259, 0
      %v1321 = vsel %vm596, %v1260, 0
      %v1324 = vsel %vm596, %v1261, 0
      %v1327 = vsel %vm596, %v1262, 0
      %v1330 = vsel %vm596, %v1263, 0
      %v1333 = vsel %vm596, %v1264, 0
      %v1336 = vsel %vm596, %v1265, 0
      %v1339 = vsel %vm596, %v1266, 0
      %v1342 = vsel %vm596, %v1267, 0
      %v1345 = vsel %vm596, %v1268, 0
      %v1348 = vsel %vm596, %v1269, 0
      %v1351 = vsel %vm596, %v1270, 0
      %v1354 = vsel %vm596, %v1271, 0
      %v1357 = vsel %vm596, %v1272, 0
      %v1360 = vsel %vm596, %v1273, 0
      %v1363 = vsel %vm596, %v1274, 0
      %v1366 = vsel %vm596, %v1275, 0
      %v1369 = vsel %vm596, %v1276, 0
      %v1372 = vsel %vm596, %v1277, 0
      %v1375 = vsel %vm596, %v1278, 0
      %v1378 = vsel %vm693, %v1280, 0
      %1380 = vmatprep.subr.mxu0 0.0
      %1381 = vmatpush1.msra.mxu0 %v1378
      %1382 = vmatprep.subr.mxu0 0.0
      %1383 = vmatpush1.msra.mxu0 0.0
      %1384 = vmatprep.subr.mxu0 0.0
      %1385 = vmatpush1.msra.mxu0 0.0
      %1386 = vmatprep.subr.mxu0 0.0
      %1387 = vmatpush1.msra.mxu0 0.0
      %1388 = vmatprep.subr.mxu0 0.0
      %1389 = vmatpush1.msra.mxu0 0.0
      %1390 = vmatprep.subr.mxu0 0.0
      %1391 = vmatpush1.msra.mxu0 0.0
      %1392 = vmatprep.subr.mxu0 0.0
      %1393 = vmatpush1.msra.mxu0 0.0
      %1394 = vmatprep.subr.mxu0 0.0
      %1395 = vmatpush1.msra.mxu0 0.0
      %1396 = vmatprep.subr.mxu0 0.0
      %1397 = vmatpush1.msra.mxu0 0.0
      %1398 = vmatprep.subr.mxu0 0.0
      %1399 = vmatpush1.msra.mxu0 0.0
      %1400 = vmatprep.subr.mxu0 0.0
      %1401 = vmatpush1.msra.mxu0 0.0
      %1402 = vmatprep.subr.mxu0 0.0
      %1403 = vmatpush1.msra.mxu0 0.0
      %1404 = vmatprep.subr.mxu0 0.0
      %1405 = vmatpush1.msra.mxu0 0.0
      %1406 = vmatprep.subr.mxu0 0.0
      %1407 = vmatpush1.msra.mxu0 0.0
      %1408 = vmatprep.subr.mxu0 0.0
      %1409 = vmatpush1.msra.mxu0 0.0
      %1410 = vmatprep.subr.mxu0 0.0
      %1411 = vmatpush1.msra.mxu0 0.0
      %1412 = vmatprep.subr.mxu0 0.0
      %1413 = vmatpush1.msra.mxu0 0.0
      %1414 = vmatprep.subr.mxu0 0.0
      %1415 = vmatpush1.msra.mxu0 0.0
      %1416 = vmatprep.subr.mxu0 0.0
      %1417 = vmatpush1.msra.mxu0 0.0
      %1418 = vmatprep.subr.mxu0 0.0
      %1419 = vmatpush1.msra.mxu0 0.0
      %1420 = vmatprep.subr.mxu0 0.0
      %1421 = vmatpush1.msra.mxu0 0.0
      %1422 = vmatprep.subr.mxu0 0.0
      %1423 = vmatpush1.msra.mxu0 0.0
      %1424 = vmatprep.subr.mxu0 0.0
      %1425 = vmatpush1.msra.mxu0 0.0
      %1426 = vmatprep.subr.mxu0 0.0
      %1427 = vmatpush1.msra.mxu0 0.0
      %1428 = vmatprep.subr.mxu0 0.0
      %1429 = vmatpush1.msra.mxu0 0.0
      %1430 = vmatprep.subr.mxu0 0.0
      %1431 = vmatpush1.msra.mxu0 0.0
      %1432 = vmatprep.subr.mxu0 0.0
      %1433 = vmatpush1.msra.mxu0 0.0
      %1434 = vmatprep.subr.mxu0 0.0
      %1435 = vmatpush1.msra.mxu0 0.0
      %1436 = vmatprep.subr.mxu0 0.0
      %1437 = vmatpush1.msra.mxu0 0.0
      %1438 = vmatprep.subr.mxu0 0.0
      %1439 = vmatpush1.msra.mxu0 0.0
      %1440 = vmatprep.subr.mxu0 0.0
      %1441 = vmatpush1.msra.mxu0 0.0
      %1442 = vmatprep.subr.mxu0 0.0
      %1443 = vmatpush1.msra.mxu0 0.0
      %1444 = vmatprep.mubr.f32.mxu0 0.0
      %1445 = vmatmul.mubr.f32.gmra.mrb[0].mxu0 %v1282
      %v1446 = vpop.f32.mrb[0].mxu0
      %v1447 = vadd.f32 0.0, %v1446
      %v1448 = vpop.f32.mrb[0].mxu0
      %1449 = vmatprep.mubr.f32.mxu0 0.0
      %1450 = vmatmul.mubr.f32.gmra.mrb[0].mxu0 %v1285
      %v1451 = vpop.f32.mrb[0].mxu0
      %v1452 = vadd.f32 0.0, %v1451
      %v1453 = vpop.f32.mrb[0].mxu0
      %1454 = vmatprep.mubr.f32.mxu0 0.0
      %1455 = vmatmul.mubr.f32.gmra.mrb[0].mxu0 %v1288
      %v1456 = vpop.f32.mrb[0].mxu0
      %v1457 = vadd.f32 0.0, %v1456
      %v1458 = vpop.f32.mrb[0].mxu0
      %1459 = vmatprep.mubr.f32.mxu0 0.0
      %1460 = vmatmul.mubr.f32.gmra.mrb[0].mxu0 %v1291
      %v1461 = vpop.f32.mrb[0].mxu0
      %v1462 = vadd.f32 0.0, %v1461
      %v1463 = vpop.f32.mrb[0].mxu0
      %1464 = vmatprep.mubr.f32.mxu0 0.0
      %1465 = vmatmul.mubr.f32.gmra.mrb[0].mxu0 %v1294
      %v1466 = vpop.f32.mrb[0].mxu0
      %v1467 = vadd.f32 0.0, %v1466
      %v1468 = vpop.f32.mrb[0].mxu0
      %1469 = vmatprep.mubr.f32.mxu0 0.0
      %1470 = vmatmul.mubr.f32.gmra.mrb[0].mxu0 %v1297
      %v1471 = vpop.f32.mrb[0].mxu0
      %v1472 = vadd.f32 0.0, %v1471
      %v1473 = vpop.f32.mrb[0].mxu0
      %1474 = vmatprep.mubr.f32.mxu0 0.0
      %1475 = vmatmul.mubr.f32.gmra.mrb[0].mxu0 %v1300
      %v1476 = vpop.f32.mrb[0].mxu0
      %v1477 = vadd.f32 0.0, %v1476
      %v1478 = vpop.f32.mrb[0].mxu0
      %1479 = vmatprep.mubr.f32.mxu0 0.0
      %1480 = vmatmul.mubr.f32.gmra.mrb[0].mxu0 %v1303
      %v1481 = vpop.f32.mrb[0].mxu0
      %v1482 = vadd.f32 0.0, %v1481
      %v1483 = vpop.f32.mrb[0].mxu0
      %1484 = vmatprep.mubr.f32.mxu0 0.0
      %1485 = vmatmul.mubr.f32.gmra.mrb[0].mxu0 %v1306
      %v1486 = vpop.f32.mrb[0].mxu0
      %v1487 = vadd.f32 0.0, %v1486
      %v1488 = vpop.f32.mrb[0].mxu0
      %1489 = vmatprep.mubr.f32.mxu0 0.0
      %1490 = vmatmul.mubr.f32.gmra.mrb[0].mxu0 %v1309
      %v1491 = vpop.f32.mrb[0].mxu0
      %v1492 = vadd.f32 0.0, %v1491
      %v1493 = vpop.f32.mrb[0].mxu0
      %1494 = vmatprep.mubr.f32.mxu0 0.0
      %1495 = vmatmul.mubr.f32.gmra.mrb[0].mxu0 %v1312
      %v1496 = vpop.f32.mrb[0].mxu0
      %v1497 = vadd.f32 0.0, %v1496
      %v1498 = vpop.f32.mrb[0].mxu0
      %1499 = vmatprep.mubr.f32.mxu0 0.0
      %1500 = vmatmul.mubr.f32.gmra.mrb[0].mxu0 %v1315
      %v1501 = vpop.f32.mrb[0].mxu0
      %v1502 = vadd.f32 0.0, %v1501
      %v1503 = vpop.f32.mrb[0].mxu0
      %1504 = vmatprep.mubr.f32.mxu0 0.0
      %1505 = vmatmul.mubr.f32.gmra.mrb[0].mxu0 %v1318
      %v1506 = vpop.f32.mrb[0].mxu0
      %v1507 = vadd.f32 0.0, %v1506
      %v1508 = vpop.f32.mrb[0].mxu0
      %1509 = vmatprep.mubr.f32.mxu0 0.0
      %1510 = vmatmul.mubr.f32.gmra.mrb[0].mxu0 %v1321
      %v1511 = vpop.f32.mrb[0].mxu0
      %v1512 = vadd.f32 0.0, %v1511
      %v1513 = vpop.f32.mrb[0].mxu0
      %1514 = vmatprep.mubr.f32.mxu0 0.0
      %1515 = vmatmul.mubr.f32.gmra.mrb[0].mxu0 %v1324
      %v1516 = vpop.f32.mrb[0].mxu0
      %v1517 = vadd.f32 0.0, %v1516
      %v1518 = vpop.f32.mrb[0].mxu0
      %1519 = vmatprep.mubr.f32.mxu0 0.0
      %1520 = vmatmul.mubr.f32.gmra.mrb[0].mxu0 %v1327
      %v1521 = vpop.f32.mrb[0].mxu0
      %v1522 = vadd.f32 0.0, %v1521
      %v1523 = vpop.f32.mrb[0].mxu0
      %1524 = vmatprep.mubr.f32.mxu0 0.0
      %1525 = vmatmul.mubr.f32.gmra.mrb[0].mxu0 %v1330
      %v1526 = vpop.f32.mrb[0].mxu0
      %v1527 = vadd.f32 0.0, %v1526
      %v1528 = vpop.f32.mrb[0].mxu0
      %1529 = vmatprep.mubr.f32.mxu0 0.0
      %1530 = vmatmul.mubr.f32.gmra.mrb[0].mxu0 %v1333
      %v1531 = vpop.f32.mrb[0].mxu0
      %v1532 = vadd.f32 0.0, %v1531
      %v1533 = vpop.f32.mrb[0].mxu0
      %1534 = vmatprep.mubr.f32.mxu0 0.0
      %1535 = vmatmul.mubr.f32.gmra.mrb[0].mxu0 %v1336
      %v1536 = vpop.f32.mrb[0].mxu0
      %v1537 = vadd.f32 0.0, %v1536
      %v1538 = vpop.f32.mrb[0].mxu0
      %1539 = vmatprep.mubr.f32.mxu0 0.0
      %1540 = vmatmul.mubr.f32.gmra.mrb[0].mxu0 %v1339
      %v1541 = vpop.f32.mrb[0].mxu0
      %v1542 = vadd.f32 0.0, %v1541
      %v1543 = vpop.f32.mrb[0].mxu0
      %1544 = vmatprep.mubr.f32.mxu0 0.0
      %1545 = vmatmul.mubr.f32.gmra.mrb[0].mxu0 %v1342
      %v1546 = vpop.f32.mrb[0].mxu0
      %v1547 = vadd.f32 0.0, %v1546
      %v1548 = vpop.f32.mrb[0].mxu0
      %1549 = vmatprep.mubr.f32.mxu0 0.0
      %1550 = vmatmul.mubr.f32.gmra.mrb[0].mxu0 %v1345
      %v1551 = vpop.f32.mrb[0].mxu0
      %v1552 = vadd.f32 0.0, %v1551
      %v1553 = vpop.f32.mrb[0].mxu0
      %1554 = vmatprep.mubr.f32.mxu0 0.0
      %1555 = vmatmul.mubr.f32.gmra.mrb[0].mxu0 %v1348
      %v1556 = vpop.f32.mrb[0].mxu0
      %v1557 = vadd.f32 0.0, %v1556
      %v1558 = vpop.f32.mrb[0].mxu0
      %1559 = vmatprep.mubr.f32.mxu0 0.0
      %1560 = vmatmul.mubr.f32.gmra.mrb[0].mxu0 %v1351
      %v1561 = vpop.f32.mrb[0].mxu0
      %v1562 = vadd.f32 0.0, %v1561
      %v1563 = vpop.f32.mrb[0].mxu0
      %1564 = vmatprep.mubr.f32.mxu0 0.0
      %1565 = vmatmul.mubr.f32.gmra.mrb[0].mxu0 %v1354
      %v1566 = vpop.f32.mrb[0].mxu0
      %v1567 = vadd.f32 0.0, %v1566
      %v1568 = vpop.f32.mrb[0].mxu0
      %1569 = vmatprep.mubr.f32.mxu0 0.0
      %1570 = vmatmul.mubr.f32.gmra.mrb[0].mxu0 %v1357
      %v1571 = vpop.f32.mrb[0].mxu0
      %v1572 = vadd.f32 0.0, %v1571
      %v1573 = vpop.f32.mrb[0].mxu0
      %1574 = vmatprep.mubr.f32.mxu0 0.0
      %1575 = vmatmul.mubr.f32.gmra.mrb[0].mxu0 %v1360
      %v1576 = vpop.f32.mrb[0].mxu0
      %v1577 = vadd.f32 0.0, %v1576
      %v1578 = vpop.f32.mrb[0].mxu0
      %1579 = vmatprep.mubr.f32.mxu0 0.0
      %1580 = vmatmul.mubr.f32.gmra.mrb[0].mxu0 %v1363
      %v1581 = vpop.f32.mrb[0].mxu0
      %v1582 = vadd.f32 0.0, %v1581
      %v1583 = vpop.f32.mrb[0].mxu0
      %1584 = vmatprep.mubr.f32.mxu0 0.0
      %1585 = vmatmul.mubr.f32.gmra.mrb[0].mxu0 %v1366
      %v1586 = vpop.f32.mrb[0].mxu0
      %v1587 = vadd.f32 0.0, %v1586
      %v1588 = vpop.f32.mrb[0].mxu0
      %1589 = vmatprep.mubr.f32.mxu0 0.0
      %1590 = vmatmul.mubr.f32.gmra.mrb[0].mxu0 %v1369
      %v1591 = vpop.f32.mrb[0].mxu0
      %v1592 = vadd.f32 0.0, %v1591
      %v1593 = vpop.f32.mrb[0].mxu0
      %1594 = vmatprep.mubr.f32.mxu0 0.0
      %1595 = vmatmul.mubr.f32.gmra.mrb[0].mxu0 %v1372
      %v1596 = vpop.f32.mrb[0].mxu0
      %v1597 = vadd.f32 0.0, %v1596
      %v1598 = vpop.f32.mrb[0].mxu0
      %1599 = vmatprep.mubr.f32.mxu0 0.0
      %1600 = vmatmul.mubr.f32.gmra.mrb[0].mxu0 %v1375
      %v1601 = vpop.f32.mrb[0].mxu0
      %v1602 = vadd.f32 0.0, %v1601
      %v1603 = vpop.f32.mrb[0].mxu0
      %1604 = vdwg.mxu0
      %v1605 = vadd.f32 %v1088, %v1447
      %v1606 = vadd.f32 %v1093, %v1452
      %v1607 = vadd.f32 %v1098, %v1457
      %v1608 = vadd.f32 %v1103, %v1462
      %v1609 = vadd.f32 %v1108, %v1467
      %v1610 = vadd.f32 %v1113, %v1472
      %v1611 = vadd.f32 %v1118, %v1477
      %v1612 = vadd.f32 %v1123, %v1482
      %v1613 = vadd.f32 %v1128, %v1487
      %v1614 = vadd.f32 %v1133, %v1492
      %v1615 = vadd.f32 %v1138, %v1497
      %v1616 = vadd.f32 %v1143, %v1502
      %v1617 = vadd.f32 %v1148, %v1507
      %v1618 = vadd.f32 %v1153, %v1512
      %v1619 = vadd.f32 %v1158, %v1517
      %v1620 = vadd.f32 %v1163, %v1522
      %v1621 = vadd.f32 %v1168, %v1527
      %v1622 = vadd.f32 %v1173, %v1532
      %v1623 = vadd.f32 %v1178, %v1537
      %v1624 = vadd.f32 %v1183, %v1542
      %v1625 = vadd.f32 %v1188, %v1547
      %v1626 = vadd.f32 %v1193, %v1552
      %v1627 = vadd.f32 %v1198, %v1557
      %v1628 = vadd.f32 %v1203, %v1562
      %v1629 = vadd.f32 %v1208, %v1567
      %v1630 = vadd.f32 %v1213, %v1572
      %v1631 = vadd.f32 %v1218, %v1577
      %v1632 = vadd.f32 %v1223, %v1582
      %v1633 = vadd.f32 %v1228, %v1587
      %v1634 = vadd.f32 %v1233, %v1592
      %v1635 = vadd.f32 %v1238, %v1597
      %v1636 = vadd.f32 %v1243, %v1602
      %s1637 = scalar_lea.vmem [#allocation2], 16
      %v1638 = vld [vmem:[%s1637] sm:$0xff]
      %v1639 = vld [vmem:[%s1637 + $0x8] sm:$0xff]
      %v1640 = vld [vmem:[%s1637 + $0x10] sm:$0xff]
      %v1641 = vld [vmem:[%s1637 + $0x18] sm:$0xff]
      %v1642 = vld [vmem:[%s1637 + $0x20] sm:$0xff]
      %v1643 = vld [vmem:[%s1637 + $0x28] sm:$0xff]
      %v1644 = vld [vmem:[%s1637 + $0x30] sm:$0xff]
      %v1645 = vld [vmem:[%s1637 + $0x38] sm:$0xff]
      %v1646 = vld [vmem:[%s1637 + $0x40] sm:$0xff]
      %v1647 = vld [vmem:[%s1637 + $0x48] sm:$0xff]
      %v1648 = vld [vmem:[%s1637 + $0x50] sm:$0xff]
      %v1649 = vld [vmem:[%s1637 + $0x58] sm:$0xff]
      %v1650 = vld [vmem:[%s1637 + $0x60] sm:$0xff]
      %v1651 = vld [vmem:[%s1637 + $0x68] sm:$0xff]
      %v1652 = vld [vmem:[%s1637 + $0x70] sm:$0xff]
      %v1653 = vld [vmem:[%s1637 + $0x78] sm:$0xff]
      %v1654 = vld [vmem:[%s1637 + $0x80] sm:$0xff]
      %v1655 = vld [vmem:[%s1637 + $0x88] sm:$0xff]
      %v1656 = vld [vmem:[%s1637 + $0x90] sm:$0xff]
      %v1657 = vld [vmem:[%s1637 + $0x98] sm:$0xff]
      %v1658 = vld [vmem:[%s1637 + $0xa0] sm:$0xff]
      %v1659 = vld [vmem:[%s1637 + $0xa8] sm:$0xff]
      %v1660 = vld [vmem:[%s1637 + $0xb0] sm:$0xff]
      %v1661 = vld [vmem:[%s1637 + $0xb8] sm:$0xff]
      %v1662 = vld [vmem:[%s1637 + $0xc0] sm:$0xff]
      %v1663 = vld [vmem:[%s1637 + $0xc8] sm:$0xff]
      %v1664 = vld [vmem:[%s1637 + $0xd0] sm:$0xff]
      %v1665 = vld [vmem:[%s1637 + $0xd8] sm:$0xff]
      %v1666 = vld [vmem:[%s1637 + $0xe0] sm:$0xff]
      %v1667 = vld [vmem:[%s1637 + $0xe8] sm:$0xff]
      %v1668 = vld [vmem:[%s1637 + $0xf0] sm:$0xff]
      %v1669 = vld [vmem:[%s1637 + $0xf8] sm:$0xff]
      %s1670 = scalar_lea.vmem %s218, 12
      %v1671 = vld [vmem:[%s1670] sm:$0xf]
      %v1673 = vsel %vm596, %v1638, 0
      %v1676 = vsel %vm596, %v1639, 0
      %v1679 = vsel %vm596, %v1640, 0
      %v1682 = vsel %vm596, %v1641, 0
      %v1685 = vsel %vm596, %v1642, 0
      %v1688 = vsel %vm596, %v1643, 0
      %v1691 = vsel %vm596, %v1644, 0
      %v1694 = vsel %vm596, %v1645, 0
      %v1697 = vsel %vm596, %v1646, 0
      %v1700 = vsel %vm596, %v1647, 0
      %v1703 = vsel %vm596, %v1648, 0
      %v1706 = vsel %vm596, %v1649, 0
      %v1709 = vsel %vm596, %v1650, 0
      %v1712 = vsel %vm596, %v1651, 0
      %v1715 = vsel %vm596, %v1652, 0
      %v1718 = vsel %vm596, %v1653, 0
      %v1721 = vsel %vm596, %v1654, 0
      %v1724 = vsel %vm596, %v1655, 0
      %v1727 = vsel %vm596, %v1656, 0
      %v1730 = vsel %vm596, %v1657, 0
      %v1733 = vsel %vm596, %v1658, 0
      %v1736 = vsel %vm596, %v1659, 0
      %v1739 = vsel %vm596, %v1660, 0
      %v1742 = vsel %vm596, %v1661, 0
      %v1745 = vsel %vm596, %v1662, 0
      %v1748 = vsel %vm596, %v1663, 0
      %v1751 = vsel %vm596, %v1664, 0
      %v1754 = vsel %vm596, %v1665, 0
      %v1757 = vsel %vm596, %v1666, 0
      %v1760 = vsel %vm596, %v1667, 0
      %v1763 = vsel %vm596, %v1668, 0
      %v1766 = vsel %vm596, %v1669, 0
      %v1769 = vsel %vm693, %v1671, 0
      %1771 = vmatprep.subr.mxu0 0.0
      %1772 = vmatpush1.msra.mxu0 %v1769
      %1773 = vmatprep.subr.mxu0 0.0
      %1774 = vmatpush1.msra.mxu0 0.0
      %1775 = vmatprep.subr.mxu0 0.0
      %1776 = vmatpush1.msra.mxu0 0.0
      %1777 = vmatprep.subr.mxu0 0.0
      %1778 = vmatpush1.msra.mxu0 0.0
      %1779 = vmatprep.subr.mxu0 0.0
      %1780 = vmatpush1.msra.mxu0 0.0
      %1781 = vmatprep.subr.mxu0 0.0
      %1782 = vmatpush1.msra.mxu0 0.0
      %1783 = vmatprep.subr.mxu0 0.0
      %1784 = vmatpush1.msra.mxu0 0.0
      %1785 = vmatprep.subr.mxu0 0.0
      %1786 = vmatpush1.msra.mxu0 0.0
      %1787 = vmatprep.subr.mxu0 0.0
      %1788 = vmatpush1.msra.mxu0 0.0
      %1789 = vmatprep.subr.mxu0 0.0
      %1790 = vmatpush1.msra.mxu0 0.0
      %1791 = vmatprep.subr.mxu0 0.0
      %1792 = vmatpush1.msra.mxu0 0.0
      %1793 = vmatprep.subr.mxu0 0.0
      %1794 = vmatpush1.msra.mxu0 0.0
      %1795 = vmatprep.subr.mxu0 0.0
      %1796 = vmatpush1.msra.mxu0 0.0
      %1797 = vmatprep.subr.mxu0 0.0
      %1798 = vmatpush1.msra.mxu0 0.0
      %1799 = vmatprep.subr.mxu0 0.0
      %1800 = vmatpush1.msra.mxu0 0.0
      %1801 = vmatprep.subr.mxu0 0.0
      %1802 = vmatpush1.msra.mxu0 0.0
      %1803 = vmatprep.subr.mxu0 0.0
      %1804 = vmatpush1.msra.mxu0 0.0
      %1805 = vmatprep.subr.mxu0 0.0
      %1806 = vmatpush1.msra.mxu0 0.0
      %1807 = vmatprep.subr.mxu0 0.0
      %1808 = vmatpush1.msra.mxu0 0.0
      %1809 = vmatprep.subr.mxu0 0.0
      %1810 = vmatpush1.msra.mxu0 0.0
      %1811 = vmatprep.subr.mxu0 0.0
      %1812 = vmatpush1.msra.mxu0 0.0
      %1813 = vmatprep.subr.mxu0 0.0
      %1814 = vmatpush1.msra.mxu0 0.0
      %1815 = vmatprep.subr.mxu0 0.0
      %1816 = vmatpush1.msra.mxu0 0.0
      %1817 = vmatprep.subr.mxu0 0.0
      %1818 = vmatpush1.msra.mxu0 0.0
      %1819 = vmatprep.subr.mxu0 0.0
      %1820 = vmatpush1.msra.mxu0 0.0
      %1821 = vmatprep.subr.mxu0 0.0
      %1822 = vmatpush1.msra.mxu0 0.0
      %1823 = vmatprep.subr.mxu0 0.0
      %1824 = vmatpush1.msra.mxu0 0.0
      %1825 = vmatprep.subr.mxu0 0.0
      %1826 = vmatpush1.msra.mxu0 0.0
      %1827 = vmatprep.subr.mxu0 0.0
      %1828 = vmatpush1.msra.mxu0 0.0
      %1829 = vmatprep.subr.mxu0 0.0
      %1830 = vmatpush1.msra.mxu0 0.0
      %1831 = vmatprep.subr.mxu0 0.0
      %1832 = vmatpush1.msra.mxu0 0.0
      %1833 = vmatprep.subr.mxu0 0.0
      %1834 = vmatpush1.msra.mxu0 0.0
      %1835 = vmatprep.mubr.f32.mxu0 0.0
      %1836 = vmatmul.mubr.f32.gmra.mrb[0].mxu0 %v1673
      %v1837 = vpop.f32.mrb[0].mxu0
      %v1838 = vadd.f32 0.0, %v1837
      %v1839 = vpop.f32.mrb[0].mxu0
      %1840 = vmatprep.mubr.f32.mxu0 0.0
      %1841 = vmatmul.mubr.f32.gmra.mrb[0].mxu0 %v1676
      %v1842 = vpop.f32.mrb[0].mxu0
      %v1843 = vadd.f32 0.0, %v1842
      %v1844 = vpop.f32.mrb[0].mxu0
      %1845 = vmatprep.mubr.f32.mxu0 0.0
      %1846 = vmatmul.mubr.f32.gmra.mrb[0].mxu0 %v1679
      %v1847 = vpop.f32.mrb[0].mxu0
      %v1848 = vadd.f32 0.0, %v1847
      %v1849 = vpop.f32.mrb[0].mxu0
      %1850 = vmatprep.mubr.f32.mxu0 0.0
      %1851 = vmatmul.mubr.f32.gmra.mrb[0].mxu0 %v1682
      %v1852 = vpop.f32.mrb[0].mxu0
      %v1853 = vadd.f32 0.0, %v1852
      %v1854 = vpop.f32.mrb[0].mxu0
      %1855 = vmatprep.mubr.f32.mxu0 0.0
      %1856 = vmatmul.mubr.f32.gmra.mrb[0].mxu0 %v1685
      %v1857 = vpop.f32.mrb[0].mxu0
      %v1858 = vadd.f32 0.0, %v1857
      %v1859 = vpop.f32.mrb[0].mxu0
      %1860 = vmatprep.mubr.f32.mxu0 0.0
      %1861 = vmatmul.mubr.f32.gmra.mrb[0].mxu0 %v1688
      %v1862 = vpop.f32.mrb[0].mxu0
      %v1863 = vadd.f32 0.0, %v1862
      %v1864 = vpop.f32.mrb[0].mxu0
      %1865 = vmatprep.mubr.f32.mxu0 0.0
      %1866 = vmatmul.mubr.f32.gmra.mrb[0].mxu0 %v1691
      %v1867 = vpop.f32.mrb[0].mxu0
      %v1868 = vadd.f32 0.0, %v1867
      %v1869 = vpop.f32.mrb[0].mxu0
      %1870 = vmatprep.mubr.f32.mxu0 0.0
      %1871 = vmatmul.mubr.f32.gmra.mrb[0].mxu0 %v1694
      %v1872 = vpop.f32.mrb[0].mxu0
      %v1873 = vadd.f32 0.0, %v1872
      %v1874 = vpop.f32.mrb[0].mxu0
      %1875 = vmatprep.mubr.f32.mxu0 0.0
      %1876 = vmatmul.mubr.f32.gmra.mrb[0].mxu0 %v1697
      %v1877 = vpop.f32.mrb[0].mxu0
      %v1878 = vadd.f32 0.0, %v1877
      %v1879 = vpop.f32.mrb[0].mxu0
      %1880 = vmatprep.mubr.f32.mxu0 0.0
      %1881 = vmatmul.mubr.f32.gmra.mrb[0].mxu0 %v1700
      %v1882 = vpop.f32.mrb[0].mxu0
      %v1883 = vadd.f32 0.0, %v1882
      %v1884 = vpop.f32.mrb[0].mxu0
      %1885 = vmatprep.mubr.f32.mxu0 0.0
      %1886 = vmatmul.mubr.f32.gmra.mrb[0].mxu0 %v1703
      %v1887 = vpop.f32.mrb[0].mxu0
      %v1888 = vadd.f32 0.0, %v1887
      %v1889 = vpop.f32.mrb[0].mxu0
      %1890 = vmatprep.mubr.f32.mxu0 0.0
      %1891 = vmatmul.mubr.f32.gmra.mrb[0].mxu0 %v1706
      %v1892 = vpop.f32.mrb[0].mxu0
      %v1893 = vadd.f32 0.0, %v1892
      %v1894 = vpop.f32.mrb[0].mxu0
      %1895 = vmatprep.mubr.f32.mxu0 0.0
      %1896 = vmatmul.mubr.f32.gmra.mrb[0].mxu0 %v1709
      %v1897 = vpop.f32.mrb[0].mxu0
      %v1898 = vadd.f32 0.0, %v1897
      %v1899 = vpop.f32.mrb[0].mxu0
      %1900 = vmatprep.mubr.f32.mxu0 0.0
      %1901 = vmatmul.mubr.f32.gmra.mrb[0].mxu0 %v1712
      %v1902 = vpop.f32.mrb[0].mxu0
      %v1903 = vadd.f32 0.0, %v1902
      %v1904 = vpop.f32.mrb[0].mxu0
      %1905 = vmatprep.mubr.f32.mxu0 0.0
      %1906 = vmatmul.mubr.f32.gmra.mrb[0].mxu0 %v1715
      %v1907 = vpop.f32.mrb[0].mxu0
      %v1908 = vadd.f32 0.0, %v1907
      %v1909 = vpop.f32.mrb[0].mxu0
      %1910 = vmatprep.mubr.f32.mxu0 0.0
      %1911 = vmatmul.mubr.f32.gmra.mrb[0].mxu0 %v1718
      %v1912 = vpop.f32.mrb[0].mxu0
      %v1913 = vadd.f32 0.0, %v1912
      %v1914 = vpop.f32.mrb[0].mxu0
      %1915 = vmatprep.mubr.f32.mxu0 0.0
      %1916 = vmatmul.mubr.f32.gmra.mrb[0].mxu0 %v1721
      %v1917 = vpop.f32.mrb[0].mxu0
      %v1918 = vadd.f32 0.0, %v1917
      %v1919 = vpop.f32.mrb[0].mxu0
      %1920 = vmatprep.mubr.f32.mxu0 0.0
      %1921 = vmatmul.mubr.f32.gmra.mrb[0].mxu0 %v1724
      %v1922 = vpop.f32.mrb[0].mxu0
      %v1923 = vadd.f32 0.0, %v1922
      %v1924 = vpop.f32.mrb[0].mxu0
      %1925 = vmatprep.mubr.f32.mxu0 0.0
      %1926 = vmatmul.mubr.f32.gmra.mrb[0].mxu0 %v1727
      %v1927 = vpop.f32.mrb[0].mxu0
      %v1928 = vadd.f32 0.0, %v1927
      %v1929 = vpop.f32.mrb[0].mxu0
      %1930 = vmatprep.mubr.f32.mxu0 0.0
      %1931 = vmatmul.mubr.f32.gmra.mrb[0].mxu0 %v1730
      %v1932 = vpop.f32.mrb[0].mxu0
      %v1933 = vadd.f32 0.0, %v1932
      %v1934 = vpop.f32.mrb[0].mxu0
      %1935 = vmatprep.mubr.f32.mxu0 0.0
      %1936 = vmatmul.mubr.f32.gmra.mrb[0].mxu0 %v1733
      %v1937 = vpop.f32.mrb[0].mxu0
      %v1938 = vadd.f32 0.0, %v1937
      %v1939 = vpop.f32.mrb[0].mxu0
      %1940 = vmatprep.mubr.f32.mxu0 0.0
      %1941 = vmatmul.mubr.f32.gmra.mrb[0].mxu0 %v1736
      %v1942 = vpop.f32.mrb[0].mxu0
      %v1943 = vadd.f32 0.0, %v1942
      %v1944 = vpop.f32.mrb[0].mxu0
      %1945 = vmatprep.mubr.f32.mxu0 0.0
      %1946 = vmatmul.mubr.f32.gmra.mrb[0].mxu0 %v1739
      %v1947 = vpop.f32.mrb[0].mxu0
      %v1948 = vadd.f32 0.0, %v1947
      %v1949 = vpop.f32.mrb[0].mxu0
      %1950 = vmatprep.mubr.f32.mxu0 0.0
      %1951 = vmatmul.mubr.f32.gmra.mrb[0].mxu0 %v1742
      %v1952 = vpop.f32.mrb[0].mxu0
      %v1953 = vadd.f32 0.0, %v1952
      %v1954 = vpop.f32.mrb[0].mxu0
      %1955 = vmatprep.mubr.f32.mxu0 0.0
      %1956 = vmatmul.mubr.f32.gmra.mrb[0].mxu0 %v1745
      %v1957 = vpop.f32.mrb[0].mxu0
      %v1958 = vadd.f32 0.0, %v1957
      %v1959 = vpop.f32.mrb[0].mxu0
      %1960 = vmatprep.mubr.f32.mxu0 0.0
      %1961 = vmatmul.mubr.f32.gmra.mrb[0].mxu0 %v1748
      %v1962 = vpop.f32.mrb[0].mxu0
      %v1963 = vadd.f32 0.0, %v1962
      %v1964 = vpop.f32.mrb[0].mxu0
      %1965 = vmatprep.mubr.f32.mxu0 0.0
      %1966 = vmatmul.mubr.f32.gmra.mrb[0].mxu0 %v1751
      %v1967 = vpop.f32.mrb[0].mxu0
      %v1968 = vadd.f32 0.0, %v1967
      %v1969 = vpop.f32.mrb[0].mxu0
      %1970 = vmatprep.mubr.f32.mxu0 0.0
      %1971 = vmatmul.mubr.f32.gmra.mrb[0].mxu0 %v1754
      %v1972 = vpop.f32.mrb[0].mxu0
      %v1973 = vadd.f32 0.0, %v1972
      %v1974 = vpop.f32.mrb[0].mxu0
      %1975 = vmatprep.mubr.f32.mxu0 0.0
      %1976 = vmatmul.mubr.f32.gmra.mrb[0].mxu0 %v1757
      %v1977 = vpop.f32.mrb[0].mxu0
      %v1978 = vadd.f32 0.0, %v1977
      %v1979 = vpop.f32.mrb[0].mxu0
      %1980 = vmatprep.mubr.f32.mxu0 0.0
      %1981 = vmatmul.mubr.f32.gmra.mrb[0].mxu0 %v1760
      %v1982 = vpop.f32.mrb[0].mxu0
      %v1983 = vadd.f32 0.0, %v1982
      %v1984 = vpop.f32.mrb[0].mxu0
      %1985 = vmatprep.mubr.f32.mxu0 0.0
      %1986 = vmatmul.mubr.f32.gmra.mrb[0].mxu0 %v1763
      %v1987 = vpop.f32.mrb[0].mxu0
      %v1988 = vadd.f32 0.0, %v1987
      %v1989 = vpop.f32.mrb[0].mxu0
      %1990 = vmatprep.mubr.f32.mxu0 0.0
      %1991 = vmatmul.mubr.f32.gmra.mrb[0].mxu0 %v1766
      %v1992 = vpop.f32.mrb[0].mxu0
      %v1993 = vadd.f32 0.0, %v1992
      %v1994 = vpop.f32.mrb[0].mxu0
      %1995 = vdwg.mxu0
      %v1996 = vadd.f32 %v1605, %v1838
      %v1997 = vadd.f32 %v1606, %v1843
      %v1998 = vadd.f32 %v1607, %v1848
      %v1999 = vadd.f32 %v1608, %v1853
      %v2000 = vadd.f32 %v1609, %v1858
      %v2001 = vadd.f32 %v1610, %v1863
      %v2002 = vadd.f32 %v1611, %v1868
      %v2003 = vadd.f32 %v1612, %v1873
      %v2004 = vadd.f32 %v1613, %v1878
      %v2005 = vadd.f32 %v1614, %v1883
      %v2006 = vadd.f32 %v1615, %v1888
      %v2007 = vadd.f32 %v1616, %v1893
      %v2008 = vadd.f32 %v1617, %v1898
      %v2009 = vadd.f32 %v1618, %v1903
      %v2010 = vadd.f32 %v1619, %v1908
      %v2011 = vadd.f32 %v1620, %v1913
      %v2012 = vadd.f32 %v1621, %v1918
      %v2013 = vadd.f32 %v1622, %v1923
      %v2014 = vadd.f32 %v1623, %v1928
      %v2015 = vadd.f32 %v1624, %v1933
      %v2016 = vadd.f32 %v1625, %v1938
      %v2017 = vadd.f32 %v1626, %v1943
      %v2018 = vadd.f32 %v1627, %v1948
      %v2019 = vadd.f32 %v1628, %v1953
      %v2020 = vadd.f32 %v1629, %v1958
      %v2021 = vadd.f32 %v1630, %v1963
      %v2022 = vadd.f32 %v1631, %v1968
      %v2023 = vadd.f32 %v1632, %v1973
      %v2024 = vadd.f32 %v1633, %v1978
      %v2025 = vadd.f32 %v1634, %v1983
      %v2026 = vadd.f32 %v1635, %v1988
      %v2027 = vadd.f32 %v1636, %v1993
      %s2028 = scalar_lea.vmem [#allocation2], 304
      %v2029 = vld [vmem:[%s2028] sm:$0xff]
      %v2030 = vld [vmem:[%s2028 + $0x8] sm:$0xff]
      %v2031 = vld [vmem:[%s2028 + $0x10] sm:$0xff]
      %v2032 = vld [vmem:[%s2028 + $0x18] sm:$0xff]
      %v2033 = vld [vmem:[%s2028 + $0x20] sm:$0xff]
      %v2034 = vld [vmem:[%s2028 + $0x28] sm:$0xff]
      %v2035 = vld [vmem:[%s2028 + $0x30] sm:$0xff]
      %v2036 = vld [vmem:[%s2028 + $0x38] sm:$0xff]
      %v2037 = vld [vmem:[%s2028 + $0x40] sm:$0xff]
      %v2038 = vld [vmem:[%s2028 + $0x48] sm:$0xff]
      %v2039 = vld [vmem:[%s2028 + $0x50] sm:$0xff]
      %v2040 = vld [vmem:[%s2028 + $0x58] sm:$0xff]
      %v2041 = vld [vmem:[%s2028 + $0x60] sm:$0xff]
      %v2042 = vld [vmem:[%s2028 + $0x68] sm:$0xff]
      %v2043 = vld [vmem:[%s2028 + $0x70] sm:$0xff]
      %v2044 = vld [vmem:[%s2028 + $0x78] sm:$0xff]
      %v2045 = vld [vmem:[%s2028 + $0x80] sm:$0xff]
      %v2046 = vld [vmem:[%s2028 + $0x88] sm:$0xff]
      %v2047 = vld [vmem:[%s2028 + $0x90] sm:$0xff]
      %v2048 = vld [vmem:[%s2028 + $0x98] sm:$0xff]
      %v2049 = vld [vmem:[%s2028 + $0xa0] sm:$0xff]
      %v2050 = vld [vmem:[%s2028 + $0xa8] sm:$0xff]
      %v2051 = vld [vmem:[%s2028 + $0xb0] sm:$0xff]
      %v2052 = vld [vmem:[%s2028 + $0xb8] sm:$0xff]
      %v2053 = vld [vmem:[%s2028 + $0xc0] sm:$0xff]
      %v2054 = vld [vmem:[%s2028 + $0xc8] sm:$0xff]
      %v2055 = vld [vmem:[%s2028 + $0xd0] sm:$0xff]
      %v2056 = vld [vmem:[%s2028 + $0xd8] sm:$0xff]
      %v2057 = vld [vmem:[%s2028 + $0xe0] sm:$0xff]
      %v2058 = vld [vmem:[%s2028 + $0xe8] sm:$0xff]
      %v2059 = vld [vmem:[%s2028 + $0xf0] sm:$0xff]
      %v2060 = vld [vmem:[%s2028 + $0xf8] sm:$0xff]
      %s2061 = scalar_lea.vmem %s218, 16
      %v2062 = vld [vmem:[%s2061] sm:$0xf]
      %v2064 = vsel %vm596, %v2029, 0
      %v2067 = vsel %vm596, %v2030, 0
      %v2070 = vsel %vm596, %v2031, 0
      %v2073 = vsel %vm596, %v2032, 0
      %v2076 = vsel %vm596, %v2033, 0
      %v2079 = vsel %vm596, %v2034, 0
      %v2082 = vsel %vm596, %v2035, 0
      %v2085 = vsel %vm596, %v2036, 0
      %v2088 = vsel %vm596, %v2037, 0
      %v2091 = vsel %vm596, %v2038, 0
      %v2094 = vsel %vm596, %v2039, 0
      %v2097 = vsel %vm596, %v2040, 0
      %v2100 = vsel %vm596, %v2041, 0
      %v2103 = vsel %vm596, %v2042, 0
      %v2106 = vsel %vm596, %v2043, 0
      %v2109 = vsel %vm596, %v2044, 0
      %v2112 = vsel %vm596, %v2045, 0
      %v2115 = vsel %vm596, %v2046, 0
      %v2118 = vsel %vm596, %v2047, 0
      %v2121 = vsel %vm596, %v2048, 0
      %v2124 = vsel %vm596, %v2049, 0
      %v2127 = vsel %vm596, %v2050, 0
      %v2130 = vsel %vm596, %v2051, 0
      %v2133 = vsel %vm596, %v2052, 0
      %v2136 = vsel %vm596, %v2053, 0
      %v2139 = vsel %vm596, %v2054, 0
      %v2142 = vsel %vm596, %v2055, 0
      %v2145 = vsel %vm596, %v2056, 0
      %v2148 = vsel %vm596, %v2057, 0
      %v2151 = vsel %vm596, %v2058, 0
      %v2154 = vsel %vm596, %v2059, 0
      %v2157 = vsel %vm596, %v2060, 0
      %v2160 = vsel %vm693, %v2062, 0
      %2162 = vmatprep.subr.mxu0 0.0
      %2163 = vmatpush1.msra.mxu0 %v2160
      %2164 = vmatprep.subr.mxu0 0.0
      %2165 = vmatpush1.msra.mxu0 0.0
      %2166 = vmatprep.subr.mxu0 0.0
      %2167 = vmatpush1.msra.mxu0 0.0
      %2168 = vmatprep.subr.mxu0 0.0
      %2169 = vmatpush1.msra.mxu0 0.0
      %2170 = vmatprep.subr.mxu0 0.0
      %2171 = vmatpush1.msra.mxu0 0.0
      %2172 = vmatprep.subr.mxu0 0.0
      %2173 = vmatpush1.msra.mxu0 0.0
      %2174 = vmatprep.subr.mxu0 0.0
      %2175 = vmatpush1.msra.mxu0 0.0
      %2176 = vmatprep.subr.mxu0 0.0
      %2177 = vmatpush1.msra.mxu0 0.0
      %2178 = vmatprep.subr.mxu0 0.0
      %2179 = vmatpush1.msra.mxu0 0.0
      %2180 = vmatprep.subr.mxu0 0.0
      %2181 = vmatpush1.msra.mxu0 0.0
      %2182 = vmatprep.subr.mxu0 0.0
      %2183 = vmatpush1.msra.mxu0 0.0
      %2184 = vmatprep.subr.mxu0 0.0
      %2185 = vmatpush1.msra.mxu0 0.0
      %2186 = vmatprep.subr.mxu0 0.0
      %2187 = vmatpush1.msra.mxu0 0.0
      %2188 = vmatprep.subr.mxu0 0.0
      %2189 = vmatpush1.msra.mxu0 0.0
      %2190 = vmatprep.subr.mxu0 0.0
      %2191 = vmatpush1.msra.mxu0 0.0
      %2192 = vmatprep.subr.mxu0 0.0
      %2193 = vmatpush1.msra.mxu0 0.0
      %2194 = vmatprep.subr.mxu0 0.0
      %2195 = vmatpush1.msra.mxu0 0.0
      %2196 = vmatprep.subr.mxu0 0.0
      %2197 = vmatpush1.msra.mxu0 0.0
      %2198 = vmatprep.subr.mxu0 0.0
      %2199 = vmatpush1.msra.mxu0 0.0
      %2200 = vmatprep.subr.mxu0 0.0
      %2201 = vmatpush1.msra.mxu0 0.0
      %2202 = vmatprep.subr.mxu0 0.0
      %2203 = vmatpush1.msra.mxu0 0.0
      %2204 = vmatprep.subr.mxu0 0.0
      %2205 = vmatpush1.msra.mxu0 0.0
      %2206 = vmatprep.subr.mxu0 0.0
      %2207 = vmatpush1.msra.mxu0 0.0
      %2208 = vmatprep.subr.mxu0 0.0
      %2209 = vmatpush1.msra.mxu0 0.0
      %2210 = vmatprep.subr.mxu0 0.0
      %2211 = vmatpush1.msra.mxu0 0.0
      %2212 = vmatprep.subr.mxu0 0.0
      %2213 = vmatpush1.msra.mxu0 0.0
      %2214 = vmatprep.subr.mxu0 0.0
      %2215 = vmatpush1.msra.mxu0 0.0
      %2216 = vmatprep.subr.mxu0 0.0
      %2217 = vmatpush1.msra.mxu0 0.0
      %2218 = vmatprep.subr.mxu0 0.0
      %2219 = vmatpush1.msra.mxu0 0.0
      %2220 = vmatprep.subr.mxu0 0.0
      %2221 = vmatpush1.msra.mxu0 0.0
      %2222 = vmatprep.subr.mxu0 0.0
      %2223 = vmatpush1.msra.mxu0 0.0
      %2224 = vmatprep.subr.mxu0 0.0
      %2225 = vmatpush1.msra.mxu0 0.0
      %2226 = vmatprep.mubr.f32.mxu0 0.0
      %2227 = vmatmul.mubr.f32.gmra.mrb[0].mxu0 %v2064
      %v2228 = vpop.f32.mrb[0].mxu0
      %v2229 = vadd.f32 0.0, %v2228
      %v2230 = vpop.f32.mrb[0].mxu0
      %2231 = vmatprep.mubr.f32.mxu0 0.0
      %2232 = vmatmul.mubr.f32.gmra.mrb[0].mxu0 %v2067
      %v2233 = vpop.f32.mrb[0].mxu0
      %v2234 = vadd.f32 0.0, %v2233
      %v2235 = vpop.f32.mrb[0].mxu0
      %2236 = vmatprep.mubr.f32.mxu0 0.0
      %2237 = vmatmul.mubr.f32.gmra.mrb[0].mxu0 %v2070
      %v2238 = vpop.f32.mrb[0].mxu0
      %v2239 = vadd.f32 0.0, %v2238
      %v2240 = vpop.f32.mrb[0].mxu0
      %2241 = vmatprep.mubr.f32.mxu0 0.0
      %2242 = vmatmul.mubr.f32.gmra.mrb[0].mxu0 %v2073
      %v2243 = vpop.f32.mrb[0].mxu0
      %v2244 = vadd.f32 0.0, %v2243
      %v2245 = vpop.f32.mrb[0].mxu0
      %2246 = vmatprep.mubr.f32.mxu0 0.0
      %2247 = vmatmul.mubr.f32.gmra.mrb[0].mxu0 %v2076
      %v2248 = vpop.f32.mrb[0].mxu0
      %v2249 = vadd.f32 0.0, %v2248
      %v2250 = vpop.f32.mrb[0].mxu0
      %2251 = vmatprep.mubr.f32.mxu0 0.0
      %2252 = vmatmul.mubr.f32.gmra.mrb[0].mxu0 %v2079
      %v2253 = vpop.f32.mrb[0].mxu0
      %v2254 = vadd.f32 0.0, %v2253
      %v2255 = vpop.f32.mrb[0].mxu0
      %2256 = vmatprep.mubr.f32.mxu0 0.0
      %2257 = vmatmul.mubr.f32.gmra.mrb[0].mxu0 %v2082
      %v2258 = vpop.f32.mrb[0].mxu0
      %v2259 = vadd.f32 0.0, %v2258
      %v2260 = vpop.f32.mrb[0].mxu0
      %2261 = vmatprep.mubr.f32.mxu0 0.0
      %2262 = vmatmul.mubr.f32.gmra.mrb[0].mxu0 %v2085
      %v2263 = vpop.f32.mrb[0].mxu0
      %v2264 = vadd.f32 0.0, %v2263
      %v2265 = vpop.f32.mrb[0].mxu0
      %2266 = vmatprep.mubr.f32.mxu0 0.0
      %2267 = vmatmul.mubr.f32.gmra.mrb[0].mxu0 %v2088
      %v2268 = vpop.f32.mrb[0].mxu0
      %v2269 = vadd.f32 0.0, %v2268
      %v2270 = vpop.f32.mrb[0].mxu0
      %2271 = vmatprep.mubr.f32.mxu0 0.0
      %2272 = vmatmul.mubr.f32.gmra.mrb[0].mxu0 %v2091
      %v2273 = vpop.f32.mrb[0].mxu0
      %v2274 = vadd.f32 0.0, %v2273
      %v2275 = vpop.f32.mrb[0].mxu0
      %2276 = vmatprep.mubr.f32.mxu0 0.0
      %2277 = vmatmul.mubr.f32.gmra.mrb[0].mxu0 %v2094
      %v2278 = vpop.f32.mrb[0].mxu0
      %v2279 = vadd.f32 0.0, %v2278
      %v2280 = vpop.f32.mrb[0].mxu0
      %2281 = vmatprep.mubr.f32.mxu0 0.0
      %2282 = vmatmul.mubr.f32.gmra.mrb[0].mxu0 %v2097
      %v2283 = vpop.f32.mrb[0].mxu0
      %v2284 = vadd.f32 0.0, %v2283
      %v2285 = vpop.f32.mrb[0].mxu0
      %2286 = vmatprep.mubr.f32.mxu0 0.0
      %2287 = vmatmul.mubr.f32.gmra.mrb[0].mxu0 %v2100
      %v2288 = vpop.f32.mrb[0].mxu0
      %v2289 = vadd.f32 0.0, %v2288
      %v2290 = vpop.f32.mrb[0].mxu0
      %2291 = vmatprep.mubr.f32.mxu0 0.0
      %2292 = vmatmul.mubr.f32.gmra.mrb[0].mxu0 %v2103
      %v2293 = vpop.f32.mrb[0].mxu0
      %v2294 = vadd.f32 0.0, %v2293
      %v2295 = vpop.f32.mrb[0].mxu0
      %2296 = vmatprep.mubr.f32.mxu0 0.0
      %2297 = vmatmul.mubr.f32.gmra.mrb[0].mxu0 %v2106
      %v2298 = vpop.f32.mrb[0].mxu0
      %v2299 = vadd.f32 0.0, %v2298
      %v2300 = vpop.f32.mrb[0].mxu0
      %2301 = vmatprep.mubr.f32.mxu0 0.0
      %2302 = vmatmul.mubr.f32.gmra.mrb[0].mxu0 %v2109
      %v2303 = vpop.f32.mrb[0].mxu0
      %v2304 = vadd.f32 0.0, %v2303
      %v2305 = vpop.f32.mrb[0].mxu0
      %2306 = vmatprep.mubr.f32.mxu0 0.0
      %2307 = vmatmul.mubr.f32.gmra.mrb[0].mxu0 %v2112
      %v2308 = vpop.f32.mrb[0].mxu0
      %v2309 = vadd.f32 0.0, %v2308
      %v2310 = vpop.f32.mrb[0].mxu0
      %2311 = vmatprep.mubr.f32.mxu0 0.0
      %2312 = vmatmul.mubr.f32.gmra.mrb[0].mxu0 %v2115
      %v2313 = vpop.f32.mrb[0].mxu0
      %v2314 = vadd.f32 0.0, %v2313
      %v2315 = vpop.f32.mrb[0].mxu0
      %2316 = vmatprep.mubr.f32.mxu0 0.0
      %2317 = vmatmul.mubr.f32.gmra.mrb[0].mxu0 %v2118
      %v2318 = vpop.f32.mrb[0].mxu0
      %v2319 = vadd.f32 0.0, %v2318
      %v2320 = vpop.f32.mrb[0].mxu0
      %2321 = vmatprep.mubr.f32.mxu0 0.0
      %2322 = vmatmul.mubr.f32.gmra.mrb[0].mxu0 %v2121
      %v2323 = vpop.f32.mrb[0].mxu0
      %v2324 = vadd.f32 0.0, %v2323
      %v2325 = vpop.f32.mrb[0].mxu0
      %2326 = vmatprep.mubr.f32.mxu0 0.0
      %2327 = vmatmul.mubr.f32.gmra.mrb[0].mxu0 %v2124
      %v2328 = vpop.f32.mrb[0].mxu0
      %v2329 = vadd.f32 0.0, %v2328
      %v2330 = vpop.f32.mrb[0].mxu0
      %2331 = vmatprep.mubr.f32.mxu0 0.0
      %2332 = vmatmul.mubr.f32.gmra.mrb[0].mxu0 %v2127
      %v2333 = vpop.f32.mrb[0].mxu0
      %v2334 = vadd.f32 0.0, %v2333
      %v2335 = vpop.f32.mrb[0].mxu0
      %2336 = vmatprep.mubr.f32.mxu0 0.0
      %2337 = vmatmul.mubr.f32.gmra.mrb[0].mxu0 %v2130
      %v2338 = vpop.f32.mrb[0].mxu0
      %v2339 = vadd.f32 0.0, %v2338
      %v2340 = vpop.f32.mrb[0].mxu0
      %2341 = vmatprep.mubr.f32.mxu0 0.0
      %2342 = vmatmul.mubr.f32.gmra.mrb[0].mxu0 %v2133
      %v2343 = vpop.f32.mrb[0].mxu0
      %v2344 = vadd.f32 0.0, %v2343
      %v2345 = vpop.f32.mrb[0].mxu0
      %2346 = vmatprep.mubr.f32.mxu0 0.0
      %2347 = vmatmul.mubr.f32.gmra.mrb[0].mxu0 %v2136
      %v2348 = vpop.f32.mrb[0].mxu0
      %v2349 = vadd.f32 0.0, %v2348
      %v2350 = vpop.f32.mrb[0].mxu0
      %2351 = vmatprep.mubr.f32.mxu0 0.0
      %2352 = vmatmul.mubr.f32.gmra.mrb[0].mxu0 %v2139
      %v2353 = vpop.f32.mrb[0].mxu0
      %v2354 = vadd.f32 0.0, %v2353
      %v2355 = vpop.f32.mrb[0].mxu0
      %2356 = vmatprep.mubr.f32.mxu0 0.0
      %2357 = vmatmul.mubr.f32.gmra.mrb[0].mxu0 %v2142
      %v2358 = vpop.f32.mrb[0].mxu0
      %v2359 = vadd.f32 0.0, %v2358
      %v2360 = vpop.f32.mrb[0].mxu0
      %2361 = vmatprep.mubr.f32.mxu0 0.0
      %2362 = vmatmul.mubr.f32.gmra.mrb[0].mxu0 %v2145
      %v2363 = vpop.f32.mrb[0].mxu0
      %v2364 = vadd.f32 0.0, %v2363
      %v2365 = vpop.f32.mrb[0].mxu0
      %2366 = vmatprep.mubr.f32.mxu0 0.0
      %2367 = vmatmul.mubr.f32.gmra.mrb[0].mxu0 %v2148
      %v2368 = vpop.f32.mrb[0].mxu0
      %v2369 = vadd.f32 0.0, %v2368
      %v2370 = vpop.f32.mrb[0].mxu0
      %2371 = vmatprep.mubr.f32.mxu0 0.0
      %2372 = vmatmul.mubr.f32.gmra.mrb[0].mxu0 %v2151
      %v2373 = vpop.f32.mrb[0].mxu0
      %v2374 = vadd.f32 0.0, %v2373
      %v2375 = vpop.f32.mrb[0].mxu0
      %2376 = vmatprep.mubr.f32.mxu0 0.0
      %2377 = vmatmul.mubr.f32.gmra.mrb[0].mxu0 %v2154
      %v2378 = vpop.f32.mrb[0].mxu0
      %v2379 = vadd.f32 0.0, %v2378
      %v2380 = vpop.f32.mrb[0].mxu0
      %2381 = vmatprep.mubr.f32.mxu0 0.0
      %2382 = vmatmul.mubr.f32.gmra.mrb[0].mxu0 %v2157
      %v2383 = vpop.f32.mrb[0].mxu0
      %v2384 = vadd.f32 0.0, %v2383
      %v2385 = vpop.f32.mrb[0].mxu0
      %2386 = vdwg.mxu0
      %v2387 = vadd.f32 %v1996, %v2229
      %v2388 = vadd.f32 %v1997, %v2234
      %v2389 = vadd.f32 %v1998, %v2239
      %v2390 = vadd.f32 %v1999, %v2244
      %v2391 = vadd.f32 %v2000, %v2249
      %v2392 = vadd.f32 %v2001, %v2254
      %v2393 = vadd.f32 %v2002, %v2259
      %v2394 = vadd.f32 %v2003, %v2264
      %v2395 = vadd.f32 %v2004, %v2269
      %v2396 = vadd.f32 %v2005, %v2274
      %v2397 = vadd.f32 %v2006, %v2279
      %v2398 = vadd.f32 %v2007, %v2284
      %v2399 = vadd.f32 %v2008, %v2289
      %v2400 = vadd.f32 %v2009, %v2294
      %v2401 = vadd.f32 %v2010, %v2299
      %v2402 = vadd.f32 %v2011, %v2304
      %v2403 = vadd.f32 %v2012, %v2309
      %v2404 = vadd.f32 %v2013, %v2314
      %v2405 = vadd.f32 %v2014, %v2319
      %v2406 = vadd.f32 %v2015, %v2324
      %v2407 = vadd.f32 %v2016, %v2329
      %v2408 = vadd.f32 %v2017, %v2334
      %v2409 = vadd.f32 %v2018, %v2339
      %v2410 = vadd.f32 %v2019, %v2344
      %v2411 = vadd.f32 %v2020, %v2349
      %v2412 = vadd.f32 %v2021, %v2354
      %v2413 = vadd.f32 %v2022, %v2359
      %v2414 = vadd.f32 %v2023, %v2364
      %v2415 = vadd.f32 %v2024, %v2369
      %v2416 = vadd.f32 %v2025, %v2374
      %v2417 = vadd.f32 %v2026, %v2379
      %v2418 = vadd.f32 %v2027, %v2384
      %s2419 = scalar_lea.vmem [#allocation2], 592
      %v2420 = vld [vmem:[%s2419] sm:$0xff]
      %v2421 = vld [vmem:[%s2419 + $0x8] sm:$0xff]
      %v2422 = vld [vmem:[%s2419 + $0x10] sm:$0xff]
      %v2423 = vld [vmem:[%s2419 + $0x18] sm:$0xff]
      %v2424 = vld [vmem:[%s2419 + $0x20] sm:$0xff]
      %v2425 = vld [vmem:[%s2419 + $0x28] sm:$0xff]
      %v2426 = vld [vmem:[%s2419 + $0x30] sm:$0xff]
      %v2427 = vld [vmem:[%s2419 + $0x38] sm:$0xff]
      %v2428 = vld [vmem:[%s2419 + $0x40] sm:$0xff]
      %v2429 = vld [vmem:[%s2419 + $0x48] sm:$0xff]
      %v2430 = vld [vmem:[%s2419 + $0x50] sm:$0xff]
      %v2431 = vld [vmem:[%s2419 + $0x58] sm:$0xff]
      %v2432 = vld [vmem:[%s2419 + $0x60] sm:$0xff]
      %v2433 = vld [vmem:[%s2419 + $0x68] sm:$0xff]
      %v2434 = vld [vmem:[%s2419 + $0x70] sm:$0xff]
      %v2435 = vld [vmem:[%s2419 + $0x78] sm:$0xff]
      %v2436 = vld [vmem:[%s2419 + $0x80] sm:$0xff]
      %v2437 = vld [vmem:[%s2419 + $0x88] sm:$0xff]
      %v2438 = vld [vmem:[%s2419 + $0x90] sm:$0xff]
      %v2439 = vld [vmem:[%s2419 + $0x98] sm:$0xff]
      %v2440 = vld [vmem:[%s2419 + $0xa0] sm:$0xff]
      %v2441 = vld [vmem:[%s2419 + $0xa8] sm:$0xff]
      %v2442 = vld [vmem:[%s2419 + $0xb0] sm:$0xff]
      %v2443 = vld [vmem:[%s2419 + $0xb8] sm:$0xff]
      %v2444 = vld [vmem:[%s2419 + $0xc0] sm:$0xff]
      %v2445 = vld [vmem:[%s2419 + $0xc8] sm:$0xff]
      %v2446 = vld [vmem:[%s2419 + $0xd0] sm:$0xff]
      %v2447 = vld [vmem:[%s2419 + $0xd8] sm:$0xff]
      %v2448 = vld [vmem:[%s2419 + $0xe0] sm:$0xff]
      %v2449 = vld [vmem:[%s2419 + $0xe8] sm:$0xff]
      %v2450 = vld [vmem:[%s2419 + $0xf0] sm:$0xff]
      %v2451 = vld [vmem:[%s2419 + $0xf8] sm:$0xff]
      %s2452 = scalar_lea.vmem %s218, 20
      %v2453 = vld [vmem:[%s2452] sm:$0xf]
      %v2455 = vsel %vm596, %v2420, 0
      %v2458 = vsel %vm596, %v2421, 0
      %v2461 = vsel %vm596, %v2422, 0
      %v2464 = vsel %vm596, %v2423, 0
      %v2467 = vsel %vm596, %v2424, 0
      %v2470 = vsel %vm596, %v2425, 0
      %v2473 = vsel %vm596, %v2426, 0
      %v2476 = vsel %vm596, %v2427, 0
      %v2479 = vsel %vm596, %v2428, 0
      %v2482 = vsel %vm596, %v2429, 0
      %v2485 = vsel %vm596, %v2430, 0
      %v2488 = vsel %vm596, %v2431, 0
      %v2491 = vsel %vm596, %v2432, 0
      %v2494 = vsel %vm596, %v2433, 0
      %v2497 = vsel %vm596, %v2434, 0
      %v2500 = vsel %vm596, %v2435, 0
      %v2503 = vsel %vm596, %v2436, 0
      %v2506 = vsel %vm596, %v2437, 0
      %v2509 = vsel %vm596, %v2438, 0
      %v2512 = vsel %vm596, %v2439, 0
      %v2515 = vsel %vm596, %v2440, 0
      %v2518 = vsel %vm596, %v2441, 0
      %v2521 = vsel %vm596, %v2442, 0
      %v2524 = vsel %vm596, %v2443, 0
      %v2527 = vsel %vm596, %v2444, 0
      %v2530 = vsel %vm596, %v2445, 0
      %v2533 = vsel %vm596, %v2446, 0
      %v2536 = vsel %vm596, %v2447, 0
      %v2539 = vsel %vm596, %v2448, 0
      %v2542 = vsel %vm596, %v2449, 0
      %v2545 = vsel %vm596, %v2450, 0
      %v2548 = vsel %vm596, %v2451, 0
      %v2551 = vsel %vm693, %v2453, 0
      %2553 = vmatprep.subr.mxu0 0.0
      %2554 = vmatpush1.msra.mxu0 %v2551
      %2555 = vmatprep.subr.mxu0 0.0
      %2556 = vmatpush1.msra.mxu0 0.0
      %2557 = vmatprep.subr.mxu0 0.0
      %2558 = vmatpush1.msra.mxu0 0.0
      %2559 = vmatprep.subr.mxu0 0.0
      %2560 = vmatpush1.msra.mxu0 0.0
      %2561 = vmatprep.subr.mxu0 0.0
      %2562 = vmatpush1.msra.mxu0 0.0
      %2563 = vmatprep.subr.mxu0 0.0
      %2564 = vmatpush1.msra.mxu0 0.0
      %2565 = vmatprep.subr.mxu0 0.0
      %2566 = vmatpush1.msra.mxu0 0.0
      %2567 = vmatprep.subr.mxu0 0.0
      %2568 = vmatpush1.msra.mxu0 0.0
      %2569 = vmatprep.subr.mxu0 0.0
      %2570 = vmatpush1.msra.mxu0 0.0
      %2571 = vmatprep.subr.mxu0 0.0
      %2572 = vmatpush1.msra.mxu0 0.0
      %2573 = vmatprep.subr.mxu0 0.0
      %2574 = vmatpush1.msra.mxu0 0.0
      %2575 = vmatprep.subr.mxu0 0.0
      %2576 = vmatpush1.msra.mxu0 0.0
      %2577 = vmatprep.subr.mxu0 0.0
      %2578 = vmatpush1.msra.mxu0 0.0
      %2579 = vmatprep.subr.mxu0 0.0
      %2580 = vmatpush1.msra.mxu0 0.0
      %2581 = vmatprep.subr.mxu0 0.0
      %2582 = vmatpush1.msra.mxu0 0.0
      %2583 = vmatprep.subr.mxu0 0.0
      %2584 = vmatpush1.msra.mxu0 0.0
      %2585 = vmatprep.subr.mxu0 0.0
      %2586 = vmatpush1.msra.mxu0 0.0
      %2587 = vmatprep.subr.mxu0 0.0
      %2588 = vmatpush1.msra.mxu0 0.0
      %2589 = vmatprep.subr.mxu0 0.0
      %2590 = vmatpush1.msra.mxu0 0.0
      %2591 = vmatprep.subr.mxu0 0.0
      %2592 = vmatpush1.msra.mxu0 0.0
      %2593 = vmatprep.subr.mxu0 0.0
      %2594 = vmatpush1.msra.mxu0 0.0
      %2595 = vmatprep.subr.mxu0 0.0
      %2596 = vmatpush1.msra.mxu0 0.0
      %2597 = vmatprep.subr.mxu0 0.0
      %2598 = vmatpush1.msra.mxu0 0.0
      %2599 = vmatprep.subr.mxu0 0.0
      %2600 = vmatpush1.msra.mxu0 0.0
      %2601 = vmatprep.subr.mxu0 0.0
      %2602 = vmatpush1.msra.mxu0 0.0
      %2603 = vmatprep.subr.mxu0 0.0
      %2604 = vmatpush1.msra.mxu0 0.0
      %2605 = vmatprep.subr.mxu0 0.0
      %2606 = vmatpush1.msra.mxu0 0.0
      %2607 = vmatprep.subr.mxu0 0.0
      %2608 = vmatpush1.msra.mxu0 0.0
      %2609 = vmatprep.subr.mxu0 0.0
      %2610 = vmatpush1.msra.mxu0 0.0
      %2611 = vmatprep.subr.mxu0 0.0
      %2612 = vmatpush1.msra.mxu0 0.0
      %2613 = vmatprep.subr.mxu0 0.0
      %2614 = vmatpush1.msra.mxu0 0.0
      %2615 = vmatprep.subr.mxu0 0.0
      %2616 = vmatpush1.msra.mxu0 0.0
      %2617 = vmatprep.mubr.f32.mxu0 0.0
      %2618 = vmatmul.mubr.f32.gmra.mrb[0].mxu0 %v2455
      %v2619 = vpop.f32.mrb[0].mxu0
      %v2620 = vadd.f32 0.0, %v2619
      %v2621 = vpop.f32.mrb[0].mxu0
      %2622 = vmatprep.mubr.f32.mxu0 0.0
      %2623 = vmatmul.mubr.f32.gmra.mrb[0].mxu0 %v2458
      %v2624 = vpop.f32.mrb[0].mxu0
      %v2625 = vadd.f32 0.0, %v2624
      %v2626 = vpop.f32.mrb[0].mxu0
      %2627 = vmatprep.mubr.f32.mxu0 0.0
      %2628 = vmatmul.mubr.f32.gmra.mrb[0].mxu0 %v2461
      %v2629 = vpop.f32.mrb[0].mxu0
      %v2630 = vadd.f32 0.0, %v2629
      %v2631 = vpop.f32.mrb[0].mxu0
      %2632 = vmatprep.mubr.f32.mxu0 0.0
      %2633 = vmatmul.mubr.f32.gmra.mrb[0].mxu0 %v2464
      %v2634 = vpop.f32.mrb[0].mxu0
      %v2635 = vadd.f32 0.0, %v2634
      %v2636 = vpop.f32.mrb[0].mxu0
      %2637 = vmatprep.mubr.f32.mxu0 0.0
      %2638 = vmatmul.mubr.f32.gmra.mrb[0].mxu0 %v2467
      %v2639 = vpop.f32.mrb[0].mxu0
      %v2640 = vadd.f32 0.0, %v2639
      %v2641 = vpop.f32.mrb[0].mxu0
      %2642 = vmatprep.mubr.f32.mxu0 0.0
      %2643 = vmatmul.mubr.f32.gmra.mrb[0].mxu0 %v2470
      %v2644 = vpop.f32.mrb[0].mxu0
      %v2645 = vadd.f32 0.0, %v2644
      %v2646 = vpop.f32.mrb[0].mxu0
      %2647 = vmatprep.mubr.f32.mxu0 0.0
      %2648 = vmatmul.mubr.f32.gmra.mrb[0].mxu0 %v2473
      %v2649 = vpop.f32.mrb[0].mxu0
      %v2650 = vadd.f32 0.0, %v2649
      %v2651 = vpop.f32.mrb[0].mxu0
      %2652 = vmatprep.mubr.f32.mxu0 0.0
      %2653 = vmatmul.mubr.f32.gmra.mrb[0].mxu0 %v2476
      %v2654 = vpop.f32.mrb[0].mxu0
      %v2655 = vadd.f32 0.0, %v2654
      %v2656 = vpop.f32.mrb[0].mxu0
      %2657 = vmatprep.mubr.f32.mxu0 0.0
      %2658 = vmatmul.mubr.f32.gmra.mrb[0].mxu0 %v2479
      %v2659 = vpop.f32.mrb[0].mxu0
      %v2660 = vadd.f32 0.0, %v2659
      %v2661 = vpop.f32.mrb[0].mxu0
      %2662 = vmatprep.mubr.f32.mxu0 0.0
      %2663 = vmatmul.mubr.f32.gmra.mrb[0].mxu0 %v2482
      %v2664 = vpop.f32.mrb[0].mxu0
      %v2665 = vadd.f32 0.0, %v2664
      %v2666 = vpop.f32.mrb[0].mxu0
      %2667 = vmatprep.mubr.f32.mxu0 0.0
      %2668 = vmatmul.mubr.f32.gmra.mrb[0].mxu0 %v2485
      %v2669 = vpop.f32.mrb[0].mxu0
      %v2670 = vadd.f32 0.0, %v2669
      %v2671 = vpop.f32.mrb[0].mxu0
      %2672 = vmatprep.mubr.f32.mxu0 0.0
      %2673 = vmatmul.mubr.f32.gmra.mrb[0].mxu0 %v2488
      %v2674 = vpop.f32.mrb[0].mxu0
      %v2675 = vadd.f32 0.0, %v2674
      %v2676 = vpop.f32.mrb[0].mxu0
      %2677 = vmatprep.mubr.f32.mxu0 0.0
      %2678 = vmatmul.mubr.f32.gmra.mrb[0].mxu0 %v2491
      %v2679 = vpop.f32.mrb[0].mxu0
      %v2680 = vadd.f32 0.0, %v2679
      %v2681 = vpop.f32.mrb[0].mxu0
      %2682 = vmatprep.mubr.f32.mxu0 0.0
      %2683 = vmatmul.mubr.f32.gmra.mrb[0].mxu0 %v2494
      %v2684 = vpop.f32.mrb[0].mxu0
      %v2685 = vadd.f32 0.0, %v2684
      %v2686 = vpop.f32.mrb[0].mxu0
      %2687 = vmatprep.mubr.f32.mxu0 0.0
      %2688 = vmatmul.mubr.f32.gmra.mrb[0].mxu0 %v2497
      %v2689 = vpop.f32.mrb[0].mxu0
      %v2690 = vadd.f32 0.0, %v2689
      %v2691 = vpop.f32.mrb[0].mxu0
      %2692 = vmatprep.mubr.f32.mxu0 0.0
      %2693 = vmatmul.mubr.f32.gmra.mrb[0].mxu0 %v2500
      %v2694 = vpop.f32.mrb[0].mxu0
      %v2695 = vadd.f32 0.0, %v2694
      %v2696 = vpop.f32.mrb[0].mxu0
      %2697 = vmatprep.mubr.f32.mxu0 0.0
      %2698 = vmatmul.mubr.f32.gmra.mrb[0].mxu0 %v2503
      %v2699 = vpop.f32.mrb[0].mxu0
      %v2700 = vadd.f32 0.0, %v2699
      %v2701 = vpop.f32.mrb[0].mxu0
      %2702 = vmatprep.mubr.f32.mxu0 0.0
      %2703 = vmatmul.mubr.f32.gmra.mrb[0].mxu0 %v2506
      %v2704 = vpop.f32.mrb[0].mxu0
      %v2705 = vadd.f32 0.0, %v2704
      %v2706 = vpop.f32.mrb[0].mxu0
      %2707 = vmatprep.mubr.f32.mxu0 0.0
      %2708 = vmatmul.mubr.f32.gmra.mrb[0].mxu0 %v2509
      %v2709 = vpop.f32.mrb[0].mxu0
      %v2710 = vadd.f32 0.0, %v2709
      %v2711 = vpop.f32.mrb[0].mxu0
      %2712 = vmatprep.mubr.f32.mxu0 0.0
      %2713 = vmatmul.mubr.f32.gmra.mrb[0].mxu0 %v2512
      %v2714 = vpop.f32.mrb[0].mxu0
      %v2715 = vadd.f32 0.0, %v2714
      %v2716 = vpop.f32.mrb[0].mxu0
      %2717 = vmatprep.mubr.f32.mxu0 0.0
      %2718 = vmatmul.mubr.f32.gmra.mrb[0].mxu0 %v2515
      %v2719 = vpop.f32.mrb[0].mxu0
      %v2720 = vadd.f32 0.0, %v2719
      %v2721 = vpop.f32.mrb[0].mxu0
      %2722 = vmatprep.mubr.f32.mxu0 0.0
      %2723 = vmatmul.mubr.f32.gmra.mrb[0].mxu0 %v2518
      %v2724 = vpop.f32.mrb[0].mxu0
      %v2725 = vadd.f32 0.0, %v2724
      %v2726 = vpop.f32.mrb[0].mxu0
      %2727 = vmatprep.mubr.f32.mxu0 0.0
      %2728 = vmatmul.mubr.f32.gmra.mrb[0].mxu0 %v2521
      %v2729 = vpop.f32.mrb[0].mxu0
      %v2730 = vadd.f32 0.0, %v2729
      %v2731 = vpop.f32.mrb[0].mxu0
      %2732 = vmatprep.mubr.f32.mxu0 0.0
      %2733 = vmatmul.mubr.f32.gmra.mrb[0].mxu0 %v2524
      %v2734 = vpop.f32.mrb[0].mxu0
      %v2735 = vadd.f32 0.0, %v2734
      %v2736 = vpop.f32.mrb[0].mxu0
      %2737 = vmatprep.mubr.f32.mxu0 0.0
      %2738 = vmatmul.mubr.f32.gmra.mrb[0].mxu0 %v2527
      %v2739 = vpop.f32.mrb[0].mxu0
      %v2740 = vadd.f32 0.0, %v2739
      %v2741 = vpop.f32.mrb[0].mxu0
      %2742 = vmatprep.mubr.f32.mxu0 0.0
      %2743 = vmatmul.mubr.f32.gmra.mrb[0].mxu0 %v2530
      %v2744 = vpop.f32.mrb[0].mxu0
      %v2745 = vadd.f32 0.0, %v2744
      %v2746 = vpop.f32.mrb[0].mxu0
      %2747 = vmatprep.mubr.f32.mxu0 0.0
      %2748 = vmatmul.mubr.f32.gmra.mrb[0].mxu0 %v2533
      %v2749 = vpop.f32.mrb[0].mxu0
      %v2750 = vadd.f32 0.0, %v2749
      %v2751 = vpop.f32.mrb[0].mxu0
      %2752 = vmatprep.mubr.f32.mxu0 0.0
      %2753 = vmatmul.mubr.f32.gmra.mrb[0].mxu0 %v2536
      %v2754 = vpop.f32.mrb[0].mxu0
      %v2755 = vadd.f32 0.0, %v2754
      %v2756 = vpop.f32.mrb[0].mxu0
      %2757 = vmatprep.mubr.f32.mxu0 0.0
      %2758 = vmatmul.mubr.f32.gmra.mrb[0].mxu0 %v2539
      %v2759 = vpop.f32.mrb[0].mxu0
      %v2760 = vadd.f32 0.0, %v2759
      %v2761 = vpop.f32.mrb[0].mxu0
      %2762 = vmatprep.mubr.f32.mxu0 0.0
      %2763 = vmatmul.mubr.f32.gmra.mrb[0].mxu0 %v2542
      %v2764 = vpop.f32.mrb[0].mxu0
      %v2765 = vadd.f32 0.0, %v2764
      %v2766 = vpop.f32.mrb[0].mxu0
      %2767 = vmatprep.mubr.f32.mxu0 0.0
      %2768 = vmatmul.mubr.f32.gmra.mrb[0].mxu0 %v2545
      %v2769 = vpop.f32.mrb[0].mxu0
      %v2770 = vadd.f32 0.0, %v2769
      %v2771 = vpop.f32.mrb[0].mxu0
      %2772 = vmatprep.mubr.f32.mxu0 0.0
      %2773 = vmatmul.mubr.f32.gmra.mrb[0].mxu0 %v2548
      %v2774 = vpop.f32.mrb[0].mxu0
      %v2775 = vadd.f32 0.0, %v2774
      %v2776 = vpop.f32.mrb[0].mxu0
      %2777 = vdwg.mxu0
      %v2778 = vadd.f32 %v2387, %v2620
      %v2779 = vadd.f32 %v2388, %v2625
      %v2780 = vadd.f32 %v2389, %v2630
      %v2781 = vadd.f32 %v2390, %v2635
      %v2782 = vadd.f32 %v2391, %v2640
      %v2783 = vadd.f32 %v2392, %v2645
      %v2784 = vadd.f32 %v2393, %v2650
      %v2785 = vadd.f32 %v2394, %v2655
      %v2786 = vadd.f32 %v2395, %v2660
      %v2787 = vadd.f32 %v2396, %v2665
      %v2788 = vadd.f32 %v2397, %v2670
      %v2789 = vadd.f32 %v2398, %v2675
      %v2790 = vadd.f32 %v2399, %v2680
      %v2791 = vadd.f32 %v2400, %v2685
      %v2792 = vadd.f32 %v2401, %v2690
      %v2793 = vadd.f32 %v2402, %v2695
      %v2794 = vadd.f32 %v2403, %v2700
      %v2795 = vadd.f32 %v2404, %v2705
      %v2796 = vadd.f32 %v2405, %v2710
      %v2797 = vadd.f32 %v2406, %v2715
      %v2798 = vadd.f32 %v2407, %v2720
      %v2799 = vadd.f32 %v2408, %v2725
      %v2800 = vadd.f32 %v2409, %v2730
      %v2801 = vadd.f32 %v2410, %v2735
      %v2802 = vadd.f32 %v2411, %v2740
      %v2803 = vadd.f32 %v2412, %v2745
      %v2804 = vadd.f32 %v2413, %v2750
      %v2805 = vadd.f32 %v2414, %v2755
      %v2806 = vadd.f32 %v2415, %v2760
      %v2807 = vadd.f32 %v2416, %v2765
      %v2808 = vadd.f32 %v2417, %v2770
      %v2809 = vadd.f32 %v2418, %v2775
      %s2810 = scalar_lea.vmem [#allocation2], 32
      %v2811 = vld [vmem:[%s2810] sm:$0xff]
      %v2812 = vld [vmem:[%s2810 + $0x8] sm:$0xff]
      %v2813 = vld [vmem:[%s2810 + $0x10] sm:$0xff]
      %v2814 = vld [vmem:[%s2810 + $0x18] sm:$0xff]
      %v2815 = vld [vmem:[%s2810 + $0x20] sm:$0xff]
      %v2816 = vld [vmem:[%s2810 + $0x28] sm:$0xff]
      %v2817 = vld [vmem:[%s2810 + $0x30] sm:$0xff]
      %v2818 = vld [vmem:[%s2810 + $0x38] sm:$0xff]
      %v2819 = vld [vmem:[%s2810 + $0x40] sm:$0xff]
      %v2820 = vld [vmem:[%s2810 + $0x48] sm:$0xff]
      %v2821 = vld [vmem:[%s2810 + $0x50] sm:$0xff]
      %v2822 = vld [vmem:[%s2810 + $0x58] sm:$0xff]
      %v2823 = vld [vmem:[%s2810 + $0x60] sm:$0xff]
      %v2824 = vld [vmem:[%s2810 + $0x68] sm:$0xff]
      %v2825 = vld [vmem:[%s2810 + $0x70] sm:$0xff]
      %v2826 = vld [vmem:[%s2810 + $0x78] sm:$0xff]
      %v2827 = vld [vmem:[%s2810 + $0x80] sm:$0xff]
      %v2828 = vld [vmem:[%s2810 + $0x88] sm:$0xff]
      %v2829 = vld [vmem:[%s2810 + $0x90] sm:$0xff]
      %v2830 = vld [vmem:[%s2810 + $0x98] sm:$0xff]
      %v2831 = vld [vmem:[%s2810 + $0xa0] sm:$0xff]
      %v2832 = vld [vmem:[%s2810 + $0xa8] sm:$0xff]
      %v2833 = vld [vmem:[%s2810 + $0xb0] sm:$0xff]
      %v2834 = vld [vmem:[%s2810 + $0xb8] sm:$0xff]
      %v2835 = vld [vmem:[%s2810 + $0xc0] sm:$0xff]
      %v2836 = vld [vmem:[%s2810 + $0xc8] sm:$0xff]
      %v2837 = vld [vmem:[%s2810 + $0xd0] sm:$0xff]
      %v2838 = vld [vmem:[%s2810 + $0xd8] sm:$0xff]
      %v2839 = vld [vmem:[%s2810 + $0xe0] sm:$0xff]
      %v2840 = vld [vmem:[%s2810 + $0xe8] sm:$0xff]
      %v2841 = vld [vmem:[%s2810 + $0xf0] sm:$0xff]
      %v2842 = vld [vmem:[%s2810 + $0xf8] sm:$0xff]
      %s2843 = scalar_lea.vmem %s218, 24
      %v2844 = vld [vmem:[%s2843] sm:$0xf]
      %v2846 = vsel %vm596, %v2811, 0
      %v2849 = vsel %vm596, %v2812, 0
      %v2852 = vsel %vm596, %v2813, 0
      %v2855 = vsel %vm596, %v2814, 0
      %v2858 = vsel %vm596, %v2815, 0
      %v2861 = vsel %vm596, %v2816, 0
      %v2864 = vsel %vm596, %v2817, 0
      %v2867 = vsel %vm596, %v2818, 0
      %v2870 = vsel %vm596, %v2819, 0
      %v2873 = vsel %vm596, %v2820, 0
      %v2876 = vsel %vm596, %v2821, 0
      %v2879 = vsel %vm596, %v2822, 0
      %v2882 = vsel %vm596, %v2823, 0
      %v2885 = vsel %vm596, %v2824, 0
      %v2888 = vsel %vm596, %v2825, 0
      %v2891 = vsel %vm596, %v2826, 0
      %v2894 = vsel %vm596, %v2827, 0
      %v2897 = vsel %vm596, %v2828, 0
      %v2900 = vsel %vm596, %v2829, 0
      %v2903 = vsel %vm596, %v2830, 0
      %v2906 = vsel %vm596, %v2831, 0
      %v2909 = vsel %vm596, %v2832, 0
      %v2912 = vsel %vm596, %v2833, 0
      %v2915 = vsel %vm596, %v2834, 0
      %v2918 = vsel %vm596, %v2835, 0
      %v2921 = vsel %vm596, %v2836, 0
      %v2924 = vsel %vm596, %v2837, 0
      %v2927 = vsel %vm596, %v2838, 0
      %v2930 = vsel %vm596, %v2839, 0
      %v2933 = vsel %vm596, %v2840, 0
      %v2936 = vsel %vm596, %v2841, 0
      %v2939 = vsel %vm596, %v2842, 0
      %v2942 = vsel %vm693, %v2844, 0
      %2944 = vmatprep.subr.mxu0 0.0
      %2945 = vmatpush1.msra.mxu0 %v2942
      %2946 = vmatprep.subr.mxu0 0.0
      %2947 = vmatpush1.msra.mxu0 0.0
      %2948 = vmatprep.subr.mxu0 0.0
      %2949 = vmatpush1.msra.mxu0 0.0
      %2950 = vmatprep.subr.mxu0 0.0
      %2951 = vmatpush1.msra.mxu0 0.0
      %2952 = vmatprep.subr.mxu0 0.0
      %2953 = vmatpush1.msra.mxu0 0.0
      %2954 = vmatprep.subr.mxu0 0.0
      %2955 = vmatpush1.msra.mxu0 0.0
      %2956 = vmatprep.subr.mxu0 0.0
      %2957 = vmatpush1.msra.mxu0 0.0
      %2958 = vmatprep.subr.mxu0 0.0
      %2959 = vmatpush1.msra.mxu0 0.0
      %2960 = vmatprep.subr.mxu0 0.0
      %2961 = vmatpush1.msra.mxu0 0.0
      %2962 = vmatprep.subr.mxu0 0.0
      %2963 = vmatpush1.msra.mxu0 0.0
      %2964 = vmatprep.subr.mxu0 0.0
      %2965 = vmatpush1.msra.mxu0 0.0
      %2966 = vmatprep.subr.mxu0 0.0
      %2967 = vmatpush1.msra.mxu0 0.0
      %2968 = vmatprep.subr.mxu0 0.0
      %2969 = vmatpush1.msra.mxu0 0.0
      %2970 = vmatprep.subr.mxu0 0.0
      %2971 = vmatpush1.msra.mxu0 0.0
      %2972 = vmatprep.subr.mxu0 0.0
      %2973 = vmatpush1.msra.mxu0 0.0
      %2974 = vmatprep.subr.mxu0 0.0
      %2975 = vmatpush1.msra.mxu0 0.0
      %2976 = vmatprep.subr.mxu0 0.0
      %2977 = vmatpush1.msra.mxu0 0.0
      %2978 = vmatprep.subr.mxu0 0.0
      %2979 = vmatpush1.msra.mxu0 0.0
      %2980 = vmatprep.subr.mxu0 0.0
      %2981 = vmatpush1.msra.mxu0 0.0
      %2982 = vmatprep.subr.mxu0 0.0
      %2983 = vmatpush1.msra.mxu0 0.0
      %2984 = vmatprep.subr.mxu0 0.0
      %2985 = vmatpush1.msra.mxu0 0.0
      %2986 = vmatprep.subr.mxu0 0.0
      %2987 = vmatpush1.msra.mxu0 0.0
      %2988 = vmatprep.subr.mxu0 0.0
      %2989 = vmatpush1.msra.mxu0 0.0
      %2990 = vmatprep.subr.mxu0 0.0
      %2991 = vmatpush1.msra.mxu0 0.0
      %2992 = vmatprep.subr.mxu0 0.0
      %2993 = vmatpush1.msra.mxu0 0.0
      %2994 = vmatprep.subr.mxu0 0.0
      %2995 = vmatpush1.msra.mxu0 0.0
      %2996 = vmatprep.subr.mxu0 0.0
      %2997 = vmatpush1.msra.mxu0 0.0
      %2998 = vmatprep.subr.mxu0 0.0
      %2999 = vmatpush1.msra.mxu0 0.0
      %3000 = vmatprep.subr.mxu0 0.0
      %3001 = vmatpush1.msra.mxu0 0.0
      %3002 = vmatprep.subr.mxu0 0.0
      %3003 = vmatpush1.msra.mxu0 0.0
      %3004 = vmatprep.subr.mxu0 0.0
      %3005 = vmatpush1.msra.mxu0 0.0
      %3006 = vmatprep.subr.mxu0 0.0
      %3007 = vmatpush1.msra.mxu0 0.0
      %3008 = vmatprep.mubr.f32.mxu0 0.0
      %3009 = vmatmul.mubr.f32.gmra.mrb[0].mxu0 %v2846
      %v3010 = vpop.f32.mrb[0].mxu0
      %v3011 = vadd.f32 0.0, %v3010
      %v3012 = vpop.f32.mrb[0].mxu0
      %3013 = vmatprep.mubr.f32.mxu0 0.0
      %3014 = vmatmul.mubr.f32.gmra.mrb[0].mxu0 %v2849
      %v3015 = vpop.f32.mrb[0].mxu0
      %v3016 = vadd.f32 0.0, %v3015
      %v3017 = vpop.f32.mrb[0].mxu0
      %3018 = vmatprep.mubr.f32.mxu0 0.0
      %3019 = vmatmul.mubr.f32.gmra.mrb[0].mxu0 %v2852
      %v3020 = vpop.f32.mrb[0].mxu0
      %v3021 = vadd.f32 0.0, %v3020
      %v3022 = vpop.f32.mrb[0].mxu0
      %3023 = vmatprep.mubr.f32.mxu0 0.0
      %3024 = vmatmul.mubr.f32.gmra.mrb[0].mxu0 %v2855
      %v3025 = vpop.f32.mrb[0].mxu0
      %v3026 = vadd.f32 0.0, %v3025
      %v3027 = vpop.f32.mrb[0].mxu0
      %3028 = vmatprep.mubr.f32.mxu0 0.0
      %3029 = vmatmul.mubr.f32.gmra.mrb[0].mxu0 %v2858
      %v3030 = vpop.f32.mrb[0].mxu0
      %v3031 = vadd.f32 0.0, %v3030
      %v3032 = vpop.f32.mrb[0].mxu0
      %3033 = vmatprep.mubr.f32.mxu0 0.0
      %3034 = vmatmul.mubr.f32.gmra.mrb[0].mxu0 %v2861
      %v3035 = vpop.f32.mrb[0].mxu0
      %v3036 = vadd.f32 0.0, %v3035
      %v3037 = vpop.f32.mrb[0].mxu0
      %3038 = vmatprep.mubr.f32.mxu0 0.0
      %3039 = vmatmul.mubr.f32.gmra.mrb[0].mxu0 %v2864
      %v3040 = vpop.f32.mrb[0].mxu0
      %v3041 = vadd.f32 0.0, %v3040
      %v3042 = vpop.f32.mrb[0].mxu0
      %3043 = vmatprep.mubr.f32.mxu0 0.0
      %3044 = vmatmul.mubr.f32.gmra.mrb[0].mxu0 %v2867
      %v3045 = vpop.f32.mrb[0].mxu0
      %v3046 = vadd.f32 0.0, %v3045
      %v3047 = vpop.f32.mrb[0].mxu0
      %3048 = vmatprep.mubr.f32.mxu0 0.0
      %3049 = vmatmul.mubr.f32.gmra.mrb[0].mxu0 %v2870
      %v3050 = vpop.f32.mrb[0].mxu0
      %v3051 = vadd.f32 0.0, %v3050
      %v3052 = vpop.f32.mrb[0].mxu0
      %3053 = vmatprep.mubr.f32.mxu0 0.0
      %3054 = vmatmul.mubr.f32.gmra.mrb[0].mxu0 %v2873
      %v3055 = vpop.f32.mrb[0].mxu0
      %v3056 = vadd.f32 0.0, %v3055
      %v3057 = vpop.f32.mrb[0].mxu0
      %3058 = vmatprep.mubr.f32.mxu0 0.0
      %3059 = vmatmul.mubr.f32.gmra.mrb[0].mxu0 %v2876
      %v3060 = vpop.f32.mrb[0].mxu0
      %v3061 = vadd.f32 0.0, %v3060
      %v3062 = vpop.f32.mrb[0].mxu0
      %3063 = vmatprep.mubr.f32.mxu0 0.0
      %3064 = vmatmul.mubr.f32.gmra.mrb[0].mxu0 %v2879
      %v3065 = vpop.f32.mrb[0].mxu0
      %v3066 = vadd.f32 0.0, %v3065
      %v3067 = vpop.f32.mrb[0].mxu0
      %3068 = vmatprep.mubr.f32.mxu0 0.0
      %3069 = vmatmul.mubr.f32.gmra.mrb[0].mxu0 %v2882
      %v3070 = vpop.f32.mrb[0].mxu0
      %v3071 = vadd.f32 0.0, %v3070
      %v3072 = vpop.f32.mrb[0].mxu0
      %3073 = vmatprep.mubr.f32.mxu0 0.0
      %3074 = vmatmul.mubr.f32.gmra.mrb[0].mxu0 %v2885
      %v3075 = vpop.f32.mrb[0].mxu0
      %v3076 = vadd.f32 0.0, %v3075
      %v3077 = vpop.f32.mrb[0].mxu0
      %3078 = vmatprep.mubr.f32.mxu0 0.0
      %3079 = vmatmul.mubr.f32.gmra.mrb[0].mxu0 %v2888
      %v3080 = vpop.f32.mrb[0].mxu0
      %v3081 = vadd.f32 0.0, %v3080
      %v3082 = vpop.f32.mrb[0].mxu0
      %3083 = vmatprep.mubr.f32.mxu0 0.0
      %3084 = vmatmul.mubr.f32.gmra.mrb[0].mxu0 %v2891
      %v3085 = vpop.f32.mrb[0].mxu0
      %v3086 = vadd.f32 0.0, %v3085
      %v3087 = vpop.f32.mrb[0].mxu0
      %3088 = vmatprep.mubr.f32.mxu0 0.0
      %3089 = vmatmul.mubr.f32.gmra.mrb[0].mxu0 %v2894
      %v3090 = vpop.f32.mrb[0].mxu0
      %v3091 = vadd.f32 0.0, %v3090
      %v3092 = vpop.f32.mrb[0].mxu0
      %3093 = vmatprep.mubr.f32.mxu0 0.0
      %3094 = vmatmul.mubr.f32.gmra.mrb[0].mxu0 %v2897
      %v3095 = vpop.f32.mrb[0].mxu0
      %v3096 = vadd.f32 0.0, %v3095
      %v3097 = vpop.f32.mrb[0].mxu0
      %3098 = vmatprep.mubr.f32.mxu0 0.0
      %3099 = vmatmul.mubr.f32.gmra.mrb[0].mxu0 %v2900
      %v3100 = vpop.f32.mrb[0].mxu0
      %v3101 = vadd.f32 0.0, %v3100
      %v3102 = vpop.f32.mrb[0].mxu0
      %3103 = vmatprep.mubr.f32.mxu0 0.0
      %3104 = vmatmul.mubr.f32.gmra.mrb[0].mxu0 %v2903
      %v3105 = vpop.f32.mrb[0].mxu0
      %v3106 = vadd.f32 0.0, %v3105
      %v3107 = vpop.f32.mrb[0].mxu0
      %3108 = vmatprep.mubr.f32.mxu0 0.0
      %3109 = vmatmul.mubr.f32.gmra.mrb[0].mxu0 %v2906
      %v3110 = vpop.f32.mrb[0].mxu0
      %v3111 = vadd.f32 0.0, %v3110
      %v3112 = vpop.f32.mrb[0].mxu0
      %3113 = vmatprep.mubr.f32.mxu0 0.0
      %3114 = vmatmul.mubr.f32.gmra.mrb[0].mxu0 %v2909
      %v3115 = vpop.f32.mrb[0].mxu0
      %v3116 = vadd.f32 0.0, %v3115
      %v3117 = vpop.f32.mrb[0].mxu0
      %3118 = vmatprep.mubr.f32.mxu0 0.0
      %3119 = vmatmul.mubr.f32.gmra.mrb[0].mxu0 %v2912
      %v3120 = vpop.f32.mrb[0].mxu0
      %v3121 = vadd.f32 0.0, %v3120
      %v3122 = vpop.f32.mrb[0].mxu0
      %3123 = vmatprep.mubr.f32.mxu0 0.0
      %3124 = vmatmul.mubr.f32.gmra.mrb[0].mxu0 %v2915
      %v3125 = vpop.f32.mrb[0].mxu0
      %v3126 = vadd.f32 0.0, %v3125
      %v3127 = vpop.f32.mrb[0].mxu0
      %3128 = vmatprep.mubr.f32.mxu0 0.0
      %3129 = vmatmul.mubr.f32.gmra.mrb[0].mxu0 %v2918
      %v3130 = vpop.f32.mrb[0].mxu0
      %v3131 = vadd.f32 0.0, %v3130
      %v3132 = vpop.f32.mrb[0].mxu0
      %3133 = vmatprep.mubr.f32.mxu0 0.0
      %3134 = vmatmul.mubr.f32.gmra.mrb[0].mxu0 %v2921
      %v3135 = vpop.f32.mrb[0].mxu0
      %v3136 = vadd.f32 0.0, %v3135
      %v3137 = vpop.f32.mrb[0].mxu0
      %3138 = vmatprep.mubr.f32.mxu0 0.0
      %3139 = vmatmul.mubr.f32.gmra.mrb[0].mxu0 %v2924
      %v3140 = vpop.f32.mrb[0].mxu0
      %v3141 = vadd.f32 0.0, %v3140
      %v3142 = vpop.f32.mrb[0].mxu0
      %3143 = vmatprep.mubr.f32.mxu0 0.0
      %3144 = vmatmul.mubr.f32.gmra.mrb[0].mxu0 %v2927
      %v3145 = vpop.f32.mrb[0].mxu0
      %v3146 = vadd.f32 0.0, %v3145
      %v3147 = vpop.f32.mrb[0].mxu0
      %3148 = vmatprep.mubr.f32.mxu0 0.0
      %3149 = vmatmul.mubr.f32.gmra.mrb[0].mxu0 %v2930
      %v3150 = vpop.f32.mrb[0].mxu0
      %v3151 = vadd.f32 0.0, %v3150
      %v3152 = vpop.f32.mrb[0].mxu0
      %3153 = vmatprep.mubr.f32.mxu0 0.0
      %3154 = vmatmul.mubr.f32.gmra.mrb[0].mxu0 %v2933
      %v3155 = vpop.f32.mrb[0].mxu0
      %v3156 = vadd.f32 0.0, %v3155
      %v3157 = vpop.f32.mrb[0].mxu0
      %3158 = vmatprep.mubr.f32.mxu0 0.0
      %3159 = vmatmul.mubr.f32.gmra.mrb[0].mxu0 %v2936
      %v3160 = vpop.f32.mrb[0].mxu0
      %v3161 = vadd.f32 0.0, %v3160
      %v3162 = vpop.f32.mrb[0].mxu0
      %3163 = vmatprep.mubr.f32.mxu0 0.0
      %3164 = vmatmul.mubr.f32.gmra.mrb[0].mxu0 %v2939
      %v3165 = vpop.f32.mrb[0].mxu0
      %v3166 = vadd.f32 0.0, %v3165
      %v3167 = vpop.f32.mrb[0].mxu0
      %3168 = vdwg.mxu0
      %v3169 = vadd.f32 %v2778, %v3011
      %v3170 = vadd.f32 %v2779, %v3016
      %v3171 = vadd.f32 %v2780, %v3021
      %v3172 = vadd.f32 %v2781, %v3026
      %v3173 = vadd.f32 %v2782, %v3031
      %v3174 = vadd.f32 %v2783, %v3036
      %v3175 = vadd.f32 %v2784, %v3041
      %v3176 = vadd.f32 %v2785, %v3046
      %v3177 = vadd.f32 %v2786, %v3051
      %v3178 = vadd.f32 %v2787, %v3056
      %v3179 = vadd.f32 %v2788, %v3061
      %v3180 = vadd.f32 %v2789, %v3066
      %v3181 = vadd.f32 %v2790, %v3071
      %v3182 = vadd.f32 %v2791, %v3076
      %v3183 = vadd.f32 %v2792, %v3081
      %v3184 = vadd.f32 %v2793, %v3086
      %v3185 = vadd.f32 %v2794, %v3091
      %v3186 = vadd.f32 %v2795, %v3096
      %v3187 = vadd.f32 %v2796, %v3101
      %v3188 = vadd.f32 %v2797, %v3106
      %v3189 = vadd.f32 %v2798, %v3111
      %v3190 = vadd.f32 %v2799, %v3116
      %v3191 = vadd.f32 %v2800, %v3121
      %v3192 = vadd.f32 %v2801, %v3126
      %v3193 = vadd.f32 %v2802, %v3131
      %v3194 = vadd.f32 %v2803, %v3136
      %v3195 = vadd.f32 %v2804, %v3141
      %v3196 = vadd.f32 %v2805, %v3146
      %v3197 = vadd.f32 %v2806, %v3151
      %v3198 = vadd.f32 %v2807, %v3156
      %v3199 = vadd.f32 %v2808, %v3161
      %v3200 = vadd.f32 %v2809, %v3166
      %s3201 = scalar_lea.vmem [#allocation2], 320
      %v3202 = vld [vmem:[%s3201] sm:$0xff]
      %v3203 = vld [vmem:[%s3201 + $0x8] sm:$0xff]
      %v3204 = vld [vmem:[%s3201 + $0x10] sm:$0xff]
      %v3205 = vld [vmem:[%s3201 + $0x18] sm:$0xff]
      %v3206 = vld [vmem:[%s3201 + $0x20] sm:$0xff]
      %v3207 = vld [vmem:[%s3201 + $0x28] sm:$0xff]
      %v3208 = vld [vmem:[%s3201 + $0x30] sm:$0xff]
      %v3209 = vld [vmem:[%s3201 + $0x38] sm:$0xff]
      %v3210 = vld [vmem:[%s3201 + $0x40] sm:$0xff]
      %v3211 = vld [vmem:[%s3201 + $0x48] sm:$0xff]
      %v3212 = vld [vmem:[%s3201 + $0x50] sm:$0xff]
      %v3213 = vld [vmem:[%s3201 + $0x58] sm:$0xff]
      %v3214 = vld [vmem:[%s3201 + $0x60] sm:$0xff]
      %v3215 = vld [vmem:[%s3201 + $0x68] sm:$0xff]
      %v3216 = vld [vmem:[%s3201 + $0x70] sm:$0xff]
      %v3217 = vld [vmem:[%s3201 + $0x78] sm:$0xff]
      %v3218 = vld [vmem:[%s3201 + $0x80] sm:$0xff]
      %v3219 = vld [vmem:[%s3201 + $0x88] sm:$0xff]
      %v3220 = vld [vmem:[%s3201 + $0x90] sm:$0xff]
      %v3221 = vld [vmem:[%s3201 + $0x98] sm:$0xff]
      %v3222 = vld [vmem:[%s3201 + $0xa0] sm:$0xff]
      %v3223 = vld [vmem:[%s3201 + $0xa8] sm:$0xff]
      %v3224 = vld [vmem:[%s3201 + $0xb0] sm:$0xff]
      %v3225 = vld [vmem:[%s3201 + $0xb8] sm:$0xff]
      %v3226 = vld [vmem:[%s3201 + $0xc0] sm:$0xff]
      %v3227 = vld [vmem:[%s3201 + $0xc8] sm:$0xff]
      %v3228 = vld [vmem:[%s3201 + $0xd0] sm:$0xff]
      %v3229 = vld [vmem:[%s3201 + $0xd8] sm:$0xff]
      %v3230 = vld [vmem:[%s3201 + $0xe0] sm:$0xff]
      %v3231 = vld [vmem:[%s3201 + $0xe8] sm:$0xff]
      %v3232 = vld [vmem:[%s3201 + $0xf0] sm:$0xff]
      %v3233 = vld [vmem:[%s3201 + $0xf8] sm:$0xff]
      %s3234 = scalar_lea.vmem %s218, 28
      %v3235 = vld [vmem:[%s3234] sm:$0xf]
      %v3237 = vsel %vm596, %v3202, 0
      %v3240 = vsel %vm596, %v3203, 0
      %v3243 = vsel %vm596, %v3204, 0
      %v3246 = vsel %vm596, %v3205, 0
      %v3249 = vsel %vm596, %v3206, 0
      %v3252 = vsel %vm596, %v3207, 0
      %v3255 = vsel %vm596, %v3208, 0
      %v3258 = vsel %vm596, %v3209, 0
      %v3261 = vsel %vm596, %v3210, 0
      %v3264 = vsel %vm596, %v3211, 0
      %v3267 = vsel %vm596, %v3212, 0
      %v3270 = vsel %vm596, %v3213, 0
      %v3273 = vsel %vm596, %v3214, 0
      %v3276 = vsel %vm596, %v3215, 0
      %v3279 = vsel %vm596, %v3216, 0
      %v3282 = vsel %vm596, %v3217, 0
      %v3285 = vsel %vm596, %v3218, 0
      %v3288 = vsel %vm596, %v3219, 0
      %v3291 = vsel %vm596, %v3220, 0
      %v3294 = vsel %vm596, %v3221, 0
      %v3297 = vsel %vm596, %v3222, 0
      %v3300 = vsel %vm596, %v3223, 0
      %v3303 = vsel %vm596, %v3224, 0
      %v3306 = vsel %vm596, %v3225, 0
      %v3309 = vsel %vm596, %v3226, 0
      %v3312 = vsel %vm596, %v3227, 0
      %v3315 = vsel %vm596, %v3228, 0
      %v3318 = vsel %vm596, %v3229, 0
      %v3321 = vsel %vm596, %v3230, 0
      %v3324 = vsel %vm596, %v3231, 0
      %v3327 = vsel %vm596, %v3232, 0
      %v3330 = vsel %vm596, %v3233, 0
      %v3333 = vsel %vm693, %v3235, 0
      %3335 = vmatprep.subr.mxu0 0.0
      %3336 = vmatpush1.msra.mxu0 %v3333
      %3337 = vmatprep.subr.mxu0 0.0
      %3338 = vmatpush1.msra.mxu0 0.0
      %3339 = vmatprep.subr.mxu0 0.0
      %3340 = vmatpush1.msra.mxu0 0.0
      %3341 = vmatprep.subr.mxu0 0.0
      %3342 = vmatpush1.msra.mxu0 0.0
      %3343 = vmatprep.subr.mxu0 0.0
      %3344 = vmatpush1.msra.mxu0 0.0
      %3345 = vmatprep.subr.mxu0 0.0
      %3346 = vmatpush1.msra.mxu0 0.0
      %3347 = vmatprep.subr.mxu0 0.0
      %3348 = vmatpush1.msra.mxu0 0.0
      %3349 = vmatprep.subr.mxu0 0.0
      %3350 = vmatpush1.msra.mxu0 0.0
      %3351 = vmatprep.subr.mxu0 0.0
      %3352 = vmatpush1.msra.mxu0 0.0
      %3353 = vmatprep.subr.mxu0 0.0
      %3354 = vmatpush1.msra.mxu0 0.0
      %3355 = vmatprep.subr.mxu0 0.0
      %3356 = vmatpush1.msra.mxu0 0.0
      %3357 = vmatprep.subr.mxu0 0.0
      %3358 = vmatpush1.msra.mxu0 0.0
      %3359 = vmatprep.subr.mxu0 0.0
      %3360 = vmatpush1.msra.mxu0 0.0
      %3361 = vmatprep.subr.mxu0 0.0
      %3362 = vmatpush1.msra.mxu0 0.0
      %3363 = vmatprep.subr.mxu0 0.0
      %3364 = vmatpush1.msra.mxu0 0.0
      %3365 = vmatprep.subr.mxu0 0.0
      %3366 = vmatpush1.msra.mxu0 0.0
      %3367 = vmatprep.subr.mxu0 0.0
      %3368 = vmatpush1.msra.mxu0 0.0
      %3369 = vmatprep.subr.mxu0 0.0
      %3370 = vmatpush1.msra.mxu0 0.0
      %3371 = vmatprep.subr.mxu0 0.0
      %3372 = vmatpush1.msra.mxu0 0.0
      %3373 = vmatprep.subr.mxu0 0.0
      %3374 = vmatpush1.msra.mxu0 0.0
      %3375 = vmatprep.subr.mxu0 0.0
      %3376 = vmatpush1.msra.mxu0 0.0
      %3377 = vmatprep.subr.mxu0 0.0
      %3378 = vmatpush1.msra.mxu0 0.0
      %3379 = vmatprep.subr.mxu0 0.0
      %3380 = vmatpush1.msra.mxu0 0.0
      %3381 = vmatprep.subr.mxu0 0.0
      %3382 = vmatpush1.msra.mxu0 0.0
      %3383 = vmatprep.subr.mxu0 0.0
      %3384 = vmatpush1.msra.mxu0 0.0
      %3385 = vmatprep.subr.mxu0 0.0
      %3386 = vmatpush1.msra.mxu0 0.0
      %3387 = vmatprep.subr.mxu0 0.0
      %3388 = vmatpush1.msra.mxu0 0.0
      %3389 = vmatprep.subr.mxu0 0.0
      %3390 = vmatpush1.msra.mxu0 0.0
      %3391 = vmatprep.subr.mxu0 0.0
      %3392 = vmatpush1.msra.mxu0 0.0
      %3393 = vmatprep.subr.mxu0 0.0
      %3394 = vmatpush1.msra.mxu0 0.0
      %3395 = vmatprep.subr.mxu0 0.0
      %3396 = vmatpush1.msra.mxu0 0.0
      %3397 = vmatprep.subr.mxu0 0.0
      %3398 = vmatpush1.msra.mxu0 0.0
      %3399 = vmatprep.mubr.f32.mxu0 0.0
      %3400 = vmatmul.mubr.f32.gmra.mrb[0].mxu0 %v3237
      %v3401 = vpop.f32.mrb[0].mxu0
      %v3402 = vadd.f32 0.0, %v3401
      %v3403 = vpop.f32.mrb[0].mxu0
      %3404 = vmatprep.mubr.f32.mxu0 0.0
      %3405 = vmatmul.mubr.f32.gmra.mrb[0].mxu0 %v3240
      %v3406 = vpop.f32.mrb[0].mxu0
      %v3407 = vadd.f32 0.0, %v3406
      %v3408 = vpop.f32.mrb[0].mxu0
      %3409 = vmatprep.mubr.f32.mxu0 0.0
      %3410 = vmatmul.mubr.f32.gmra.mrb[0].mxu0 %v3243
      %v3411 = vpop.f32.mrb[0].mxu0
      %v3412 = vadd.f32 0.0, %v3411
      %v3413 = vpop.f32.mrb[0].mxu0
      %3414 = vmatprep.mubr.f32.mxu0 0.0
      %3415 = vmatmul.mubr.f32.gmra.mrb[0].mxu0 %v3246
      %v3416 = vpop.f32.mrb[0].mxu0
      %v3417 = vadd.f32 0.0, %v3416
      %v3418 = vpop.f32.mrb[0].mxu0
      %3419 = vmatprep.mubr.f32.mxu0 0.0
      %3420 = vmatmul.mubr.f32.gmra.mrb[0].mxu0 %v3249
      %v3421 = vpop.f32.mrb[0].mxu0
      %v3422 = vadd.f32 0.0, %v3421
      %v3423 = vpop.f32.mrb[0].mxu0
      %3424 = vmatprep.mubr.f32.mxu0 0.0
      %3425 = vmatmul.mubr.f32.gmra.mrb[0].mxu0 %v3252
      %v3426 = vpop.f32.mrb[0].mxu0
      %v3427 = vadd.f32 0.0, %v3426
      %v3428 = vpop.f32.mrb[0].mxu0
      %3429 = vmatprep.mubr.f32.mxu0 0.0
      %3430 = vmatmul.mubr.f32.gmra.mrb[0].mxu0 %v3255
      %v3431 = vpop.f32.mrb[0].mxu0
      %v3432 = vadd.f32 0.0, %v3431
      %v3433 = vpop.f32.mrb[0].mxu0
      %3434 = vmatprep.mubr.f32.mxu0 0.0
      %3435 = vmatmul.mubr.f32.gmra.mrb[0].mxu0 %v3258
      %v3436 = vpop.f32.mrb[0].mxu0
      %v3437 = vadd.f32 0.0, %v3436
      %v3438 = vpop.f32.mrb[0].mxu0
      %3439 = vmatprep.mubr.f32.mxu0 0.0
      %3440 = vmatmul.mubr.f32.gmra.mrb[0].mxu0 %v3261
      %v3441 = vpop.f32.mrb[0].mxu0
      %v3442 = vadd.f32 0.0, %v3441
      %v3443 = vpop.f32.mrb[0].mxu0
      %3444 = vmatprep.mubr.f32.mxu0 0.0
      %3445 = vmatmul.mubr.f32.gmra.mrb[0].mxu0 %v3264
      %v3446 = vpop.f32.mrb[0].mxu0
      %v3447 = vadd.f32 0.0, %v3446
      %v3448 = vpop.f32.mrb[0].mxu0
      %3449 = vmatprep.mubr.f32.mxu0 0.0
      %3450 = vmatmul.mubr.f32.gmra.mrb[0].mxu0 %v3267
      %v3451 = vpop.f32.mrb[0].mxu0
      %v3452 = vadd.f32 0.0, %v3451
      %v3453 = vpop.f32.mrb[0].mxu0
      %3454 = vmatprep.mubr.f32.mxu0 0.0
      %3455 = vmatmul.mubr.f32.gmra.mrb[0].mxu0 %v3270
      %v3456 = vpop.f32.mrb[0].mxu0
      %v3457 = vadd.f32 0.0, %v3456
      %v3458 = vpop.f32.mrb[0].mxu0
      %3459 = vmatprep.mubr.f32.mxu0 0.0
      %3460 = vmatmul.mubr.f32.gmra.mrb[0].mxu0 %v3273
      %v3461 = vpop.f32.mrb[0].mxu0
      %v3462 = vadd.f32 0.0, %v3461
      %v3463 = vpop.f32.mrb[0].mxu0
      %3464 = vmatprep.mubr.f32.mxu0 0.0
      %3465 = vmatmul.mubr.f32.gmra.mrb[0].mxu0 %v3276
      %v3466 = vpop.f32.mrb[0].mxu0
      %v3467 = vadd.f32 0.0, %v3466
      %v3468 = vpop.f32.mrb[0].mxu0
      %3469 = vmatprep.mubr.f32.mxu0 0.0
      %3470 = vmatmul.mubr.f32.gmra.mrb[0].mxu0 %v3279
      %v3471 = vpop.f32.mrb[0].mxu0
      %v3472 = vadd.f32 0.0, %v3471
      %v3473 = vpop.f32.mrb[0].mxu0
      %3474 = vmatprep.mubr.f32.mxu0 0.0
      %3475 = vmatmul.mubr.f32.gmra.mrb[0].mxu0 %v3282
      %v3476 = vpop.f32.mrb[0].mxu0
      %v3477 = vadd.f32 0.0, %v3476
      %v3478 = vpop.f32.mrb[0].mxu0
      %3479 = vmatprep.mubr.f32.mxu0 0.0
      %3480 = vmatmul.mubr.f32.gmra.mrb[0].mxu0 %v3285
      %v3481 = vpop.f32.mrb[0].mxu0
      %v3482 = vadd.f32 0.0, %v3481
      %v3483 = vpop.f32.mrb[0].mxu0
      %3484 = vmatprep.mubr.f32.mxu0 0.0
      %3485 = vmatmul.mubr.f32.gmra.mrb[0].mxu0 %v3288
      %v3486 = vpop.f32.mrb[0].mxu0
      %v3487 = vadd.f32 0.0, %v3486
      %v3488 = vpop.f32.mrb[0].mxu0
      %3489 = vmatprep.mubr.f32.mxu0 0.0
      %3490 = vmatmul.mubr.f32.gmra.mrb[0].mxu0 %v3291
      %v3491 = vpop.f32.mrb[0].mxu0
      %v3492 = vadd.f32 0.0, %v3491
      %v3493 = vpop.f32.mrb[0].mxu0
      %3494 = vmatprep.mubr.f32.mxu0 0.0
      %3495 = vmatmul.mubr.f32.gmra.mrb[0].mxu0 %v3294
      %v3496 = vpop.f32.mrb[0].mxu0
      %v3497 = vadd.f32 0.0, %v3496
      %v3498 = vpop.f32.mrb[0].mxu0
      %3499 = vmatprep.mubr.f32.mxu0 0.0
      %3500 = vmatmul.mubr.f32.gmra.mrb[0].mxu0 %v3297
      %v3501 = vpop.f32.mrb[0].mxu0
      %v3502 = vadd.f32 0.0, %v3501
      %v3503 = vpop.f32.mrb[0].mxu0
      %3504 = vmatprep.mubr.f32.mxu0 0.0
      %3505 = vmatmul.mubr.f32.gmra.mrb[0].mxu0 %v3300
      %v3506 = vpop.f32.mrb[0].mxu0
      %v3507 = vadd.f32 0.0, %v3506
      %v3508 = vpop.f32.mrb[0].mxu0
      %3509 = vmatprep.mubr.f32.mxu0 0.0
      %3510 = vmatmul.mubr.f32.gmra.mrb[0].mxu0 %v3303
      %v3511 = vpop.f32.mrb[0].mxu0
      %v3512 = vadd.f32 0.0, %v3511
      %v3513 = vpop.f32.mrb[0].mxu0
      %3514 = vmatprep.mubr.f32.mxu0 0.0
      %3515 = vmatmul.mubr.f32.gmra.mrb[0].mxu0 %v3306
      %v3516 = vpop.f32.mrb[0].mxu0
      %v3517 = vadd.f32 0.0, %v3516
      %v3518 = vpop.f32.mrb[0].mxu0
      %3519 = vmatprep.mubr.f32.mxu0 0.0
      %3520 = vmatmul.mubr.f32.gmra.mrb[0].mxu0 %v3309
      %v3521 = vpop.f32.mrb[0].mxu0
      %v3522 = vadd.f32 0.0, %v3521
      %v3523 = vpop.f32.mrb[0].mxu0
      %3524 = vmatprep.mubr.f32.mxu0 0.0
      %3525 = vmatmul.mubr.f32.gmra.mrb[0].mxu0 %v3312
      %v3526 = vpop.f32.mrb[0].mxu0
      %v3527 = vadd.f32 0.0, %v3526
      %v3528 = vpop.f32.mrb[0].mxu0
      %3529 = vmatprep.mubr.f32.mxu0 0.0
      %3530 = vmatmul.mubr.f32.gmra.mrb[0].mxu0 %v3315
      %v3531 = vpop.f32.mrb[0].mxu0
      %v3532 = vadd.f32 0.0, %v3531
      %v3533 = vpop.f32.mrb[0].mxu0
      %3534 = vmatprep.mubr.f32.mxu0 0.0
      %3535 = vmatmul.mubr.f32.gmra.mrb[0].mxu0 %v3318
      %v3536 = vpop.f32.mrb[0].mxu0
      %v3537 = vadd.f32 0.0, %v3536
      %v3538 = vpop.f32.mrb[0].mxu0
      %3539 = vmatprep.mubr.f32.mxu0 0.0
      %3540 = vmatmul.mubr.f32.gmra.mrb[0].mxu0 %v3321
      %v3541 = vpop.f32.mrb[0].mxu0
      %v3542 = vadd.f32 0.0, %v3541
      %v3543 = vpop.f32.mrb[0].mxu0
      %3544 = vmatprep.mubr.f32.mxu0 0.0
      %3545 = vmatmul.mubr.f32.gmra.mrb[0].mxu0 %v3324
      %v3546 = vpop.f32.mrb[0].mxu0
      %v3547 = vadd.f32 0.0, %v3546
      %v3548 = vpop.f32.mrb[0].mxu0
      %3549 = vmatprep.mubr.f32.mxu0 0.0
      %3550 = vmatmul.mubr.f32.gmra.mrb[0].mxu0 %v3327
      %v3551 = vpop.f32.mrb[0].mxu0
      %v3552 = vadd.f32 0.0, %v3551
      %v3553 = vpop.f32.mrb[0].mxu0
      %3554 = vmatprep.mubr.f32.mxu0 0.0
      %3555 = vmatmul.mubr.f32.gmra.mrb[0].mxu0 %v3330
      %v3556 = vpop.f32.mrb[0].mxu0
      %v3557 = vadd.f32 0.0, %v3556
      %v3558 = vpop.f32.mrb[0].mxu0
      %3559 = vdwg.mxu0
      %v3560 = vadd.f32 %v3169, %v3402
      %v3561 = vadd.f32 %v3170, %v3407
      %v3562 = vadd.f32 %v3171, %v3412
      %v3563 = vadd.f32 %v3172, %v3417
      %v3564 = vadd.f32 %v3173, %v3422
      %v3565 = vadd.f32 %v3174, %v3427
      %v3566 = vadd.f32 %v3175, %v3432
      %v3567 = vadd.f32 %v3176, %v3437
      %v3568 = vadd.f32 %v3177, %v3442
      %v3569 = vadd.f32 %v3178, %v3447
      %v3570 = vadd.f32 %v3179, %v3452
      %v3571 = vadd.f32 %v3180, %v3457
      %v3572 = vadd.f32 %v3181, %v3462
      %v3573 = vadd.f32 %v3182, %v3467
      %v3574 = vadd.f32 %v3183, %v3472
      %v3575 = vadd.f32 %v3184, %v3477
      %v3576 = vadd.f32 %v3185, %v3482
      %v3577 = vadd.f32 %v3186, %v3487
      %v3578 = vadd.f32 %v3187, %v3492
      %v3579 = vadd.f32 %v3188, %v3497
      %v3580 = vadd.f32 %v3189, %v3502
      %v3581 = vadd.f32 %v3190, %v3507
      %v3582 = vadd.f32 %v3191, %v3512
      %v3583 = vadd.f32 %v3192, %v3517
      %v3584 = vadd.f32 %v3193, %v3522
      %v3585 = vadd.f32 %v3194, %v3527
      %v3586 = vadd.f32 %v3195, %v3532
      %v3587 = vadd.f32 %v3196, %v3537
      %v3588 = vadd.f32 %v3197, %v3542
      %v3589 = vadd.f32 %v3198, %v3547
      %v3590 = vadd.f32 %v3199, %v3552
      %v3591 = vadd.f32 %v3200, %v3557
      %s3592 = scalar_lea.vmem [#allocation2], 608
      %v3593 = vld [vmem:[%s3592] sm:$0xff]
      %v3594 = vld [vmem:[%s3592 + $0x8] sm:$0xff]
      %v3595 = vld [vmem:[%s3592 + $0x10] sm:$0xff]
      %v3596 = vld [vmem:[%s3592 + $0x18] sm:$0xff]
      %v3597 = vld [vmem:[%s3592 + $0x20] sm:$0xff]
      %v3598 = vld [vmem:[%s3592 + $0x28] sm:$0xff]
      %v3599 = vld [vmem:[%s3592 + $0x30] sm:$0xff]
      %v3600 = vld [vmem:[%s3592 + $0x38] sm:$0xff]
      %v3601 = vld [vmem:[%s3592 + $0x40] sm:$0xff]
      %v3602 = vld [vmem:[%s3592 + $0x48] sm:$0xff]
      %v3603 = vld [vmem:[%s3592 + $0x50] sm:$0xff]
      %v3604 = vld [vmem:[%s3592 + $0x58] sm:$0xff]
      %v3605 = vld [vmem:[%s3592 + $0x60] sm:$0xff]
      %v3606 = vld [vmem:[%s3592 + $0x68] sm:$0xff]
      %v3607 = vld [vmem:[%s3592 + $0x70] sm:$0xff]
      %v3608 = vld [vmem:[%s3592 + $0x78] sm:$0xff]
      %v3609 = vld [vmem:[%s3592 + $0x80] sm:$0xff]
      %v3610 = vld [vmem:[%s3592 + $0x88] sm:$0xff]
      %v3611 = vld [vmem:[%s3592 + $0x90] sm:$0xff]
      %v3612 = vld [vmem:[%s3592 + $0x98] sm:$0xff]
      %v3613 = vld [vmem:[%s3592 + $0xa0] sm:$0xff]
      %v3614 = vld [vmem:[%s3592 + $0xa8] sm:$0xff]
      %v3615 = vld [vmem:[%s3592 + $0xb0] sm:$0xff]
      %v3616 = vld [vmem:[%s3592 + $0xb8] sm:$0xff]
      %v3617 = vld [vmem:[%s3592 + $0xc0] sm:$0xff]
      %v3618 = vld [vmem:[%s3592 + $0xc8] sm:$0xff]
      %v3619 = vld [vmem:[%s3592 + $0xd0] sm:$0xff]
      %v3620 = vld [vmem:[%s3592 + $0xd8] sm:$0xff]
      %v3621 = vld [vmem:[%s3592 + $0xe0] sm:$0xff]
      %v3622 = vld [vmem:[%s3592 + $0xe8] sm:$0xff]
      %v3623 = vld [vmem:[%s3592 + $0xf0] sm:$0xff]
      %v3624 = vld [vmem:[%s3592 + $0xf8] sm:$0xff]
      %s3625 = scalar_lea.vmem %s218, 32
      %v3626 = vld [vmem:[%s3625] sm:$0xf]
      %v3628 = vsel %vm596, %v3593, 0
      %v3631 = vsel %vm596, %v3594, 0
      %v3634 = vsel %vm596, %v3595, 0
      %v3637 = vsel %vm596, %v3596, 0
      %v3640 = vsel %vm596, %v3597, 0
      %v3643 = vsel %vm596, %v3598, 0
      %v3646 = vsel %vm596, %v3599, 0
      %v3649 = vsel %vm596, %v3600, 0
      %v3652 = vsel %vm596, %v3601, 0
      %v3655 = vsel %vm596, %v3602, 0
      %v3658 = vsel %vm596, %v3603, 0
      %v3661 = vsel %vm596, %v3604, 0
      %v3664 = vsel %vm596, %v3605, 0
      %v3667 = vsel %vm596, %v3606, 0
      %v3670 = vsel %vm596, %v3607, 0
      %v3673 = vsel %vm596, %v3608, 0
      %v3676 = vsel %vm596, %v3609, 0
      %v3679 = vsel %vm596, %v3610, 0
      %v3682 = vsel %vm596, %v3611, 0
      %v3685 = vsel %vm596, %v3612, 0
      %v3688 = vsel %vm596, %v3613, 0
      %v3691 = vsel %vm596, %v3614, 0
      %v3694 = vsel %vm596, %v3615, 0
      %v3697 = vsel %vm596, %v3616, 0
      %v3700 = vsel %vm596, %v3617, 0
      %v3703 = vsel %vm596, %v3618, 0
      %v3706 = vsel %vm596, %v3619, 0
      %v3709 = vsel %vm596, %v3620, 0
      %v3712 = vsel %vm596, %v3621, 0
      %v3715 = vsel %vm596, %v3622, 0
      %v3718 = vsel %vm596, %v3623, 0
      %v3721 = vsel %vm596, %v3624, 0
      %v3724 = vsel %vm693, %v3626, 0
      %3726 = vmatprep.subr.mxu0 0.0
      %3727 = vmatpush1.msra.mxu0 %v3724
      %3728 = vmatprep.subr.mxu0 0.0
      %3729 = vmatpush1.msra.mxu0 0.0
      %3730 = vmatprep.subr.mxu0 0.0
      %3731 = vmatpush1.msra.mxu0 0.0
      %3732 = vmatprep.subr.mxu0 0.0
      %3733 = vmatpush1.msra.mxu0 0.0
      %3734 = vmatprep.subr.mxu0 0.0
      %3735 = vmatpush1.msra.mxu0 0.0
      %3736 = vmatprep.subr.mxu0 0.0
      %3737 = vmatpush1.msra.mxu0 0.0
      %3738 = vmatprep.subr.mxu0 0.0
      %3739 = vmatpush1.msra.mxu0 0.0
      %3740 = vmatprep.subr.mxu0 0.0
      %3741 = vmatpush1.msra.mxu0 0.0
      %3742 = vmatprep.subr.mxu0 0.0
      %3743 = vmatpush1.msra.mxu0 0.0
      %3744 = vmatprep.subr.mxu0 0.0
      %3745 = vmatpush1.msra.mxu0 0.0
      %3746 = vmatprep.subr.mxu0 0.0
      %3747 = vmatpush1.msra.mxu0 0.0
      %3748 = vmatprep.subr.mxu0 0.0
      %3749 = vmatpush1.msra.mxu0 0.0
      %3750 = vmatprep.subr.mxu0 0.0
      %3751 = vmatpush1.msra.mxu0 0.0
      %3752 = vmatprep.subr.mxu0 0.0
      %3753 = vmatpush1.msra.mxu0 0.0
      %3754 = vmatprep.subr.mxu0 0.0
      %3755 = vmatpush1.msra.mxu0 0.0
      %3756 = vmatprep.subr.mxu0 0.0
      %3757 = vmatpush1.msra.mxu0 0.0
      %3758 = vmatprep.subr.mxu0 0.0
      %3759 = vmatpush1.msra.mxu0 0.0
      %3760 = vmatprep.subr.mxu0 0.0
      %3761 = vmatpush1.msra.mxu0 0.0
      %3762 = vmatprep.subr.mxu0 0.0
      %3763 = vmatpush1.msra.mxu0 0.0
      %3764 = vmatprep.subr.mxu0 0.0
      %3765 = vmatpush1.msra.mxu0 0.0
      %3766 = vmatprep.subr.mxu0 0.0
      %3767 = vmatpush1.msra.mxu0 0.0
      %3768 = vmatprep.subr.mxu0 0.0
      %3769 = vmatpush1.msra.mxu0 0.0
      %3770 = vmatprep.subr.mxu0 0.0
      %3771 = vmatpush1.msra.mxu0 0.0
      %3772 = vmatprep.subr.mxu0 0.0
      %3773 = vmatpush1.msra.mxu0 0.0
      %3774 = vmatprep.subr.mxu0 0.0
      %3775 = vmatpush1.msra.mxu0 0.0
      %3776 = vmatprep.subr.mxu0 0.0
      %3777 = vmatpush1.msra.mxu0 0.0
      %3778 = vmatprep.subr.mxu0 0.0
      %3779 = vmatpush1.msra.mxu0 0.0
      %3780 = vmatprep.subr.mxu0 0.0
      %3781 = vmatpush1.msra.mxu0 0.0
      %3782 = vmatprep.subr.mxu0 0.0
      %3783 = vmatpush1.msra.mxu0 0.0
      %3784 = vmatprep.subr.mxu0 0.0
      %3785 = vmatpush1.msra.mxu0 0.0
      %3786 = vmatprep.subr.mxu0 0.0
      %3787 = vmatpush1.msra.mxu0 0.0
      %3788 = vmatprep.subr.mxu0 0.0
      %3789 = vmatpush1.msra.mxu0 0.0
      %3790 = vmatprep.mubr.f32.mxu0 0.0
      %3791 = vmatmul.mubr.f32.gmra.mrb[0].mxu0 %v3628
      %v3792 = vpop.f32.mrb[0].mxu0
      %v3793 = vadd.f32 0.0, %v3792
      %v3794 = vpop.f32.mrb[0].mxu0
      %3795 = vmatprep.mubr.f32.mxu0 0.0
      %3796 = vmatmul.mubr.f32.gmra.mrb[0].mxu0 %v3631
      %v3797 = vpop.f32.mrb[0].mxu0
      %v3798 = vadd.f32 0.0, %v3797
      %v3799 = vpop.f32.mrb[0].mxu0
      %3800 = vmatprep.mubr.f32.mxu0 0.0
      %3801 = vmatmul.mubr.f32.gmra.mrb[0].mxu0 %v3634
      %v3802 = vpop.f32.mrb[0].mxu0
      %v3803 = vadd.f32 0.0, %v3802
      %v3804 = vpop.f32.mrb[0].mxu0
      %3805 = vmatprep.mubr.f32.mxu0 0.0
      %3806 = vmatmul.mubr.f32.gmra.mrb[0].mxu0 %v3637
      %v3807 = vpop.f32.mrb[0].mxu0
      %v3808 = vadd.f32 0.0, %v3807
      %v3809 = vpop.f32.mrb[0].mxu0
      %3810 = vmatprep.mubr.f32.mxu0 0.0
      %3811 = vmatmul.mubr.f32.gmra.mrb[0].mxu0 %v3640
      %v3812 = vpop.f32.mrb[0].mxu0
      %v3813 = vadd.f32 0.0, %v3812
      %v3814 = vpop.f32.mrb[0].mxu0
      %3815 = vmatprep.mubr.f32.mxu0 0.0
      %3816 = vmatmul.mubr.f32.gmra.mrb[0].mxu0 %v3643
      %v3817 = vpop.f32.mrb[0].mxu0
      %v3818 = vadd.f32 0.0, %v3817
      %v3819 = vpop.f32.mrb[0].mxu0
      %3820 = vmatprep.mubr.f32.mxu0 0.0
      %3821 = vmatmul.mubr.f32.gmra.mrb[0].mxu0 %v3646
      %v3822 = vpop.f32.mrb[0].mxu0
      %v3823 = vadd.f32 0.0, %v3822
      %v3824 = vpop.f32.mrb[0].mxu0
      %3825 = vmatprep.mubr.f32.mxu0 0.0
      %3826 = vmatmul.mubr.f32.gmra.mrb[0].mxu0 %v3649
      %v3827 = vpop.f32.mrb[0].mxu0
      %v3828 = vadd.f32 0.0, %v3827
      %v3829 = vpop.f32.mrb[0].mxu0
      %3830 = vmatprep.mubr.f32.mxu0 0.0
      %3831 = vmatmul.mubr.f32.gmra.mrb[0].mxu0 %v3652
      %v3832 = vpop.f32.mrb[0].mxu0
      %v3833 = vadd.f32 0.0, %v3832
      %v3834 = vpop.f32.mrb[0].mxu0
      %3835 = vmatprep.mubr.f32.mxu0 0.0
      %3836 = vmatmul.mubr.f32.gmra.mrb[0].mxu0 %v3655
      %v3837 = vpop.f32.mrb[0].mxu0
      %v3838 = vadd.f32 0.0, %v3837
      %v3839 = vpop.f32.mrb[0].mxu0
      %3840 = vmatprep.mubr.f32.mxu0 0.0
      %3841 = vmatmul.mubr.f32.gmra.mrb[0].mxu0 %v3658
      %v3842 = vpop.f32.mrb[0].mxu0
      %v3843 = vadd.f32 0.0, %v3842
      %v3844 = vpop.f32.mrb[0].mxu0
      %3845 = vmatprep.mubr.f32.mxu0 0.0
      %3846 = vmatmul.mubr.f32.gmra.mrb[0].mxu0 %v3661
      %v3847 = vpop.f32.mrb[0].mxu0
      %v3848 = vadd.f32 0.0, %v3847
      %v3849 = vpop.f32.mrb[0].mxu0
      %3850 = vmatprep.mubr.f32.mxu0 0.0
      %3851 = vmatmul.mubr.f32.gmra.mrb[0].mxu0 %v3664
      %v3852 = vpop.f32.mrb[0].mxu0
      %v3853 = vadd.f32 0.0, %v3852
      %v3854 = vpop.f32.mrb[0].mxu0
      %3855 = vmatprep.mubr.f32.mxu0 0.0
      %3856 = vmatmul.mubr.f32.gmra.mrb[0].mxu0 %v3667
      %v3857 = vpop.f32.mrb[0].mxu0
      %v3858 = vadd.f32 0.0, %v3857
      %v3859 = vpop.f32.mrb[0].mxu0
      %3860 = vmatprep.mubr.f32.mxu0 0.0
      %3861 = vmatmul.mubr.f32.gmra.mrb[0].mxu0 %v3670
      %v3862 = vpop.f32.mrb[0].mxu0
      %v3863 = vadd.f32 0.0, %v3862
      %v3864 = vpop.f32.mrb[0].mxu0
      %3865 = vmatprep.mubr.f32.mxu0 0.0
      %3866 = vmatmul.mubr.f32.gmra.mrb[0].mxu0 %v3673
      %v3867 = vpop.f32.mrb[0].mxu0
      %v3868 = vadd.f32 0.0, %v3867
      %v3869 = vpop.f32.mrb[0].mxu0
      %3870 = vmatprep.mubr.f32.mxu0 0.0
      %3871 = vmatmul.mubr.f32.gmra.mrb[0].mxu0 %v3676
      %v3872 = vpop.f32.mrb[0].mxu0
      %v3873 = vadd.f32 0.0, %v3872
      %v3874 = vpop.f32.mrb[0].mxu0
      %3875 = vmatprep.mubr.f32.mxu0 0.0
      %3876 = vmatmul.mubr.f32.gmra.mrb[0].mxu0 %v3679
      %v3877 = vpop.f32.mrb[0].mxu0
      %v3878 = vadd.f32 0.0, %v3877
      %v3879 = vpop.f32.mrb[0].mxu0
      %3880 = vmatprep.mubr.f32.mxu0 0.0
      %3881 = vmatmul.mubr.f32.gmra.mrb[0].mxu0 %v3682
      %v3882 = vpop.f32.mrb[0].mxu0
      %v3883 = vadd.f32 0.0, %v3882
      %v3884 = vpop.f32.mrb[0].mxu0
      %3885 = vmatprep.mubr.f32.mxu0 0.0
      %3886 = vmatmul.mubr.f32.gmra.mrb[0].mxu0 %v3685
      %v3887 = vpop.f32.mrb[0].mxu0
      %v3888 = vadd.f32 0.0, %v3887
      %v3889 = vpop.f32.mrb[0].mxu0
      %3890 = vmatprep.mubr.f32.mxu0 0.0
      %3891 = vmatmul.mubr.f32.gmra.mrb[0].mxu0 %v3688
      %v3892 = vpop.f32.mrb[0].mxu0
      %v3893 = vadd.f32 0.0, %v3892
      %v3894 = vpop.f32.mrb[0].mxu0
      %3895 = vmatprep.mubr.f32.mxu0 0.0
      %3896 = vmatmul.mubr.f32.gmra.mrb[0].mxu0 %v3691
      %v3897 = vpop.f32.mrb[0].mxu0
      %v3898 = vadd.f32 0.0, %v3897
      %v3899 = vpop.f32.mrb[0].mxu0
      %3900 = vmatprep.mubr.f32.mxu0 0.0
      %3901 = vmatmul.mubr.f32.gmra.mrb[0].mxu0 %v3694
      %v3902 = vpop.f32.mrb[0].mxu0
      %v3903 = vadd.f32 0.0, %v3902
      %v3904 = vpop.f32.mrb[0].mxu0
      %3905 = vmatprep.mubr.f32.mxu0 0.0
      %3906 = vmatmul.mubr.f32.gmra.mrb[0].mxu0 %v3697
      %v3907 = vpop.f32.mrb[0].mxu0
      %v3908 = vadd.f32 0.0, %v3907
      %v3909 = vpop.f32.mrb[0].mxu0
      %3910 = vmatprep.mubr.f32.mxu0 0.0
      %3911 = vmatmul.mubr.f32.gmra.mrb[0].mxu0 %v3700
      %v3912 = vpop.f32.mrb[0].mxu0
      %v3913 = vadd.f32 0.0, %v3912
      %v3914 = vpop.f32.mrb[0].mxu0
      %3915 = vmatprep.mubr.f32.mxu0 0.0
      %3916 = vmatmul.mubr.f32.gmra.mrb[0].mxu0 %v3703
      %v3917 = vpop.f32.mrb[0].mxu0
      %v3918 = vadd.f32 0.0, %v3917
      %v3919 = vpop.f32.mrb[0].mxu0
      %3920 = vmatprep.mubr.f32.mxu0 0.0
      %3921 = vmatmul.mubr.f32.gmra.mrb[0].mxu0 %v3706
      %v3922 = vpop.f32.mrb[0].mxu0
      %v3923 = vadd.f32 0.0, %v3922
      %v3924 = vpop.f32.mrb[0].mxu0
      %3925 = vmatprep.mubr.f32.mxu0 0.0
      %3926 = vmatmul.mubr.f32.gmra.mrb[0].mxu0 %v3709
      %v3927 = vpop.f32.mrb[0].mxu0
      %v3928 = vadd.f32 0.0, %v3927
      %v3929 = vpop.f32.mrb[0].mxu0
      %3930 = vmatprep.mubr.f32.mxu0 0.0
      %3931 = vmatmul.mubr.f32.gmra.mrb[0].mxu0 %v3712
      %v3932 = vpop.f32.mrb[0].mxu0
      %v3933 = vadd.f32 0.0, %v3932
      %v3934 = vpop.f32.mrb[0].mxu0
      %3935 = vmatprep.mubr.f32.mxu0 0.0
      %3936 = vmatmul.mubr.f32.gmra.mrb[0].mxu0 %v3715
      %v3937 = vpop.f32.mrb[0].mxu0
      %v3938 = vadd.f32 0.0, %v3937
      %v3939 = vpop.f32.mrb[0].mxu0
      %3940 = vmatprep.mubr.f32.mxu0 0.0
      %3941 = vmatmul.mubr.f32.gmra.mrb[0].mxu0 %v3718
      %v3942 = vpop.f32.mrb[0].mxu0
      %v3943 = vadd.f32 0.0, %v3942
      %v3944 = vpop.f32.mrb[0].mxu0
      %3945 = vmatprep.mubr.f32.mxu0 0.0
      %3946 = vmatmul.mubr.f32.gmra.mrb[0].mxu0 %v3721
      %v3947 = vpop.f32.mrb[0].mxu0
      %v3948 = vadd.f32 0.0, %v3947
      %v3949 = vpop.f32.mrb[0].mxu0
      %3950 = vdwg.mxu0
      %v3951 = vadd.f32 %v3560, %v3793
      %v3952 = vadd.f32 %v3561, %v3798
      %v3953 = vadd.f32 %v3562, %v3803
      %v3954 = vadd.f32 %v3563, %v3808
      %v3955 = vadd.f32 %v3564, %v3813
      %v3956 = vadd.f32 %v3565, %v3818
      %v3957 = vadd.f32 %v3566, %v3823
      %v3958 = vadd.f32 %v3567, %v3828
      %v3959 = vadd.f32 %v3568, %v3833
      %v3960 = vadd.f32 %v3569, %v3838
      %v3961 = vadd.f32 %v3570, %v3843
      %v3962 = vadd.f32 %v3571, %v3848
      %v3963 = vadd.f32 %v3572, %v3853
      %v3964 = vadd.f32 %v3573, %v3858
      %v3965 = vadd.f32 %v3574, %v3863
      %v3966 = vadd.f32 %v3575, %v3868
      %v3967 = vadd.f32 %v3576, %v3873
      %v3968 = vadd.f32 %v3577, %v3878
      %v3969 = vadd.f32 %v3578, %v3883
      %v3970 = vadd.f32 %v3579, %v3888
      %v3971 = vadd.f32 %v3580, %v3893
      %v3972 = vadd.f32 %v3581, %v3898
      %v3973 = vadd.f32 %v3582, %v3903
      %v3974 = vadd.f32 %v3583, %v3908
      %v3975 = vadd.f32 %v3584, %v3913
      %v3976 = vadd.f32 %v3585, %v3918
      %v3977 = vadd.f32 %v3586, %v3923
      %v3978 = vadd.f32 %v3587, %v3928
      %v3979 = vadd.f32 %v3588, %v3933
      %v3980 = vadd.f32 %v3589, %v3938
      %v3981 = vadd.f32 %v3590, %v3943
      %v3982 = vadd.f32 %v3591, %v3948
      %v3983 = vld [vmem:[%s224] sm:$0x1]
      %v3985 = vlaneseq
      %v3986 = vshrl.u32 %v3985, 7
      %v3987 = vsub.s32 0, %v3986
      %v3988 = vrot.slane %v3983, %v3987
      %v3990 = vmul.f32 %v3951, %v3988
      %v3991 = vmul.f32 %v3952, %v3988
      %v3992 = vmul.f32 %v3953, %v3988
      %v3993 = vmul.f32 %v3954, %v3988
      %v3994 = vmul.f32 %v3955, %v3988
      %v3995 = vmul.f32 %v3956, %v3988
      %v3996 = vmul.f32 %v3957, %v3988
      %v3997 = vmul.f32 %v3958, %v3988
      %v3998 = vmul.f32 %v3959, %v3988
      %v3999 = vmul.f32 %v3960, %v3988
      %v4000 = vmul.f32 %v3961, %v3988
      %v4001 = vmul.f32 %v3962, %v3988
      %v4002 = vmul.f32 %v3963, %v3988
      %v4003 = vmul.f32 %v3964, %v3988
      %v4004 = vmul.f32 %v3965, %v3988
      %v4005 = vmul.f32 %v3966, %v3988
      %v4006 = vmul.f32 %v3967, %v3988
      %v4007 = vmul.f32 %v3968, %v3988
      %v4008 = vmul.f32 %v3969, %v3988
      %v4009 = vmul.f32 %v3970, %v3988
      %v4010 = vmul.f32 %v3971, %v3988
      %v4011 = vmul.f32 %v3972, %v3988
      %v4012 = vmul.f32 %v3973, %v3988
      %v4013 = vmul.f32 %v3974, %v3988
      %v4014 = vmul.f32 %v3975, %v3988
      %v4015 = vmul.f32 %v3976, %v3988
      %v4016 = vmul.f32 %v3977, %v3988
      %v4017 = vmul.f32 %v3978, %v3988
      %v4018 = vmul.f32 %v3979, %v3988
      %v4019 = vmul.f32 %v3980, %v3988
      %v4020 = vmul.f32 %v3981, %v3988
      %v4021 = vmul.f32 %v3982, %v3988
      %vm4022 = vcmask 64512
      %4023 = vst.msk [vmem:[%s232] sm:$0xff] %vm4022, %v3990
      %4024 = vst.msk [vmem:[%s232 + $0x8] sm:$0xff] %vm4022, %v3991
      %4025 = vst.msk [vmem:[%s232 + $0x10] sm:$0xff] %vm4022, %v3992
      %4026 = vst.msk [vmem:[%s232 + $0x18] sm:$0xff] %vm4022, %v3993
      %4027 = vst.msk [vmem:[%s232 + $0x20] sm:$0xff] %vm4022, %v3994
      %4028 = vst.msk [vmem:[%s232 + $0x28] sm:$0xff] %vm4022, %v3995
      %4029 = vst.msk [vmem:[%s232 + $0x30] sm:$0xff] %vm4022, %v3996
      %4030 = vst.msk [vmem:[%s232 + $0x38] sm:$0xff] %vm4022, %v3997
      %4031 = vst.msk [vmem:[%s232 + $0x40] sm:$0xff] %vm4022, %v3998
      %4032 = vst.msk [vmem:[%s232 + $0x48] sm:$0xff] %vm4022, %v3999
      %4033 = vst.msk [vmem:[%s232 + $0x50] sm:$0xff] %vm4022, %v4000
      %4034 = vst.msk [vmem:[%s232 + $0x58] sm:$0xff] %vm4022, %v4001
      %4035 = vst.msk [vmem:[%s232 + $0x60] sm:$0xff] %vm4022, %v4002
      %4036 = vst.msk [vmem:[%s232 + $0x68] sm:$0xff] %vm4022, %v4003
      %4037 = vst.msk [vmem:[%s232 + $0x70] sm:$0xff] %vm4022, %v4004
      %4038 = vst.msk [vmem:[%s232 + $0x78] sm:$0xff] %vm4022, %v4005
      %4039 = vst.msk [vmem:[%s232 + $0x80] sm:$0xff] %vm4022, %v4006
      %4040 = vst.msk [vmem:[%s232 + $0x88] sm:$0xff] %vm4022, %v4007
      %4041 = vst.msk [vmem:[%s232 + $0x90] sm:$0xff] %vm4022, %v4008
      %4042 = vst.msk [vmem:[%s232 + $0x98] sm:$0xff] %vm4022, %v4009
      %4043 = vst.msk [vmem:[%s232 + $0xa0] sm:$0xff] %vm4022, %v4010
      %4044 = vst.msk [vmem:[%s232 + $0xa8] sm:$0xff] %vm4022, %v4011
      %4045 = vst.msk [vmem:[%s232 + $0xb0] sm:$0xff] %vm4022, %v4012
      %4046 = vst.msk [vmem:[%s232 + $0xb8] sm:$0xff] %vm4022, %v4013
      %4047 = vst.msk [vmem:[%s232 + $0xc0] sm:$0xff] %vm4022, %v4014
      %4048 = vst.msk [vmem:[%s232 + $0xc8] sm:$0xff] %vm4022, %v4015
      %4049 = vst.msk [vmem:[%s232 + $0xd0] sm:$0xff] %vm4022, %v4016
      %4050 = vst.msk [vmem:[%s232 + $0xd8] sm:$0xff] %vm4022, %v4017
      %4051 = vst.msk [vmem:[%s232 + $0xe0] sm:$0xff] %vm4022, %v4018
      %4052 = vst.msk [vmem:[%s232 + $0xe8] sm:$0xff] %vm4022, %v4019
      %4053 = vst.msk [vmem:[%s232 + $0xf0] sm:$0xff] %vm4022, %v4020
      %4054 = vst.msk [vmem:[%s232 + $0xf8] sm:$0xff] %vm4022, %v4021
      %p4055 = scmp.lt.s32.totalorder %s18, 1
      %s4056 = scalar_select %p4055, %s18, 1
      %p4057 = scmp.lt.s32.totalorder %s19, 0
      %s4058 = scalar_select %p4057, %s19, 0
      %s4059 = smul.addr %s4056, 32
      %s4060 = sadd.s32 %s4058, %s4059
      %s4061 = smul.addr %s4060, 8
      %s4062 = scalar_lea.vmem %s3, %s4061
      // Predicated region
      $region37: #{tpu_custom_call.1} parent=31 // pred_check
        %p4063 = pneg %p126
      $region38: #{tpu_custom_call.1} parent=31 // pred_check_branch
        %4065 = sbr.rel (%p4063) target = $region40
      $region39: #{tpu_custom_call.1} parent=31 // pred_region
        _
      $region40: #{tpu_custom_call.1} parent=31 // pred_fallthru
        _
    $region32: #{tpu_custom_call.1} parent=5 // pred_fallthru
      _
    %p4066 = scmp.le.s32.totalorder 2, %s9
    // Predicated region
    $region41: #{tpu_custom_call.1} parent=5 // pred_check
      %p4067 = pneg %p4066
    $region42: #{tpu_custom_call.1} parent=5 // pred_check_branch
      %4069 = sbr.rel (%p4067) target = $region44
    $region43: #{tpu_custom_call.1} parent=5 // pred_region
      %s4070 = ssub.s32 %s9, 2
      // Predicated region
      $region45: #{tpu_custom_call.1} parent=43 // pred_check
        %p4071 = pneg %p132
      $region46: #{tpu_custom_call.1} parent=43 // pred_check_branch
        %4073 = sbr.rel (%p4071) target = $region48
      $region47: #{tpu_custom_call.1} parent=43 // pred_region
        %p4074 = scmp.lt.s32.totalorder %s20, 1
        %s4075 = scalar_select %p4074, %s20, 1
        %p4076 = scmp.lt.s32.totalorder %s21, 0
        %s4077 = scalar_select %p4076, %s21, 0
        %s4078 = smul.addr %s4075, 32
        %s4079 = sadd.s32 %s4077, %s4078
        %s4080 = smul.addr %s4079, 8
        %s4081 = scalar_lea.vmem %s3, %s4080
      $region48: #{tpu_custom_call.1} parent=43 // pred_fallthru
        _
    $region44: #{tpu_custom_call.1} parent=5 // pred_fallthru
      _
  $region6: #{tpu_custom_call.1} parent=0 // loop_footer
    %s13 = sadd.s32 1, %s9
  $region7: #{tpu_custom_call.1} parent=0 // loop_footer_branch
    %8 = sbr.rel target = $region3
  $region8: #{tpu_custom_call.1} parent=0 // loop_exit
    _

</llo_original>
